<compile_context>
chip_gen: v7x
topology: tpu7x:2x2x1
jax: 0.10.0
libtpu: 0.0.40
codegen_flags: <defaults>
</compile_context>

<pallas_src>
import functools
import math

import jax
import jax.numpy as jnp
from jax import lax
from jax.experimental import pallas as pl
from jax.experimental.pallas import tpu as pltpu


# ----------------------------- small helpers -------------------------------

def _layernorm_f32(h, g, b, eps=1e-5):
    """LayerNorm with statistics computed in float32."""
    h = h.astype(jnp.float32)
    mu = jnp.mean(h, axis=-1, keepdims=True)
    var = jnp.mean(jnp.square(h - mu), axis=-1, keepdims=True)
    return (h - mu) * lax.rsqrt(var + eps) * g + b


def _pick_tile(dim, preferred, unit):
    """Largest tile <= preferred that divides dim and is a multiple of unit."""
    t = preferred
    while t >= unit:
        if dim % t == 0 and t % unit == 0:
            return t
        t //= 2
    return dim  # fall back to the full dimension (always legal for BlockSpec)


def _vmem_limit(needed_bytes):
    # Above the 16/32 MiB scoped defaults, but never above v7x's 64 MiB per-TC.
    return int(min(64 << 20, max(32 << 20, needed_bytes)))


# ----------------------- fused decoder-stack kernel -------------------------

def _decoder_stack_kernel(n_head, x_ref,
                          ln1g_ref, ln1b_ref, wqkv_ref, bqkv_ref, wo_ref, bo_ref,
                          ln2g_ref, ln2b_ref, w1_ref, b1_ref, w2_ref, b2_ref,
                          out_ref, xres_ref):
    layer = pl.program_id(1)
    n_layer = pl.num_programs(1)

    # Load the embedding block into the VMEM-resident f32 residual stream once.
    @pl.when(layer == 0)
    def _():
        xres_ref[...] = x_ref[0].astype(jnp.float32)

    x = xres_ref[...]                       # (T, E) float32 residual stream
    T, E = x.shape
    hs = E // n_head
    cdt = wqkv_ref.dtype                    # matmul compute dtype (bf16)
    scale = 1.0 / math.sqrt(hs)

    # ---- causal self-attention (pre-LN), all heads batched on the MXU ----
    h = _layernorm_f32(x, ln1g_ref[0], ln1b_ref[0]).astype(cdt)
    qkv = jnp.dot(h, wqkv_ref[0], preferred_element_type=jnp.float32) + bqkv_ref[0]
    # Fold 1/sqrt(hs) into q: touches (T, E) instead of the (H, T, T) scores.
    q = (qkv[:, 0 * E:1 * E] * scale).astype(cdt).reshape(T, n_head, hs).transpose(1, 0, 2)
    k = qkv[:, 1 * E:2 * E].astype(cdt).reshape(T, n_head, hs).transpose(1, 0, 2)
    v = qkv[:, 2 * E:3 * E].astype(cdt).reshape(T, n_head, hs).transpose(1, 0, 2)

    s = jnp.einsum("hqd,hkd->hqk", q, k,
                   preferred_element_type=jnp.float32)           # (H, T, T) f32
    row = lax.broadcasted_iota(jnp.int32, (T, T), 0)
    col = lax.broadcasted_iota(jnp.int32, (T, T), 1)
    s = jnp.where((col <= row)[None, :, :], s, -1e30)
    m = jnp.max(s, axis=-1, keepdims=True)
    p = jnp.exp(s - m)
    denom = jnp.sum(p, axis=-1, keepdims=True)                   # (H, T, 1)
    o = jnp.einsum("hqk,hkd->hqd", p.astype(cdt), v,
                   preferred_element_type=jnp.float32)           # (H, T, hs)
    # Apply 1/sum on the small (H,T,hs) output via the EUP reciprocal.
    o = o * pl.reciprocal(denom, approx=True)
    attn = o.transpose(1, 0, 2).reshape(T, E).astype(cdt)
    attn = jnp.dot(attn, wo_ref[0], preferred_element_type=jnp.float32) + bo_ref[0]
    x1 = x + attn                                                # f32 residual

    # ---- feed-forward with squared ReLU (pre-LN) ----
    h2 = _layernorm_f32(x1, ln2g_ref[0], ln2b_ref[0]).astype(cdt)
    f = jnp.dot(h2, w1_ref[0], preferred_element_type=jnp.float32) + b1_ref[0]
    f = jnp.maximum(f, 0.0)
    f = jnp.square(f).astype(cdt)
    f = jnp.dot(f, w2_ref[0], preferred_element_type=jnp.float32) + b2_ref[0]
    x2 = x1 + f

    xres_ref[...] = x2

    @pl.when(layer == n_layer - 1)
    def _():
        out_ref[0] = x2.astype(out_ref.dtype)


_STACK_PARAM_NAMES = ["ln1_g", "ln1_b", "w_qkv", "b_qkv", "w_o", "b_o",
                      "ln2_g", "ln2_b", "w_1", "b_1", "w_2", "b_2"]


def decoder_stack(x, params, n_head):
    """All decoder layers in one pallas_call; activations stay in VMEM."""
    B, T, E = x.shape
    stacked = [params[n] for n in _STACK_PARAM_NAMES]   # each has leading L axis
    L = stacked[0].shape[0]

    def w_spec(a):
        # One layer's slab per grid step; streamed (double-buffered) over L.
        return pl.BlockSpec((1,) + a.shape[1:], lambda b, l: (l, 0, 0))

    layer_w_bytes = sum(math.prod(a.shape[1:]) * a.dtype.itemsize for a in stacked)
    act_bytes = T * E * 4
    vmem_bytes = _vmem_limit(4 * (2 * layer_w_bytes + 4 * act_bytes))

    return pl.pallas_call(
        functools.partial(_decoder_stack_kernel, n_head),
        out_shape=jax.ShapeDtypeStruct((B, T, E), jnp.float32),
        grid_spec=pltpu.PrefetchScalarGridSpec(
            num_scalar_prefetch=0,
            grid=(B, L),
            in_specs=[pl.BlockSpec((1, T, E), lambda b, l: (b, 0, 0))]
                     + [w_spec(a) for a in stacked],
            out_specs=pl.BlockSpec((1, T, E), lambda b, l: (b, 0, 0)),
            scratch_shapes=[pltpu.VMEM((T, E), jnp.float32)]),
        compiler_params=pltpu.CompilerParams(
            dimension_semantics=("parallel", "arbitrary"),
            vmem_limit_bytes=vmem_bytes),
    )(x, *stacked)


# ----------------------- final layernorm + LM head --------------------------

def _lm_head_kernel(x_ref, g_ref, b_ref, w_ref, out_ref, hnorm_ref):
    # Compute the normalized (bf16) row tile once per row block, reuse for all
    # vocab-column tiles of that row block.
    @pl.when(pl.program_id(1) == 0)
    def _():
        hnorm_ref[...] = _layernorm_f32(
            x_ref[...], g_ref[...], b_ref[...]).astype(hnorm_ref.dtype)

    # Tied head kept as (V, E): contract E on both operands — no (E, V)
    # transposed copy is ever built in HBM.
    out_ref[...] = lax.dot_general(
        hnorm_ref[...], w_ref[...],
        dimension_numbers=(((1,), (1,)), ((), ())),
        preferred_element_type=jnp.float32)


def lm_head(x_flat, g, b, w_vocab_embed):
    N, E = x_flat.shape
    V = w_vocab_embed.shape[0]
    tn = _pick_tile(N, 256, 8)      # row tile (sublane-aligned)
    tv = _pick_tile(V, 512, 128)    # vocab tile (lane-dense output)
    vmem_bytes = _vmem_limit(
        4 * 2 * (tn * E * 4 + tv * E * w_vocab_embed.dtype.itemsize + tn * tv * 4))
    return pl.pallas_call(
        _lm_head_kernel,
        out_shape=jax.ShapeDtypeStruct((N, V), jnp.float32),
        grid_spec=pltpu.PrefetchScalarGridSpec(
            num_scalar_prefetch=0,
            grid=(N // tn, V // tv),
            in_specs=[pl.BlockSpec((tn, E), lambda i, j: (i, 0)),
                      pl.BlockSpec((1, E), lambda i, j: (0, 0)),
                      pl.BlockSpec((1, E), lambda i, j: (0, 0)),
                      pl.BlockSpec((tv, E), lambda i, j: (j, 0))],
            out_specs=pl.BlockSpec((tn, tv), lambda i, j: (i, j)),
            scratch_shapes=[pltpu.VMEM((tn, E), w_vocab_embed.dtype)]),
        compiler_params=pltpu.CompilerParams(
            dimension_semantics=("parallel", "arbitrary"),
            vmem_limit_bytes=vmem_bytes),
    )(x_flat, g, b, w_vocab_embed)


# ------------------------------ model glue -----------------------------------

def init_params(key, cfg, param_dtype=jnp.bfloat16):
    V, E, L = cfg["vocab_size"], cfg["embed_size"], cfg["n_layer"]
    C = cfg["context_length"]
    f32 = jnp.float32
    std_layer = 0.02 * (2 * L) ** (-0.5)
    k = jax.random.split(key, 6)
    return dict(
        wte=(0.02 * jax.random.normal(k[0], (V, E), f32)).astype(param_dtype),
        wpe=(0.02 * jax.random.normal(k[1], (C, E), f32)).astype(param_dtype),
        # Per-layer params stacked along a leading L axis (streamed in-kernel).
        ln1_g=jnp.ones((L, 1, E), f32), ln1_b=jnp.zeros((L, 1, E), f32),
        w_qkv=(std_layer * jax.random.normal(k[2], (L, E, 3 * E), f32)).astype(param_dtype),
        b_qkv=jnp.zeros((L, 1, 3 * E), f32),
        w_o=(std_layer * jax.random.normal(k[3], (L, E, E), f32)).astype(param_dtype),
        b_o=jnp.zeros((L, 1, E), f32),
        ln2_g=jnp.ones((L, 1, E), f32), ln2_b=jnp.zeros((L, 1, E), f32),
        w_1=(std_layer * jax.random.normal(k[4], (L, E, 4 * E), f32)).astype(param_dtype),
        b_1=jnp.zeros((L, 1, 4 * E), f32),
        w_2=(std_layer * jax.random.normal(k[5], (L, 4 * E, E), f32)).astype(param_dtype),
        b_2=jnp.zeros((L, 1, E), f32),
        lnf_g=jnp.ones((1, E), f32), lnf_b=jnp.zeros((1, E), f32))


@functools.partial(jax.jit, static_argnames=("n_head",))
def kpt_forward(params, ids, *, n_head):
    B, T = ids.shape
    V, E = params["wte"].shape
    # Embedding gathers + positional add are plain-JAX glue.
    x = (jnp.take(params["wte"], ids, axis=0).astype(jnp.float32)
         + params["wpe"][:T].astype(jnp.float32)[None, :, :])
    x = decoder_stack(x, params, n_head)
    logits = lm_head(x.reshape(B * T, E), params["lnf_g"], params["lnf_b"],
                     params["wte"])          # tied head, consumed as (V, E)
    return logits.reshape(B, T, V)


# ------------------------- pure-JAX reference (check) -------------------------

def _ref_forward(params, ids, n_head):
    f32 = jnp.float32
    wte = params["wte"].astype(f32)
    wpe = params["wpe"].astype(f32)
    B, T = ids.shape
    V, E = wte.shape
    hs = E // n_head
    L = params["w_qkv"].shape[0]

    def ln(h, g, b):
        mu = h.mean(-1, keepdims=True)
        var = ((h - mu) ** 2).mean(-1, keepdims=True)
        return (h - mu) / jnp.sqrt(var + 1e-5) * g + b

    x = jnp.take(wte, ids, axis=0) + wpe[:T][None, :, :]
    for l in range(L):
        h = ln(x, params["ln1_g"][l], params["ln1_b"][l])
        qkv = h @ params["w_qkv"][l].astype(f32) + params["b_qkv"][l]
        q, k, v = jnp.split(qkv, 3, axis=-1)
        q = q.reshape(B, T, n_head, hs).transpose(0, 2, 1, 3)
        k = k.reshape(B, T, n_head, hs).transpose(0, 2, 1, 3)
        v = v.reshape(B, T, n_head, hs).transpose(0, 2, 1, 3)
        s = jnp.einsum("bhqd,bhkd->bhqk", q, k) / math.sqrt(hs)
        mask = jnp.tril(jnp.ones((T, T), bool))
        s = jnp.where(mask, s, -jnp.inf)
        a = jax.nn.softmax(s, axis=-1)
        o = jnp.einsum("bhqk,bhkd->bhqd", a, v).transpose(0, 2, 1, 3).reshape(B, T, E)
        x = x + (o @ params["w_o"][l].astype(f32) + params["b_o"][l])
        h2 = ln(x, params["ln2_g"][l], params["ln2_b"][l])
        f = h2 @ params["w_1"][l].astype(f32) + params["b_1"][l]
        f = jnp.square(jnp.maximum(f, 0.0))
        x = x + (f @ params["w_2"][l].astype(f32) + params["b_2"][l])
    x = ln(x, params["lnf_g"], params["lnf_b"])
    return x @ wte.T


# ---------------------------------- main --------------------------------------

if __name__ == "__main__":
    cfg = dict(context_length=16, vocab_size=256, n_layer=2, n_head=4,
               embed_size=128)
    B, T = 2, 16

    key = jax.random.PRNGKey(0)
    pkey, ikey = jax.random.split(key)
    params = init_params(pkey, cfg)
    ids = jax.random.randint(ikey, (B, T), 0, cfg["vocab_size"], dtype=jnp.int32)

    logits = jax.block_until_ready(kpt_forward(params, ids, n_head=cfg["n_head"]))
    ref = jax.block_until_ready(_ref_forward(params, ids, cfg["n_head"]))

    assert logits.shape == (B, T, cfg["vocab_size"])
    max_err = float(jnp.max(jnp.abs(logits - ref)))
    # bf16 matmul operands with f32 accumulation vs f32 reference.
    assert jnp.allclose(logits, ref, rtol=2e-2, atol=2e-2), \
        f"mismatch vs reference (max abs err {max_err:.3e})"

    print("KERNEL_OK")
</pallas_src>

<mosaic_0001>
module attributes {stable_mosaic.version = 11 : i64} {
  func.func @_decoder_stack_kernel(%arg0: i32, %arg1: i32, %arg2: memref<1x16x128xf32, #tpu.memory_space<vmem>>, %arg3: memref<1x1x128xf32, #tpu.memory_space<vmem>>, %arg4: memref<1x1x128xf32, #tpu.memory_space<vmem>>, %arg5: memref<1x128x384xbf16, #tpu.memory_space<vmem>>, %arg6: memref<1x1x384xf32, #tpu.memory_space<vmem>>, %arg7: memref<1x128x128xbf16, #tpu.memory_space<vmem>>, %arg8: memref<1x1x128xf32, #tpu.memory_space<vmem>>, %arg9: memref<1x1x128xf32, #tpu.memory_space<vmem>>, %arg10: memref<1x1x128xf32, #tpu.memory_space<vmem>>, %arg11: memref<1x128x512xbf16, #tpu.memory_space<vmem>>, %arg12: memref<1x1x512xf32, #tpu.memory_space<vmem>>, %arg13: memref<1x512x128xbf16, #tpu.memory_space<vmem>>, %arg14: memref<1x1x128xf32, #tpu.memory_space<vmem>>, %arg15: memref<1x16x128xf32, #tpu.memory_space<vmem>>, %arg16: memref<16x128xf32, #tpu.memory_space<vmem>>) attributes {dimension_semantics = [#tpu.dimension_semantics<parallel>, #tpu.dimension_semantics<arbitrary>], iteration_bounds = array<i64: 2, 2>, scalar_prefetch = 0 : i64, scratch_operands = 1 : i64, tpu.core_type = #tpu.core_type<tc>, window_params = [{transform_indices = @transform_0, window_bounds = array<i64: 1, 16, 128>}, {transform_indices = @transform_1, window_bounds = array<i64: 1, 1, 128>}, {transform_indices = @transform_2, window_bounds = array<i64: 1, 1, 128>}, {transform_indices = @transform_3, window_bounds = array<i64: 1, 128, 384>}, {transform_indices = @transform_4, window_bounds = array<i64: 1, 1, 384>}, {transform_indices = @transform_5, window_bounds = array<i64: 1, 128, 128>}, {transform_indices = @transform_6, window_bounds = array<i64: 1, 1, 128>}, {transform_indices = @transform_7, window_bounds = array<i64: 1, 1, 128>}, {transform_indices = @transform_8, window_bounds = array<i64: 1, 1, 128>}, {transform_indices = @transform_9, window_bounds = array<i64: 1, 128, 512>}, {transform_indices = @transform_10, window_bounds = array<i64: 1, 1, 512>}, {transform_indices = @transform_11, window_bounds = array<i64: 1, 512, 128>}, {transform_indices = @transform_12, window_bounds = array<i64: 1, 1, 128>}, {transform_indices = @transform_13, window_bounds = array<i64: 1, 16, 128>}]} {
    %c0_i32 = arith.constant 0 : i32
    %0 = arith.cmpi eq, %arg1, %c0_i32 : i32
    %1 = arith.extui %0 : i1 to i32
    %c0_i32_0 = arith.constant 0 : i32
    %2 = arith.cmpi ne, %1, %c0_i32_0 : i32
    scf.if %2 {
      %c0_61 = arith.constant 0 : index
      %c0_62 = arith.constant 0 : index
      %c0_63 = arith.constant 0 : index
      %134 = vector.load %arg2[%c0_61, %c0_62, %c0_63] : memref<1x16x128xf32, #tpu.memory_space<vmem>>, vector<1x16x128xf32>
      %135 = vector.shape_cast %134 : vector<1x16x128xf32> to vector<16x128xf32>
      %c0_64 = arith.constant 0 : index
      %c0_65 = arith.constant 0 : index
      %136 = vector.load %arg16[%c0_64, %c0_65] : memref<16x128xf32, #tpu.memory_space<vmem>>, vector<16x128xf32>
      tpu.vector_store %arg16[%c0_64, %c0_65], %135 {strides = array<i32>} : memref<16x128xf32, #tpu.memory_space<vmem>>, vector<16x128xf32>,
    } else {
    }
    %c0 = arith.constant 0 : index
    %c0_1 = arith.constant 0 : index
    %3 = vector.load %arg16[%c0, %c0_1] : memref<16x128xf32, #tpu.memory_space<vmem>>, vector<16x128xf32>
    %c0_2 = arith.constant 0 : index
    %c0_3 = arith.constant 0 : index
    %c0_4 = arith.constant 0 : index
    %4 = vector.load %arg3[%c0_2, %c0_3, %c0_4] : memref<1x1x128xf32, #tpu.memory_space<vmem>>, vector<1x1x128xf32>
    %5 = vector.shape_cast %4 : vector<1x1x128xf32> to vector<1x128xf32>
    %c0_5 = arith.constant 0 : index
    %c0_6 = arith.constant 0 : index
    %c0_7 = arith.constant 0 : index
    %6 = vector.load %arg4[%c0_5, %c0_6, %c0_7] : memref<1x1x128xf32, #tpu.memory_space<vmem>>, vector<1x1x128xf32>
    %7 = vector.shape_cast %6 : vector<1x1x128xf32> to vector<1x128xf32>
    %cst = arith.constant dense<0.000000e+00> : vector<16xf32>
    %8 = vector.multi_reduction <add>, %3, %cst [1] : vector<16x128xf32> to vector<16xf32>
    %9 = vector.shape_cast %8 : vector<16xf32> to vector<16x1xf32>
    %cst_8 = arith.constant 1.280000e+02 : f32
    %10 = vector.broadcast %cst_8 : f32 to vector<16x1xf32>
    %11 = arith.divf %9, %10 : vector<16x1xf32>
    %12 = vector.broadcast %11 : vector<16x1xf32> to vector<16x128xf32>
    %13 = arith.subf %3, %12 : vector<16x128xf32>
    %14 = arith.mulf %13, %13 : vector<16x128xf32>
    %cst_9 = arith.constant dense<0.000000e+00> : vector<16xf32>
    %15 = vector.multi_reduction <add>, %14, %cst_9 [1] : vector<16x128xf32> to vector<16xf32>
    %16 = vector.shape_cast %15 : vector<16xf32> to vector<16x1xf32>
    %cst_10 = arith.constant 1.280000e+02 : f32
    %17 = vector.broadcast %cst_10 : f32 to vector<16x1xf32>
    %18 = arith.divf %16, %17 : vector<16x1xf32>
    %19 = vector.broadcast %11 : vector<16x1xf32> to vector<16x128xf32>
    %20 = arith.subf %3, %19 : vector<16x128xf32>
    %cst_11 = arith.constant 9.99999974E-6 : f32
    %21 = vector.broadcast %cst_11 : f32 to vector<16x1xf32>
    %22 = arith.addf %18, %21 : vector<16x1xf32>
    %23 = math.rsqrt %22 : vector<16x1xf32>
    %24 = vector.broadcast %23 : vector<16x1xf32> to vector<16x128xf32>
    %25 = arith.mulf %20, %24 : vector<16x128xf32>
    %26 = vector.broadcast %5 : vector<1x128xf32> to vector<16x128xf32>
    %27 = arith.mulf %25, %26 : vector<16x128xf32>
    %28 = vector.broadcast %7 : vector<1x128xf32> to vector<16x128xf32>
    %29 = arith.addf %27, %28 : vector<16x128xf32>
    %30 = arith.truncf %29 : vector<16x128xf32> to vector<16x128xbf16>
    %c0_12 = arith.constant 0 : index
    %c0_13 = arith.constant 0 : index
    %c0_14 = arith.constant 0 : index
    %31 = vector.load %arg5[%c0_12, %c0_13, %c0_14] : memref<1x128x384xbf16, #tpu.memory_space<vmem>>, vector<1x128x384xbf16>
    %32 = vector.shape_cast %31 : vector<1x128x384xbf16> to vector<128x384xbf16>
    %cst_15 = arith.constant dense<0.000000e+00> : vector<16x384xf32>
    %33 = tpu.matmul %30, %32, %cst_15 {dimension_numbers = #tpu.dot_dimension_numbers<[1], [0], [0], [1], [0, 0, 1, 1], [], []>} : vector<16x128xbf16>, vector<128x384xbf16>, vector<16x384xf32> -> vector<16x384xf32>
    %c0_16 = arith.constant 0 : index
    %c0_17 = arith.constant 0 : index
    %c0_18 = arith.constant 0 : index
    %34 = vector.load %arg6[%c0_16, %c0_17, %c0_18] : memref<1x1x384xf32, #tpu.memory_space<vmem>>, vector<1x1x384xf32>
    %35 = vector.shape_cast %34 : vector<1x1x384xf32> to vector<1x384xf32>
    %36 = vector.broadcast %35 : vector<1x384xf32> to vector<16x384xf32>
    %37 = arith.addf %33, %36 : vector<16x384xf32>
    %38 = vector.extract_strided_slice %37 {offsets = [0, 0], sizes = [16, 128], strides = [1, 1]} : vector<16x384xf32> to vector<16x128xf32>
    %cst_19 = arith.constant 0.176776692 : f32
    %39 = vector.broadcast %cst_19 : f32 to vector<16x128xf32>
    %40 = arith.mulf %38, %39 : vector<16x128xf32>
    %41 = arith.truncf %40 : vector<16x128xf32> to vector<16x128xbf16>
    %42 = vector.shape_cast %41 : vector<16x128xbf16> to vector<16x4x32xbf16>
    %43 = tpu.transpose %42, [1, 0, 2] : vector<16x4x32xbf16> -> vector<4x16x32xbf16>
    %44 = vector.extract_strided_slice %37 {offsets = [0, 128], sizes = [16, 128], strides = [1, 1]} : vector<16x384xf32> to vector<16x128xf32>
    %45 = arith.truncf %44 : vector<16x128xf32> to vector<16x128xbf16>
    %46 = vector.shape_cast %45 : vector<16x128xbf16> to vector<16x4x32xbf16>
    %47 = tpu.transpose %46, [1, 0, 2] : vector<16x4x32xbf16> -> vector<4x16x32xbf16>
    %48 = vector.extract_strided_slice %37 {offsets = [0, 256], sizes = [16, 128], strides = [1, 1]} : vector<16x384xf32> to vector<16x128xf32>
    %49 = arith.truncf %48 : vector<16x128xf32> to vector<16x128xbf16>
    %50 = vector.shape_cast %49 : vector<16x128xbf16> to vector<16x4x32xbf16>
    %51 = tpu.transpose %50, [1, 0, 2] : vector<16x4x32xbf16> -> vector<4x16x32xbf16>
    "tpu.trace_start"() <{level = 10 : i32, message = "hqd,hkd->hqk"}> : () -> ()
    %cst_20 = arith.constant dense<0.000000e+00> : vector<4x16x16xf32>
    %52 = tpu.matmul %43, %47, %cst_20 {dimension_numbers = #tpu.dot_dimension_numbers<[2], [2], [1], [1], [0, 0, 0, 1, 1, 1], [0], [0]>} : vector<4x16x32xbf16>, vector<4x16x32xbf16>, vector<4x16x16xf32> -> vector<4x16x16xf32>
    "tpu.trace_stop"() : () -> ()
    %53 = tpu.iota {dimensions = array<i32: 0>} : vector<16x16xi32>
    %54 = tpu.iota {dimensions = array<i32: 1>} : vector<16x16xi32>
    %55 = arith.cmpi sle, %54, %53 : vector<16x16xi32>
    %56 = vector.shape_cast %55 : vector<16x16xi1> to vector<1x16x16xi1>
    %cst_21 = arith.constant -1.000000e+30 : f32
    %57 = vector.shape_cast %56 : vector<1x16x16xi1> to vector<1x16x16xi1>
    %58 = vector.broadcast %57 : vector<1x16x16xi1> to vector<4x16x16xi1>
    %59 = vector.broadcast %cst_21 : f32 to vector<4x16x16xf32>
    %60 = arith.select %58, %52, %59 : vector<4x16x16xi1>, vector<4x16x16xf32>
    %cst_22 = arith.constant dense<0xFF800000> : vector<4x16xf32>
    %61 = vector.multi_reduction <maximumf>, %60, %cst_22 [2] : vector<4x16x16xf32> to vector<4x16xf32>
    %62 = vector.shape_cast %61 : vector<4x16xf32> to vector<4x16x1xf32>
    %63 = vector.broadcast %62 : vector<4x16x1xf32> to vector<4x16x16xf32>
    %64 = arith.subf %60, %63 : vector<4x16x16xf32>
    %65 = math.exp %64 : vector<4x16x16xf32>
    %cst_23 = arith.constant dense<0.000000e+00> : vector<4x16xf32>
    %66 = vector.multi_reduction <add>, %65, %cst_23 [2] : vector<4x16x16xf32> to vector<4x16xf32>
    %67 = vector.shape_cast %66 : vector<4x16xf32> to vector<4x16x1xf32>
    %68 = arith.truncf %65 : vector<4x16x16xf32> to vector<4x16x16xbf16>
    "tpu.trace_start"() <{level = 10 : i32, message = "hqk,hkd->hqd"}> : () -> ()
    %cst_24 = arith.constant dense<0.000000e+00> : vector<4x16x32xf32>
    %69 = tpu.matmul %68, %51, %cst_24 {dimension_numbers = #tpu.dot_dimension_numbers<[2], [1], [1], [2], [0, 0, 0, 1, 1, 2], [0], [0]>} : vector<4x16x16xbf16>, vector<4x16x32xbf16>, vector<4x16x32xf32> -> vector<4x16x32xf32>
    "tpu.trace_stop"() : () -> ()
    %70 = tpu.reciprocal %67 {approx = true} : vector<4x16x1xf32> -> vector<4x16x1xf32>
    %71 = vector.broadcast %70 : vector<4x16x1xf32> to vector<4x16x32xf32>
    %72 = arith.mulf %69, %71 : vector<4x16x32xf32>
    %73 = tpu.transpose %72, [1, 0, 2] : vector<4x16x32xf32> -> vector<16x4x32xf32>
    %74 = vector.shape_cast %73 : vector<16x4x32xf32> to vector<16x128xf32>
    %75 = arith.truncf %74 : vector<16x128xf32> to vector<16x128xbf16>
    %c0_25 = arith.constant 0 : index
    %c0_26 = arith.constant 0 : index
    %c0_27 = arith.constant 0 : index
    %76 = vector.load %arg7[%c0_25, %c0_26, %c0_27] : memref<1x128x128xbf16, #tpu.memory_space<vmem>>, vector<1x128x128xbf16>
    %77 = vector.shape_cast %76 : vector<1x128x128xbf16> to vector<128x128xbf16>
    %cst_28 = arith.constant dense<0.000000e+00> : vector<16x128xf32>
    %78 = tpu.matmul %75, %77, %cst_28 {dimension_numbers = #tpu.dot_dimension_numbers<[1], [0], [0], [1], [0, 0, 1, 1], [], []>} : vector<16x128xbf16>, vector<128x128xbf16>, vector<16x128xf32> -> vector<16x128xf32>
    %c0_29 = arith.constant 0 : index
    %c0_30 = arith.constant 0 : index
    %c0_31 = arith.constant 0 : index
    %79 = vector.load %arg8[%c0_29, %c0_30, %c0_31] : memref<1x1x128xf32, #tpu.memory_space<vmem>>, vector<1x1x128xf32>
    %80 = vector.shape_cast %79 : vector<1x1x128xf32> to vector<1x128xf32>
    %81 = vector.broadcast %80 : vector<1x128xf32> to vector<16x128xf32>
    %82 = arith.addf %78, %81 : vector<16x128xf32>
    %83 = arith.addf %3, %82 : vector<16x128xf32>
    %c0_32 = arith.constant 0 : index
    %c0_33 = arith.constant 0 : index
    %c0_34 = arith.constant 0 : index
    %84 = vector.load %arg9[%c0_32, %c0_33, %c0_34] : memref<1x1x128xf32, #tpu.memory_space<vmem>>, vector<1x1x128xf32>
    %85 = vector.shape_cast %84 : vector<1x1x128xf32> to vector<1x128xf32>
    %c0_35 = arith.constant 0 : index
    %c0_36 = arith.constant 0 : index
    %c0_37 = arith.constant 0 : index
    %86 = vector.load %arg10[%c0_35, %c0_36, %c0_37] : memref<1x1x128xf32, #tpu.memory_space<vmem>>, vector<1x1x128xf32>
    %87 = vector.shape_cast %86 : vector<1x1x128xf32> to vector<1x128xf32>
    %cst_38 = arith.constant dense<0.000000e+00> : vector<16xf32>
    %88 = vector.multi_reduction <add>, %83, %cst_38 [1] : vector<16x128xf32> to vector<16xf32>
    %89 = vector.shape_cast %88 : vector<16xf32> to vector<16x1xf32>
    %cst_39 = arith.constant 1.280000e+02 : f32
    %90 = vector.broadcast %cst_39 : f32 to vector<16x1xf32>
    %91 = arith.divf %89, %90 : vector<16x1xf32>
    %92 = vector.broadcast %91 : vector<16x1xf32> to vector<16x128xf32>
    %93 = arith.subf %83, %92 : vector<16x128xf32>
    %94 = arith.mulf %93, %93 : vector<16x128xf32>
    %cst_40 = arith.constant dense<0.000000e+00> : vector<16xf32>
    %95 = vector.multi_reduction <add>, %94, %cst_40 [1] : vector<16x128xf32> to vector<16xf32>
    %96 = vector.shape_cast %95 : vector<16xf32> to vector<16x1xf32>
    %cst_41 = arith.constant 1.280000e+02 : f32
    %97 = vector.broadcast %cst_41 : f32 to vector<16x1xf32>
    %98 = arith.divf %96, %97 : vector<16x1xf32>
    %99 = vector.broadcast %91 : vector<16x1xf32> to vector<16x128xf32>
    %100 = arith.subf %83, %99 : vector<16x128xf32>
    %cst_42 = arith.constant 9.99999974E-6 : f32
    %101 = vector.broadcast %cst_42 : f32 to vector<16x1xf32>
    %102 = arith.addf %98, %101 : vector<16x1xf32>
    %103 = math.rsqrt %102 : vector<16x1xf32>
    %104 = vector.broadcast %103 : vector<16x1xf32> to vector<16x128xf32>
    %105 = arith.mulf %100, %104 : vector<16x128xf32>
    %106 = vector.broadcast %85 : vector<1x128xf32> to vector<16x128xf32>
    %107 = arith.mulf %105, %106 : vector<16x128xf32>
    %108 = vector.broadcast %87 : vector<1x128xf32> to vector<16x128xf32>
    %109 = arith.addf %107, %108 : vector<16x128xf32>
    %110 = arith.truncf %109 : vector<16x128xf32> to vector<16x128xbf16>
    %c0_43 = arith.constant 0 : index
    %c0_44 = arith.constant 0 : index
    %c0_45 = arith.constant 0 : index
    %111 = vector.load %arg11[%c0_43, %c0_44, %c0_45] : memref<1x128x512xbf16, #tpu.memory_space<vmem>>, vector<1x128x512xbf16>
    %112 = vector.shape_cast %111 : vector<1x128x512xbf16> to vector<128x512xbf16>
    %cst_46 = arith.constant dense<0.000000e+00> : vector<16x512xf32>
    %113 = tpu.matmul %110, %112, %cst_46 {dimension_numbers = #tpu.dot_dimension_numbers<[1], [0], [0], [1], [0, 0, 1, 1], [], []>} : vector<16x128xbf16>, vector<128x512xbf16>, vector<16x512xf32> -> vector<16x512xf32>
    %c0_47 = arith.constant 0 : index
    %c0_48 = arith.constant 0 : index
    %c0_49 = arith.constant 0 : index
    %114 = vector.load %arg12[%c0_47, %c0_48, %c0_49] : memref<1x1x512xf32, #tpu.memory_space<vmem>>, vector<1x1x512xf32>
    %115 = vector.shape_cast %114 : vector<1x1x512xf32> to vector<1x512xf32>
    %116 = vector.broadcast %115 : vector<1x512xf32> to vector<16x512xf32>
    %117 = arith.addf %113, %116 : vector<16x512xf32>
    %cst_50 = arith.constant 0.000000e+00 : f32
    %118 = vector.broadcast %cst_50 : f32 to vector<16x512xf32>
    %119 = arith.maximumf %117, %118 : vector<16x512xf32>
    %120 = arith.mulf %119, %119 : vector<16x512xf32>
    %121 = arith.truncf %120 : vector<16x512xf32> to vector<16x512xbf16>
    %c0_51 = arith.constant 0 : index
    %c0_52 = arith.constant 0 : index
    %c0_53 = arith.constant 0 : index
    %122 = vector.load %arg13[%c0_51, %c0_52, %c0_53] : memref<1x512x128xbf16, #tpu.memory_space<vmem>>, vector<1x512x128xbf16>
    %123 = vector.shape_cast %122 : vector<1x512x128xbf16> to vector<512x128xbf16>
    %cst_54 = arith.constant dense<0.000000e+00> : vector<16x128xf32>
    %124 = tpu.matmul %121, %123, %cst_54 {dimension_numbers = #tpu.dot_dimension_numbers<[1], [0], [0], [1], [0, 0, 1, 1], [], []>} : vector<16x512xbf16>, vector<512x128xbf16>, vector<16x128xf32> -> vector<16x128xf32>
    %c0_55 = arith.constant 0 : index
    %c0_56 = arith.constant 0 : index
    %c0_57 = arith.constant 0 : index
    %125 = vector.load %arg14[%c0_55, %c0_56, %c0_57] : memref<1x1x128xf32, #tpu.memory_space<vmem>>, vector<1x1x128xf32>
    %126 = vector.shape_cast %125 : vector<1x1x128xf32> to vector<1x128xf32>
    %127 = vector.broadcast %126 : vector<1x128xf32> to vector<16x128xf32>
    %128 = arith.addf %124, %127 : vector<16x128xf32>
    %129 = arith.addf %83, %128 : vector<16x128xf32>
    %c0_58 = arith.constant 0 : index
    %c0_59 = arith.constant 0 : index
    %130 = vector.load %arg16[%c0_58, %c0_59] : memref<16x128xf32, #tpu.memory_space<vmem>>, vector<16x128xf32>
    tpu.vector_store %arg16[%c0_58, %c0_59], %129 {strides = array<i32>} : memref<16x128xf32, #tpu.memory_space<vmem>>, vector<16x128xf32>,
    %c1_i32 = arith.constant 1 : i32
    %131 = arith.cmpi eq, %arg1, %c1_i32 : i32
    %132 = arith.extui %131 : i1 to i32
    %c0_i32_60 = arith.constant 0 : i32
    %133 = arith.cmpi ne, %132, %c0_i32_60 : i32
    scf.if %133 {
      %c0_61 = arith.constant 0 : index
      %c0_62 = arith.constant 0 : index
      %c0_63 = arith.constant 0 : index
      %134 = vector.load %arg15[%c0_61, %c0_62, %c0_63] : memref<1x16x128xf32, #tpu.memory_space<vmem>>, vector<1x16x128xf32>
      %135 = vector.shape_cast %134 : vector<1x16x128xf32> to vector<16x128xf32>
      %136 = vector.shape_cast %129 : vector<16x128xf32> to vector<1x16x128xf32>
      tpu.vector_store %arg15[%c0_61, %c0_62, %c0_63], %136 {strides = array<i32>} : memref<1x16x128xf32, #tpu.memory_space<vmem>>, vector<1x16x128xf32>,
    } else {
    }
    return
  }
  func.func @transform_0(%arg0: i32, %arg1: i32) -> (i32, i32, i32) {
    %c0_i32 = arith.constant 0 : i32
    %c0_i32_0 = arith.constant 0 : i32
    %c0_i32_1 = arith.constant 0 : i32
    return %arg0, %c0_i32, %c0_i32_0 : i32, i32, i32
  }
  func.func @transform_1(%arg0: i32, %arg1: i32) -> (i32, i32, i32) {
    %c0_i32 = arith.constant 0 : i32
    %c0_i32_0 = arith.constant 0 : i32
    %c0_i32_1 = arith.constant 0 : i32
    return %arg1, %c0_i32, %c0_i32_0 : i32, i32, i32
  }
  func.func @transform_2(%arg0: i32, %arg1: i32) -> (i32, i32, i32) {
    %c0_i32 = arith.constant 0 : i32
    %c0_i32_0 = arith.constant 0 : i32
    %c0_i32_1 = arith.constant 0 : i32
    return %arg1, %c0_i32, %c0_i32_0 : i32, i32, i32
  }
  func.func @transform_3(%arg0: i32, %arg1: i32) -> (i32, i32, i32) {
    %c0_i32 = arith.constant 0 : i32
    %c0_i32_0 = arith.constant 0 : i32
    %c0_i32_1 = arith.constant 0 : i32
    return %arg1, %c0_i32, %c0_i32_0 : i32, i32, i32
  }
  func.func @transform_4(%arg0: i32, %arg1: i32) -> (i32, i32, i32) {
    %c0_i32 = arith.constant 0 : i32
    %c0_i32_0 = arith.constant 0 : i32
    %c0_i32_1 = arith.constant 0 : i32
    return %arg1, %c0_i32, %c0_i32_0 : i32, i32, i32
  }
  func.func @transform_5(%arg0: i32, %arg1: i32) -> (i32, i32, i32) {
    %c0_i32 = arith.constant 0 : i32
    %c0_i32_0 = arith.constant 0 : i32
    %c0_i32_1 = arith.constant 0 : i32
    return %arg1, %c0_i32, %c0_i32_0 : i32, i32, i32
  }
  func.func @transform_6(%arg0: i32, %arg1: i32) -> (i32, i32, i32) {
    %c0_i32 = arith.constant 0 : i32
    %c0_i32_0 = arith.constant 0 : i32
    %c0_i32_1 = arith.constant 0 : i32
    return %arg1, %c0_i32, %c0_i32_0 : i32, i32, i32
  }
  func.func @transform_7(%arg0: i32, %arg1: i32) -> (i32, i32, i32) {
    %c0_i32 = arith.constant 0 : i32
    %c0_i32_0 = arith.constant 0 : i32
    %c0_i32_1 = arith.constant 0 : i32
    return %arg1, %c0_i32, %c0_i32_0 : i32, i32, i32
  }
  func.func @transform_8(%arg0: i32, %arg1: i32) -> (i32, i32, i32) {
    %c0_i32 = arith.constant 0 : i32
    %c0_i32_0 = arith.constant 0 : i32
    %c0_i32_1 = arith.constant 0 : i32
    return %arg1, %c0_i32, %c0_i32_0 : i32, i32, i32
  }
  func.func @transform_9(%arg0: i32, %arg1: i32) -> (i32, i32, i32) {
    %c0_i32 = arith.constant 0 : i32
    %c0_i32_0 = arith.constant 0 : i32
    %c0_i32_1 = arith.constant 0 : i32
    return %arg1, %c0_i32, %c0_i32_0 : i32, i32, i32
  }
  func.func @transform_10(%arg0: i32, %arg1: i32) -> (i32, i32, i32) {
    %c0_i32 = arith.constant 0 : i32
    %c0_i32_0 = arith.constant 0 : i32
    %c0_i32_1 = arith.constant 0 : i32
    return %arg1, %c0_i32, %c0_i32_0 : i32, i32, i32
  }
  func.func @transform_11(%arg0: i32, %arg1: i32) -> (i32, i32, i32) {
    %c0_i32 = arith.constant 0 : i32
    %c0_i32_0 = arith.constant 0 : i32
    %c0_i32_1 = arith.constant 0 : i32
    return %arg1, %c0_i32, %c0_i32_0 : i32, i32, i32
  }
  func.func @transform_12(%arg0: i32, %arg1: i32) -> (i32, i32, i32) {
    %c0_i32 = arith.constant 0 : i32
    %c0_i32_0 = arith.constant 0 : i32
    %c0_i32_1 = arith.constant 0 : i32
    return %arg1, %c0_i32, %c0_i32_0 : i32, i32, i32
  }
  func.func @transform_13(%arg0: i32, %arg1: i32) -> (i32, i32, i32) {
    %c0_i32 = arith.constant 0 : i32
    %c0_i32_0 = arith.constant 0 : i32
    %c0_i32_1 = arith.constant 0 : i32
    return %arg0, %c0_i32, %c0_i32_0 : i32, i32, i32
  }
}

module attributes {stable_mosaic.version = 11 : i64} {
  func.func @_lm_head_kernel(%arg0: i32, %arg1: i32, %arg2: memref<32x128xf32, #tpu.memory_space<vmem>>, %arg3: memref<1x128xf32, #tpu.memory_space<vmem>>, %arg4: memref<1x128xf32, #tpu.memory_space<vmem>>, %arg5: memref<256x128xbf16, #tpu.memory_space<vmem>>, %arg6: memref<32x256xf32, #tpu.memory_space<vmem>>, %arg7: memref<32x128xbf16, #tpu.memory_space<vmem>>) attributes {dimension_semantics = [#tpu.dimension_semantics<parallel>, #tpu.dimension_semantics<arbitrary>], iteration_bounds = array<i64: 1, 1>, scalar_prefetch = 0 : i64, scratch_operands = 1 : i64, tpu.core_type = #tpu.core_type<tc>, window_params = [{transform_indices = @transform_0, window_bounds = array<i64: 32, 128>}, {pipeline_mode = #tpu.pipeline_mode<synchronous>, transform_indices = @transform_1, window_bounds = array<i64: 1, 128>}, {pipeline_mode = #tpu.pipeline_mode<synchronous>, transform_indices = @transform_2, window_bounds = array<i64: 1, 128>}, {transform_indices = @transform_3, window_bounds = array<i64: 256, 128>}, {transform_indices = @transform_4, window_bounds = array<i64: 32, 256>}]} {
    %c0_i32 = arith.constant 0 : i32
    %0 = arith.cmpi eq, %arg1, %c0_i32 : i32
    %1 = arith.extui %0 : i1 to i32
    %c0_i32_0 = arith.constant 0 : i32
    %2 = arith.cmpi ne, %1, %c0_i32_0 : i32
    scf.if %2 {
      %c0_6 = arith.constant 0 : index
      %c0_7 = arith.constant 0 : index
      %7 = vector.load %arg2[%c0_6, %c0_7] : memref<32x128xf32, #tpu.memory_space<vmem>>, vector<32x128xf32>
      %c0_8 = arith.constant 0 : index
      %c0_9 = arith.constant 0 : index
      %8 = vector.load %arg3[%c0_8, %c0_9] : memref<1x128xf32, #tpu.memory_space<vmem>>, vector<1x128xf32>
      %c0_10 = arith.constant 0 : index
      %c0_11 = arith.constant 0 : index
      %9 = vector.load %arg4[%c0_10, %c0_11] : memref<1x128xf32, #tpu.memory_space<vmem>>, vector<1x128xf32>
      %cst_12 = arith.constant dense<0.000000e+00> : vector<32xf32>
      %10 = vector.multi_reduction <add>, %7, %cst_12 [1] : vector<32x128xf32> to vector<32xf32>
      %11 = vector.shape_cast %10 : vector<32xf32> to vector<32x1xf32>
      %cst_13 = arith.constant 1.280000e+02 : f32
      %12 = vector.broadcast %cst_13 : f32 to vector<32x1xf32>
      %13 = arith.divf %11, %12 : vector<32x1xf32>
      %14 = vector.broadcast %13 : vector<32x1xf32> to vector<32x128xf32>
      %15 = arith.subf %7, %14 : vector<32x128xf32>
      %16 = arith.mulf %15, %15 : vector<32x128xf32>
      %cst_14 = arith.constant dense<0.000000e+00> : vector<32xf32>
      %17 = vector.multi_reduction <add>, %16, %cst_14 [1] : vector<32x128xf32> to vector<32xf32>
      %18 = vector.shape_cast %17 : vector<32xf32> to vector<32x1xf32>
      %cst_15 = arith.constant 1.280000e+02 : f32
      %19 = vector.broadcast %cst_15 : f32 to vector<32x1xf32>
      %20 = arith.divf %18, %19 : vector<32x1xf32>
      %21 = vector.broadcast %13 : vector<32x1xf32> to vector<32x128xf32>
      %22 = arith.subf %7, %21 : vector<32x128xf32>
      %cst_16 = arith.constant 9.99999974E-6 : f32
      %23 = vector.broadcast %cst_16 : f32 to vector<32x1xf32>
      %24 = arith.addf %20, %23 : vector<32x1xf32>
      %25 = math.rsqrt %24 : vector<32x1xf32>
      %26 = vector.broadcast %25 : vector<32x1xf32> to vector<32x128xf32>
      %27 = arith.mulf %22, %26 : vector<32x128xf32>
      %28 = vector.broadcast %8 : vector<1x128xf32> to vector<32x128xf32>
      %29 = arith.mulf %27, %28 : vector<32x128xf32>
      %30 = vector.broadcast %9 : vector<1x128xf32> to vector<32x128xf32>
      %31 = arith.addf %29, %30 : vector<32x128xf32>
      %32 = arith.truncf %31 : vector<32x128xf32> to vector<32x128xbf16>
      %c0_17 = arith.constant 0 : index
      %c0_18 = arith.constant 0 : index
      %33 = vector.load %arg7[%c0_17, %c0_18] : memref<32x128xbf16, #tpu.memory_space<vmem>>, vector<32x128xbf16>
      tpu.vector_store %arg7[%c0_17, %c0_18], %32 {strides = array<i32>} : memref<32x128xbf16, #tpu.memory_space<vmem>>, vector<32x128xbf16>,
    } else {
    }
    %c0 = arith.constant 0 : index
    %c0_1 = arith.constant 0 : index
    %3 = vector.load %arg7[%c0, %c0_1] : memref<32x128xbf16, #tpu.memory_space<vmem>>, vector<32x128xbf16>
    %c0_2 = arith.constant 0 : index
    %c0_3 = arith.constant 0 : index
    %4 = vector.load %arg5[%c0_2, %c0_3] : memref<256x128xbf16, #tpu.memory_space<vmem>>, vector<256x128xbf16>
    %cst = arith.constant dense<0.000000e+00> : vector<32x256xf32>
    %5 = tpu.matmul %3, %4, %cst {dimension_numbers = #tpu.dot_dimension_numbers<[1], [1], [0], [0], [0, 0, 1, 0], [], []>} : vector<32x128xbf16>, vector<256x128xbf16>, vector<32x256xf32> -> vector<32x256xf32>
    %c0_4 = arith.constant 0 : index
    %c0_5 = arith.constant 0 : index
    %6 = vector.load %arg6[%c0_4, %c0_5] : memref<32x256xf32, #tpu.memory_space<vmem>>, vector<32x256xf32>
    tpu.vector_store %arg6[%c0_4, %c0_5], %5 {strides = array<i32>} : memref<32x256xf32, #tpu.memory_space<vmem>>, vector<32x256xf32>,
    return
  }
  func.func @transform_0(%arg0: i32, %arg1: i32) -> (i32, i32) {
    %c0_i32 = arith.constant 0 : i32
    %c0_i32_0 = arith.constant 0 : i32
    return %arg0, %c0_i32 : i32, i32
  }
  func.func @transform_1(%arg0: i32, %arg1: i32) -> (i32, i32) {
    %c0_i32 = arith.constant 0 : i32
    %c0_i32_0 = arith.constant 0 : i32
    %c0_i32_1 = arith.constant 0 : i32
    return %c0_i32, %c0_i32_0 : i32, i32
  }
  func.func @transform_2(%arg0: i32, %arg1: i32) -> (i32, i32) {
    %c0_i32 = arith.constant 0 : i32
    %c0_i32_0 = arith.constant 0 : i32
    %c0_i32_1 = arith.constant 0 : i32
    return %c0_i32, %c0_i32_0 : i32, i32
  }
  func.func @transform_3(%arg0: i32, %arg1: i32) -> (i32, i32) {
    %c0_i32 = arith.constant 0 : i32
    %c0_i32_0 = arith.constant 0 : i32
    return %arg1, %c0_i32 : i32, i32
  }
  func.func @transform_4(%arg0: i32, %arg1: i32) -> (i32, i32) {
    %c0_i32 = arith.constant 0 : i32
    return %arg0, %arg1 : i32, i32
  }
}

</mosaic_0001>

<llo_original>
// kernel: kpt_forward.3
$region0: #{kpt_forward.3}
  #allocation0 [shape = 'u32[]', space=smem, size = 0x4, offset = 0x4, fixed_abs, tag = 'smem constant byte address 0x4 - core index']
  #allocation1 [shape = 'u32[144,128]{1,0:T(1,128)}', space=vmem, size = 0x12000, scoped, tag = 'internal scratch']
  #allocation2 [shape = 'bf16[32,128]{1,0:T(16,128)(2,1)}', space=vmem, size = 0x2000, scoped, tag = 'scratch operand']
  %s0 = inlined_call_operand.vmem [shape: f32[32,128], index: 0, kind: input, shape index: {}]
  %s1 = inlined_call_operand.vmem [shape: f32[1,128], index: 1, kind: input, shape index: {}]
  %s2 = inlined_call_operand.vmem [shape: f32[1,128], index: 2, kind: input, shape index: {}]
  %s3 = inlined_call_operand.vmem [shape: bf16[256,128], index: 3, kind: input, shape index: {}]
  %s4 = inlined_call_operand.hbm [shape: f32[32,256], index: 4, kind: output, shape index: {}]
  %s5 = sld [smem:[#allocation0]]
  $region30: #{kpt_forward.3} parent=0
    _
  %s7 = ssub.s32 1, %s5
  %s8 = scalar_select 0, %s7, %s5
  $region1: #{kpt_forward.3} parent=0
    #allocation3 [shape = 'u8[32768]{0}', space=vmem, size = 0x8000, scoped, tag = 'output window, operand 0, single buffered']
    #allocation4 [shape = 's32[1]{0}', space=sflag, size = 0x4, scoped, tag = 'scoped memory for kpt_forward.3']
    %9 = vsyncpa [#allocation4], 0
    // Predicated region
    $region2: #{kpt_forward.3} parent=1 // pred_check
      _
    $region3: #{kpt_forward.3} parent=1 // pred_check_branch
      %11 = sbr.rel (0) target = $region5
    $region4: #{kpt_forward.3} parent=1 // pred_region
      _
    $region5: #{kpt_forward.3} parent=1 // pred_fallthru
      _
    // Predicated region
    $region6: #{kpt_forward.3} parent=1 // pred_check
      _
    $region7: #{kpt_forward.3} parent=1 // pred_check_branch
      %13 = sbr.rel (0) target = $region9
    $region8: #{kpt_forward.3} parent=1 // pred_region
      _
    $region9: #{kpt_forward.3} parent=1 // pred_fallthru
      _
    // Predicated region
    $region10: #{kpt_forward.3} parent=1 // pred_check
      _
    $region11: #{kpt_forward.3} parent=1 // pred_check_branch
      %15 = sbr.rel (0) target = $region13
    $region12: #{kpt_forward.3} parent=1 // pred_region
      _
    $region13: #{kpt_forward.3} parent=1 // pred_fallthru
      _
    // Predicated region
    $region14: #{kpt_forward.3} parent=1 // pred_check
      _
    $region15: #{kpt_forward.3} parent=1 // pred_check_branch
      %17 = sbr.rel (0) target = $region17
    $region16: #{kpt_forward.3} parent=1 // pred_region
      _
    $region17: #{kpt_forward.3} parent=1 // pred_fallthru
      _
    %p19 = scmp.eq.s32.totalorder 0, 0
    // Predicated region
    $region18: #{kpt_forward.3} parent=1 // pred_check
      %p20 = pneg %p19
    $region19: #{kpt_forward.3} parent=1 // pred_check_branch
      %22 = sbr.rel (%p20) target = $region21
    $region20: #{kpt_forward.3} parent=1 // pred_region
      %v23 = vld [vmem:[%s0] sm:$0xff]
      %v24 = vld [vmem:[%s0 + $0x8] sm:$0xff]
      %v25 = vld [vmem:[%s0 + $0x10] sm:$0xff]
      %v26 = vld [vmem:[%s0 + $0x18] sm:$0xff]
      %v27 = vld [vmem:[%s1] sm:$0x1]
      %v28 = vld [vmem:[%s2] sm:$0x1]
      %29 = vadd.xlane.f32.xlu0 %v23
      %v30 = vpop.xlane.xlu0 %29
      %31 = vadd.xlane.f32.xlu0 %v24
      %v32 = vpop.xlane.xlu0 %31
      %33 = vadd.xlane.f32.xlu0 %v25
      %v34 = vpop.xlane.xlu0 %33
      %35 = vadd.xlane.f32.xlu0 %v26
      %v36 = vpop.xlane.xlu0 %35
      %v37 = vrcp.pop 128.0
      %v38 = vmul.f32 %v30, %v37
      %v39 = vmul.f32 %v32, %v37
      %v40 = vmul.f32 %v34, %v37
      %v41 = vmul.f32 %v36, %v37
      %v42 = vsub.f32 %v23, %v38
      %v43 = vsub.f32 %v24, %v39
      %v44 = vsub.f32 %v25, %v40
      %v45 = vsub.f32 %v26, %v41
      %v46 = vmul.f32 %v42, %v42
      %v47 = vmul.f32 %v43, %v43
      %v48 = vmul.f32 %v44, %v44
      %v49 = vmul.f32 %v45, %v45
      %50 = vadd.xlane.f32.xlu0 %v46
      %v51 = vpop.xlane.xlu0 %50
      %52 = vadd.xlane.f32.xlu0 %v47
      %v53 = vpop.xlane.xlu0 %52
      %54 = vadd.xlane.f32.xlu0 %v48
      %v55 = vpop.xlane.xlu0 %54
      %56 = vadd.xlane.f32.xlu0 %v49
      %v57 = vpop.xlane.xlu0 %56
      %v58 = vmul.f32 %v51, %v37
      %v59 = vmul.f32 %v53, %v37
      %v60 = vmul.f32 %v55, %v37
      %v61 = vmul.f32 %v57, %v37
      %v62 = vadd.f32 %v58, 1e-05
      %v63 = vadd.f32 %v59, 1e-05
      %v64 = vadd.f32 %v60, 1e-05
      %v65 = vadd.f32 %v61, 1e-05
      %v66 = vrsqrt.pop %v62
      %v67 = vrsqrt.pop %v63
      %v68 = vrsqrt.pop %v64
      %v69 = vrsqrt.pop %v65
      %v70 = vmul.f32 %v42, %v66
      %v71 = vmul.f32 %v43, %v67
      %v72 = vmul.f32 %v44, %v68
      %v73 = vmul.f32 %v45, %v69
      %v75 = vlaneseq
      %v76 = vshrl.u32 %v75, 7
      %v77 = vsub.s32 0, %v76
      %v78 = vrot.slane %v27, %v77
      %v80 = vmul.f32 %v70, %v78
      %v81 = vmul.f32 %v71, %v78
      %v82 = vmul.f32 %v72, %v78
      %v83 = vmul.f32 %v73, %v78
      %v85 = vlaneseq
      %v86 = vshrl.u32 %v85, 7
      %v87 = vsub.s32 0, %v86
      %v88 = vrot.slane %v28, %v87
      %v90 = vadd.f32 %v80, %v88
      %v91 = vadd.f32 %v81, %v88
      %v92 = vadd.f32 %v82, %v88
      %v93 = vadd.f32 %v83, %v88
      %v94 = vpack.c.bf16 %v91, %v90
      %v95 = vpack.c.bf16 %v93, %v92
      %96 = vst [vmem:[#allocation2] sm:$0xff] %v94
      %97 = vst [vmem:[#allocation2 + $0x8] sm:$0xff] %v95
    $region21: #{kpt_forward.3} parent=1 // pred_fallthru
      _
    %v98 = vld [vmem:[#allocation2] sm:$0xff]
    %v99 = vld [vmem:[#allocation2 + $0x8] sm:$0xff]
    %v100 = vld [vmem:[%s3] sm:$0xf]
    %v101 = vld [vmem:[%s3 + $0x4] sm:$0xf]
    %v102 = vld [vmem:[%s3 + $0x8] sm:$0xf]
    %v103 = vld [vmem:[%s3 + $0xc] sm:$0xf]
    %v104 = vld [vmem:[%s3 + $0x10] sm:$0xf]
    %v105 = vld [vmem:[%s3 + $0x14] sm:$0xf]
    %v106 = vld [vmem:[%s3 + $0x18] sm:$0xf]
    %v107 = vld [vmem:[%s3 + $0x1c] sm:$0xf]
    %v108 = vld [vmem:[%s3 + $0x20] sm:$0xf]
    %v109 = vld [vmem:[%s3 + $0x24] sm:$0xf]
    %v110 = vld [vmem:[%s3 + $0x28] sm:$0xf]
    %v111 = vld [vmem:[%s3 + $0x2c] sm:$0xf]
    %v112 = vld [vmem:[%s3 + $0x30] sm:$0xf]
    %v113 = vld [vmem:[%s3 + $0x34] sm:$0xf]
    %v114 = vld [vmem:[%s3 + $0x38] sm:$0xf]
    %v115 = vld [vmem:[%s3 + $0x3c] sm:$0xf]
    %v116 = vld [vmem:[%s3 + $0x40] sm:$0xf]
    %v117 = vld [vmem:[%s3 + $0x44] sm:$0xf]
    %v118 = vld [vmem:[%s3 + $0x48] sm:$0xf]
    %v119 = vld [vmem:[%s3 + $0x4c] sm:$0xf]
    %v120 = vld [vmem:[%s3 + $0x50] sm:$0xf]
    %v121 = vld [vmem:[%s3 + $0x54] sm:$0xf]
    %v122 = vld [vmem:[%s3 + $0x58] sm:$0xf]
    %v123 = vld [vmem:[%s3 + $0x5c] sm:$0xf]
    %v124 = vld [vmem:[%s3 + $0x60] sm:$0xf]
    %v125 = vld [vmem:[%s3 + $0x64] sm:$0xf]
    %v126 = vld [vmem:[%s3 + $0x68] sm:$0xf]
    %v127 = vld [vmem:[%s3 + $0x6c] sm:$0xf]
    %v128 = vld [vmem:[%s3 + $0x70] sm:$0xf]
    %v129 = vld [vmem:[%s3 + $0x74] sm:$0xf]
    %v130 = vld [vmem:[%s3 + $0x78] sm:$0xf]
    %v131 = vld [vmem:[%s3 + $0x7c] sm:$0xf]
    %v164 = vunpack.c.l.b16 %v100
    %v165 = vunpack.c.l.b16 %v101
    %v166 = vunpack.c.l.b16 %v102
    %v167 = vunpack.c.l.b16 %v103
    %v168 = vunpack.c.l.b16 %v104
    %v169 = vunpack.c.l.b16 %v105
    %v170 = vunpack.c.l.b16 %v106
    %v171 = vunpack.c.l.b16 %v107
    %v172 = vunpack.c.l.b16 %v108
    %v173 = vunpack.c.l.b16 %v109
    %v174 = vunpack.c.l.b16 %v110
    %v175 = vunpack.c.l.b16 %v111
    %v176 = vunpack.c.l.b16 %v112
    %v177 = vunpack.c.l.b16 %v113
    %v178 = vunpack.c.l.b16 %v114
    %v179 = vunpack.c.l.b16 %v115
    %v180 = vunpack.c.l.b16 %v116
    %v181 = vunpack.c.l.b16 %v117
    %v182 = vunpack.c.l.b16 %v118
    %v183 = vunpack.c.l.b16 %v119
    %v184 = vunpack.c.l.b16 %v120
    %v185 = vunpack.c.l.b16 %v121
    %v186 = vunpack.c.l.b16 %v122
    %v187 = vunpack.c.l.b16 %v123
    %v188 = vunpack.c.l.b16 %v124
    %v189 = vunpack.c.l.b16 %v125
    %v190 = vunpack.c.l.b16 %v126
    %v191 = vunpack.c.l.b16 %v127
    %v192 = vunpack.c.l.b16 %v128
    %v193 = vunpack.c.l.b16 %v129
    %v194 = vunpack.c.l.b16 %v130
    %v195 = vunpack.c.l.b16 %v131
    %v196 = vpack.c.b16 %v165, %v164
    %v197 = vpack.c.b16 %v167, %v166
    %v198 = vpack.c.b16 %v169, %v168
    %v199 = vpack.c.b16 %v171, %v170
    %v200 = vpack.c.b16 %v173, %v172
    %v201 = vpack.c.b16 %v175, %v174
    %v202 = vpack.c.b16 %v177, %v176
    %v203 = vpack.c.b16 %v179, %v178
    %v204 = vpack.c.b16 %v181, %v180
    %v205 = vpack.c.b16 %v183, %v182
    %v206 = vpack.c.b16 %v185, %v184
    %v207 = vpack.c.b16 %v187, %v186
    %v208 = vpack.c.b16 %v189, %v188
    %v209 = vpack.c.b16 %v191, %v190
    %v210 = vpack.c.b16 %v193, %v192
    %v211 = vpack.c.b16 %v195, %v194
    %228 = vmatprep.subr.bf16.mxu0 0
    %229 = vmatpush1.bf16.xpose.msra.mxu0 %v196
    %230 = vmatprep.subr.bf16.mxu0 0
    %231 = vmatpush1.bf16.xpose.msra.mxu0 %v197
    %232 = vmatprep.subr.bf16.mxu0 0
    %233 = vmatpush1.bf16.xpose.msra.mxu0 %v198
    %234 = vmatprep.subr.bf16.mxu0 0
    %235 = vmatpush1.bf16.xpose.msra.mxu0 %v199
    %236 = vmatprep.subr.bf16.mxu0 0
    %237 = vmatpush1.bf16.xpose.msra.mxu0 %v200
    %238 = vmatprep.subr.bf16.mxu0 0
    %239 = vmatpush1.bf16.xpose.msra.mxu0 %v201
    %240 = vmatprep.subr.bf16.mxu0 0
    %241 = vmatpush1.bf16.xpose.msra.mxu0 %v202
    %242 = vmatprep.subr.bf16.mxu0 0
    %243 = vmatpush1.bf16.xpose.msra.mxu0 %v203
    %244 = vmatprep.subr.bf16.mxu0 0
    %245 = vmatpush1.bf16.xpose.msra.mxu0 %v204
    %246 = vmatprep.subr.bf16.mxu0 0
    %247 = vmatpush1.bf16.xpose.msra.mxu0 %v205
    %248 = vmatprep.subr.bf16.mxu0 0
    %249 = vmatpush1.bf16.xpose.msra.mxu0 %v206
    %250 = vmatprep.subr.bf16.mxu0 0
    %251 = vmatpush1.bf16.xpose.msra.mxu0 %v207
    %252 = vmatprep.subr.bf16.mxu0 0
    %253 = vmatpush1.bf16.xpose.msra.mxu0 %v208
    %254 = vmatprep.subr.bf16.mxu0 0
    %255 = vmatpush1.bf16.xpose.msra.mxu0 %v209
    %256 = vmatprep.subr.bf16.mxu0 0
    %257 = vmatpush1.bf16.xpose.msra.mxu0 %v210
    %258 = vmatprep.subr.bf16.mxu0 0
    %259 = vmatpush1.bf16.xpose.msra.mxu0 %v211
    %260 = vmatprep.mubr.bf16.mxu0 0
    %261 = vmatmul.mubr.bf16.gmra.mrb[0].mxu0 %v98
    %v262 = vpop.f32.mrb[0].mxu0
    %v263 = vadd.f32 0.0, %v262
    %v264 = vpop.f32.mrb[0].mxu0
    %v265 = vadd.f32 0.0, %v264
    %v266 = vpop.f32.mrb[0].mxu0
    %v267 = vadd.f32 0.0, %v266
    %v268 = vpop.f32.mrb[0].mxu0
    %v269 = vadd.f32 0.0, %v268
    %270 = vmatprep.mubr.bf16.mxu0 0
    %271 = vmatmul.mubr.bf16.gmra.mrb[0].mxu0 %v99
    %v272 = vpop.f32.mrb[0].mxu0
    %v273 = vadd.f32 0.0, %v272
    %v274 = vpop.f32.mrb[0].mxu0
    %v275 = vadd.f32 0.0, %v274
    %v276 = vpop.f32.mrb[0].mxu0
    %v277 = vadd.f32 0.0, %v276
    %v278 = vpop.f32.mrb[0].mxu0
    %v279 = vadd.f32 0.0, %v278
    %280 = vdwg.mxu0
    %281 = vst [vmem:[#allocation3] sm:$0xff] %v263
    %282 = vst [vmem:[#allocation3 + $0x8] sm:$0xff] %v265
    %283 = vst [vmem:[#allocation3 + $0x10] sm:$0xff] %v267
    %284 = vst [vmem:[#allocation3 + $0x18] sm:$0xff] %v269
    %285 = vst [vmem:[#allocation3 + $0x20] sm:$0xff] %v273
    %286 = vst [vmem:[#allocation3 + $0x28] sm:$0xff] %v275
    %287 = vst [vmem:[#allocation3 + $0x30] sm:$0xff] %v277
    %288 = vst [vmem:[#allocation3 + $0x38] sm:$0xff] %v279
    // Predicated region
    $region22: #{kpt_forward.3} parent=1 // pred_check
      _
    $region23: #{kpt_forward.3} parent=1 // pred_check_branch
      %290 = sbr.rel (0) target = $region25
    $region24: #{kpt_forward.3} parent=1 // pred_region
      %s292 = ssub.s32 1024, 1024
      %293 = vsyncadd [#allocation4], %s292
      %s294 = sshll.u32 [#allocation3], 4
      %s295 = int_to_ptr.vmem [resolvable:$true] %s294
      %300 = dma.vmem_to_hbm [thread:$0]  %s295, 1024, %s4, [#allocation4], 256, 256, 16
    $region25: #{kpt_forward.3} parent=1 // pred_fallthru
      _
    // Predicated region
    $region26: #{kpt_forward.3} parent=1 // pred_check
      _
    $region27: #{kpt_forward.3} parent=1 // pred_check_branch
      %302 = sbr.rel (0) target = $region29
    $region28: #{kpt_forward.3} parent=1 // pred_region
      %303 = dma.done [#allocation4], 1024
    $region29: #{kpt_forward.3} parent=1 // pred_fallthru
      _
    %304 = vsyncpa [#allocation4], 1

// kernel: kpt_forward.2
$region0: #{kpt_forward.2}
  #allocation0 [shape = 'u32[]', space=smem, size = 0x4, offset = 0x4, fixed_abs, tag = 'smem constant byte address 0x4 - core index']
  #allocation1 [shape = 'u32[144,128]{1,0:T(1,128)}', space=vmem, size = 0x12000, scoped, tag = 'internal scratch']
  #allocation2 [shape = 'f32[16,128]{1,0:T(8,128)}', space=vmem, size = 0x2000, scoped, tag = 'scratch operand']
  %s0 = inlined_call_operand.vmem [shape: f32[2,16,128], index: 0, kind: input, shape index: {}]
  %s1 = inlined_call_operand.vmem [shape: f32[2,1,128], index: 1, kind: input, shape index: {}]
  %s2 = inlined_call_operand.vmem [shape: f32[2,1,128], index: 2, kind: input, shape index: {}]
  %s3 = inlined_call_operand.hbm [shape: bf16[2,128,384], index: 3, kind: input, shape index: {}]
  %s4 = inlined_call_operand.vmem [shape: f32[2,1,384], index: 4, kind: input, shape index: {}]
  %s5 = inlined_call_operand.vmem [shape: bf16[2,128,128], index: 5, kind: input, shape index: {}]
  %s6 = inlined_call_operand.vmem [shape: f32[2,1,128], index: 6, kind: input, shape index: {}]
  %s7 = inlined_call_operand.vmem [shape: f32[2,1,128], index: 7, kind: input, shape index: {}]
  %s8 = inlined_call_operand.vmem [shape: f32[2,1,128], index: 8, kind: input, shape index: {}]
  %s9 = inlined_call_operand.hbm [shape: bf16[2,128,512], index: 9, kind: input, shape index: {}]
  %s10 = inlined_call_operand.vmem [shape: f32[2,1,512], index: 10, kind: input, shape index: {}]
  %s11 = inlined_call_operand.hbm [shape: bf16[2,512,128], index: 11, kind: input, shape index: {}]
  %s12 = inlined_call_operand.vmem [shape: f32[2,1,128], index: 12, kind: input, shape index: {}]
  %s13 = inlined_call_operand.vmem [shape: f32[2,16,128], index: 13, kind: output, shape index: {}]
  %s14 = sld [smem:[#allocation0]]
  $region105: #{kpt_forward.2} parent=0
    _
  %s16 = ssub.s32 1, %s14
  %s17 = scalar_select 0, %s16, %s14
  $region1: #{kpt_forward.2} parent=0
    #allocation3 [shape = 'u8[196608]{0}', space=vmem, size = 0x30000, scoped, tag = 'input window, operand 3']
    #allocation4 [shape = 's32[2]{0}', space=sflag, size = 0x8, scoped, tag = 'scoped memory for kpt_forward.2']
    #allocation5 [shape = 'u8[262144]{0}', space=vmem, size = 0x40000, scoped, tag = 'input window, operand 9']
    #allocation6 [shape = 's32[2]{0}', space=sflag, size = 0x8, scoped, tag = 'scoped memory for kpt_forward.2']
    #allocation7 [shape = 'u8[262144]{0}', space=vmem, size = 0x40000, scoped, tag = 'input window, operand 11']
    %18 = vsyncpa [#allocation4], 0
    %s19 = scalar_lea.sflag [#allocation4], 1
    %20 = vsyncpa %s19, 0
    %21 = vsyncpa [#allocation6], 0
    %s22 = scalar_lea.sflag [#allocation6], 1
    %23 = vsyncpa %s22, 0
    loop: start=0, step=1, limit=6
    $region2: #{kpt_forward.2} parent=1 // loop_pre_header
      _
    $region3: #{kpt_forward.2} parent=1 // loop_header
      %s25 = sphi 0, %s29
      %p26 = scmp.ge.s32.totalorder %s25, 6
      %s32 = sphi 0, %s44
      %s33 = sphi 0, %s40
      %s34 = sphi 0, %s32
      %s35 = sphi 0, %s33
      %s36 = sphi 0, %s34
      %s37 = sphi 0, %s35
      %s47 = sphi 0, %s49
      %s50 = sphi 0, %s47
      %s51 = sphi 0, %s50
      %s67 = sphi 0, %s51
      %s73 = sphi 0, %s75
      %s76 = sphi 0, %s73
      %s77 = sphi 0, %s76
      %s93 = sphi 0, %s77
      %s99 = sphi 0, %s101
      %s102 = sphi 0, %s99
      %s103 = sphi 0, %s102
      %s119 = sphi 0, %s103
      %s125 = sphi 0, %s127
      %s128 = sphi 0, %s125
      %s129 = sphi 0, %s128
      %s145 = sphi 0, %s129
      %s151 = sphi 0, %s153
      %s154 = sphi 0, %s151
      %s155 = sphi 0, %s154
      %s171 = sphi 0, %s155
      %s177 = sphi 0, %s179
      %s180 = sphi 0, %s177
      %s181 = sphi 0, %s180
      %s197 = sphi 0, %s181
      %s203 = sphi 0, %s205
      %s206 = sphi 0, %s203
      %s207 = sphi 0, %s206
      %s223 = sphi 0, %s207
      %s229 = sphi 0, %s231
      %s232 = sphi 0, %s229
      %s233 = sphi 0, %s232
      %s249 = sphi 0, %s233
      %s255 = sphi 0, %s257
      %s258 = sphi 0, %s255
      %s259 = sphi 0, %s258
      %s275 = sphi 0, %s259
      %s281 = sphi 0, %s283
      %s284 = sphi 0, %s281
      %s285 = sphi 0, %s284
      %s301 = sphi 0, %s285
      %s307 = sphi 0, %s309
      %s310 = sphi 0, %s307
      %s311 = sphi 0, %s310
      %s327 = sphi 0, %s311
      %s333 = sphi 0, %s335
      %s336 = sphi 0, %s333
      %s337 = sphi 0, %s336
      %s353 = sphi 0, %s337
      %s359 = sphi 0, %s361
      %s362 = sphi 0, %s359
      %s363 = sphi 0, %s362
      %s379 = sphi 0, %s363
      %s385 = sphi 0, %s387
      %s388 = sphi 0, %s385
      %s389 = sphi 0, %s388
      %s405 = sphi 0, %s389
    $region4: #{kpt_forward.2} parent=1 // loop_header_branch
      %28 = sbr.rel (%p26) target = $region8
    $region5: #{kpt_forward.2} parent=1 // loop_body
      %s30 = ssub.s32 %s25, 1
      %s31 = ssub.s32 %s25, 2
      %s38 = sadd.s32 1, %s33
      %p39 = scmp.ge.s32.totalorder %s38, 2
      %s40 = scalar_select %p39, 0, %s38
      %s41 = sadd.s32 1, %s32
      %s42 = scalar_select %p39, %s41, %s32
      %p43 = scmp.ge.s32.totalorder %s42, 2
      %s44 = scalar_select %p43, 0, %s42
      %s45 = ssub.s32 %s32, %s44
      %p46 = scmp.eq.s32.totalorder %s45, 0
      %s48 = sadd.s32 %s47, 1
      %s49 = scalar_select %p46, %s47, %s48
      %p52 = pneg %p46
      %p53 = scmp.eq.s32.totalorder %s25, 3
      %p54 = por %p52, %p53
      %p55 = scmp.ne.s32.totalorder %s47, %s50
      %p56 = scmp.eq.s32.totalorder %s25, 0
      %p57 = por %p55, %p56
      %p58 = scmp.ne.s32.totalorder %s47, %s50
      %p59 = scmp.eq.s32.totalorder %s30, 3
      %p60 = por %p58, %p59
      %p61 = scmp.ne.s32.totalorder %s50, %s51
      %p62 = scmp.eq.s32.totalorder %s30, 0
      %p63 = por %p61, %p62
      %p64 = scmp.ne.s32.totalorder %s50, %s51
      %p65 = scmp.eq.s32.totalorder %s31, 3
      %p66 = por %p64, %p65
      %p68 = scmp.ne.s32.totalorder %s51, %s67
      %p69 = scmp.eq.s32.totalorder %s31, 0
      %p70 = por %p68, %p69
      %s71 = ssub.s32 %s33, %s40
      %p72 = scmp.eq.s32.totalorder %s71, 0
      %s74 = sadd.s32 %s73, 1
      %s75 = scalar_select %p72, %s73, %s74
      %p78 = pneg %p72
      %p79 = scmp.eq.s32.totalorder %s25, 3
      %p80 = por %p78, %p79
      %p81 = scmp.ne.s32.totalorder %s73, %s76
      %p82 = scmp.eq.s32.totalorder %s25, 0
      %p83 = por %p81, %p82
      %p84 = scmp.ne.s32.totalorder %s73, %s76
      %p85 = scmp.eq.s32.totalorder %s30, 3
      %p86 = por %p84, %p85
      %p87 = scmp.ne.s32.totalorder %s76, %s77
      %p88 = scmp.eq.s32.totalorder %s30, 0
      %p89 = por %p87, %p88
      %p90 = scmp.ne.s32.totalorder %s76, %s77
      %p91 = scmp.eq.s32.totalorder %s31, 3
      %p92 = por %p90, %p91
      %p94 = scmp.ne.s32.totalorder %s77, %s93
      %p95 = scmp.eq.s32.totalorder %s31, 0
      %p96 = por %p94, %p95
      %s97 = ssub.s32 %s33, %s40
      %p98 = scmp.eq.s32.totalorder %s97, 0
      %s100 = sadd.s32 %s99, 1
      %s101 = scalar_select %p98, %s99, %s100
      %p104 = pneg %p98
      %p105 = scmp.eq.s32.totalorder %s25, 3
      %p106 = por %p104, %p105
      %p107 = scmp.ne.s32.totalorder %s99, %s102
      %p108 = scmp.eq.s32.totalorder %s25, 0
      %p109 = por %p107, %p108
      %p110 = scmp.ne.s32.totalorder %s99, %s102
      %p111 = scmp.eq.s32.totalorder %s30, 3
      %p112 = por %p110, %p111
      %p113 = scmp.ne.s32.totalorder %s102, %s103
      %p114 = scmp.eq.s32.totalorder %s30, 0
      %p115 = por %p113, %p114
      %p116 = scmp.ne.s32.totalorder %s102, %s103
      %p117 = scmp.eq.s32.totalorder %s31, 3
      %p118 = por %p116, %p117
      %p120 = scmp.ne.s32.totalorder %s103, %s119
      %p121 = scmp.eq.s32.totalorder %s31, 0
      %p122 = por %p120, %p121
      %s123 = ssub.s32 %s33, %s40
      %p124 = scmp.eq.s32.totalorder %s123, 0
      %s126 = sadd.s32 %s125, 1
      %s127 = scalar_select %p124, %s125, %s126
      %p130 = pneg %p124
      %p131 = scmp.eq.s32.totalorder %s25, 3
      %p132 = por %p130, %p131
      %p133 = scmp.ne.s32.totalorder %s125, %s128
      %p134 = scmp.eq.s32.totalorder %s25, 0
      %p135 = por %p133, %p134
      %p136 = scmp.ne.s32.totalorder %s125, %s128
      %p137 = scmp.eq.s32.totalorder %s30, 3
      %p138 = por %p136, %p137
      %p139 = scmp.ne.s32.totalorder %s128, %s129
      %p140 = scmp.eq.s32.totalorder %s30, 0
      %p141 = por %p139, %p140
      %p142 = scmp.ne.s32.totalorder %s128, %s129
      %p143 = scmp.eq.s32.totalorder %s31, 3
      %p144 = por %p142, %p143
      %p146 = scmp.ne.s32.totalorder %s129, %s145
      %p147 = scmp.eq.s32.totalorder %s31, 0
      %p148 = por %p146, %p147
      %s149 = ssub.s32 %s33, %s40
      %p150 = scmp.eq.s32.totalorder %s149, 0
      %s152 = sadd.s32 %s151, 1
      %s153 = scalar_select %p150, %s151, %s152
      %p156 = pneg %p150
      %p157 = scmp.eq.s32.totalorder %s25, 3
      %p158 = por %p156, %p157
      %p159 = scmp.ne.s32.totalorder %s151, %s154
      %p160 = scmp.eq.s32.totalorder %s25, 0
      %p161 = por %p159, %p160
      %p162 = scmp.ne.s32.totalorder %s151, %s154
      %p163 = scmp.eq.s32.totalorder %s30, 3
      %p164 = por %p162, %p163
      %p165 = scmp.ne.s32.totalorder %s154, %s155
      %p166 = scmp.eq.s32.totalorder %s30, 0
      %p167 = por %p165, %p166
      %p168 = scmp.ne.s32.totalorder %s154, %s155
      %p169 = scmp.eq.s32.totalorder %s31, 3
      %p170 = por %p168, %p169
      %p172 = scmp.ne.s32.totalorder %s155, %s171
      %p173 = scmp.eq.s32.totalorder %s31, 0
      %p174 = por %p172, %p173
      %s175 = ssub.s32 %s33, %s40
      %p176 = scmp.eq.s32.totalorder %s175, 0
      %s178 = sadd.s32 %s177, 1
      %s179 = scalar_select %p176, %s177, %s178
      %p182 = pneg %p176
      %p183 = scmp.eq.s32.totalorder %s25, 3
      %p184 = por %p182, %p183
      %p185 = scmp.ne.s32.totalorder %s177, %s180
      %p186 = scmp.eq.s32.totalorder %s25, 0
      %p187 = por %p185, %p186
      %p188 = scmp.ne.s32.totalorder %s177, %s180
      %p189 = scmp.eq.s32.totalorder %s30, 3
      %p190 = por %p188, %p189
      %p191 = scmp.ne.s32.totalorder %s180, %s181
      %p192 = scmp.eq.s32.totalorder %s30, 0
      %p193 = por %p191, %p192
      %p194 = scmp.ne.s32.totalorder %s180, %s181
      %p195 = scmp.eq.s32.totalorder %s31, 3
      %p196 = por %p194, %p195
      %p198 = scmp.ne.s32.totalorder %s181, %s197
      %p199 = scmp.eq.s32.totalorder %s31, 0
      %p200 = por %p198, %p199
      %s201 = ssub.s32 %s33, %s40
      %p202 = scmp.eq.s32.totalorder %s201, 0
      %s204 = sadd.s32 %s203, 1
      %s205 = scalar_select %p202, %s203, %s204
      %p208 = pneg %p202
      %p209 = scmp.eq.s32.totalorder %s25, 3
      %p210 = por %p208, %p209
      %p211 = scmp.ne.s32.totalorder %s203, %s206
      %p212 = scmp.eq.s32.totalorder %s25, 0
      %p213 = por %p211, %p212
      %p214 = scmp.ne.s32.totalorder %s203, %s206
      %p215 = scmp.eq.s32.totalorder %s30, 3
      %p216 = por %p214, %p215
      %p217 = scmp.ne.s32.totalorder %s206, %s207
      %p218 = scmp.eq.s32.totalorder %s30, 0
      %p219 = por %p217, %p218
      %p220 = scmp.ne.s32.totalorder %s206, %s207
      %p221 = scmp.eq.s32.totalorder %s31, 3
      %p222 = por %p220, %p221
      %p224 = scmp.ne.s32.totalorder %s207, %s223
      %p225 = scmp.eq.s32.totalorder %s31, 0
      %p226 = por %p224, %p225
      %s227 = ssub.s32 %s33, %s40
      %p228 = scmp.eq.s32.totalorder %s227, 0
      %s230 = sadd.s32 %s229, 1
      %s231 = scalar_select %p228, %s229, %s230
      %p234 = pneg %p228
      %p235 = scmp.eq.s32.totalorder %s25, 3
      %p236 = por %p234, %p235
      %p237 = scmp.ne.s32.totalorder %s229, %s232
      %p238 = scmp.eq.s32.totalorder %s25, 0
      %p239 = por %p237, %p238
      %p240 = scmp.ne.s32.totalorder %s229, %s232
      %p241 = scmp.eq.s32.totalorder %s30, 3
      %p242 = por %p240, %p241
      %p243 = scmp.ne.s32.totalorder %s232, %s233
      %p244 = scmp.eq.s32.totalorder %s30, 0
      %p245 = por %p243, %p244
      %p246 = scmp.ne.s32.totalorder %s232, %s233
      %p247 = scmp.eq.s32.totalorder %s31, 3
      %p248 = por %p246, %p247
      %p250 = scmp.ne.s32.totalorder %s233, %s249
      %p251 = scmp.eq.s32.totalorder %s31, 0
      %p252 = por %p250, %p251
      %s253 = ssub.s32 %s33, %s40
      %p254 = scmp.eq.s32.totalorder %s253, 0
      %s256 = sadd.s32 %s255, 1
      %s257 = scalar_select %p254, %s255, %s256
      %p260 = pneg %p254
      %p261 = scmp.eq.s32.totalorder %s25, 3
      %p262 = por %p260, %p261
      %p263 = scmp.ne.s32.totalorder %s255, %s258
      %p264 = scmp.eq.s32.totalorder %s25, 0
      %p265 = por %p263, %p264
      %p266 = scmp.ne.s32.totalorder %s255, %s258
      %p267 = scmp.eq.s32.totalorder %s30, 3
      %p268 = por %p266, %p267
      %p269 = scmp.ne.s32.totalorder %s258, %s259
      %p270 = scmp.eq.s32.totalorder %s30, 0
      %p271 = por %p269, %p270
      %p272 = scmp.ne.s32.totalorder %s258, %s259
      %p273 = scmp.eq.s32.totalorder %s31, 3
      %p274 = por %p272, %p273
      %p276 = scmp.ne.s32.totalorder %s259, %s275
      %p277 = scmp.eq.s32.totalorder %s31, 0
      %p278 = por %p276, %p277
      %s279 = ssub.s32 %s33, %s40
      %p280 = scmp.eq.s32.totalorder %s279, 0
      %s282 = sadd.s32 %s281, 1
      %s283 = scalar_select %p280, %s281, %s282
      %p286 = pneg %p280
      %p287 = scmp.eq.s32.totalorder %s25, 3
      %p288 = por %p286, %p287
      %p289 = scmp.ne.s32.totalorder %s281, %s284
      %p290 = scmp.eq.s32.totalorder %s25, 0
      %p291 = por %p289, %p290
      %p292 = scmp.ne.s32.totalorder %s281, %s284
      %p293 = scmp.eq.s32.totalorder %s30, 3
      %p294 = por %p292, %p293
      %p295 = scmp.ne.s32.totalorder %s284, %s285
      %p296 = scmp.eq.s32.totalorder %s30, 0
      %p297 = por %p295, %p296
      %p298 = scmp.ne.s32.totalorder %s284, %s285
      %p299 = scmp.eq.s32.totalorder %s31, 3
      %p300 = por %p298, %p299
      %p302 = scmp.ne.s32.totalorder %s285, %s301
      %p303 = scmp.eq.s32.totalorder %s31, 0
      %p304 = por %p302, %p303
      %s305 = ssub.s32 %s33, %s40
      %p306 = scmp.eq.s32.totalorder %s305, 0
      %s308 = sadd.s32 %s307, 1
      %s309 = scalar_select %p306, %s307, %s308
      %p312 = pneg %p306
      %p313 = scmp.eq.s32.totalorder %s25, 3
      %p314 = por %p312, %p313
      %p315 = scmp.ne.s32.totalorder %s307, %s310
      %p316 = scmp.eq.s32.totalorder %s25, 0
      %p317 = por %p315, %p316
      %p318 = scmp.ne.s32.totalorder %s307, %s310
      %p319 = scmp.eq.s32.totalorder %s30, 3
      %p320 = por %p318, %p319
      %p321 = scmp.ne.s32.totalorder %s310, %s311
      %p322 = scmp.eq.s32.totalorder %s30, 0
      %p323 = por %p321, %p322
      %p324 = scmp.ne.s32.totalorder %s310, %s311
      %p325 = scmp.eq.s32.totalorder %s31, 3
      %p326 = por %p324, %p325
      %p328 = scmp.ne.s32.totalorder %s311, %s327
      %p329 = scmp.eq.s32.totalorder %s31, 0
      %p330 = por %p328, %p329
      %s331 = ssub.s32 %s33, %s40
      %p332 = scmp.eq.s32.totalorder %s331, 0
      %s334 = sadd.s32 %s333, 1
      %s335 = scalar_select %p332, %s333, %s334
      %p338 = pneg %p332
      %p339 = scmp.eq.s32.totalorder %s25, 3
      %p340 = por %p338, %p339
      %p341 = scmp.ne.s32.totalorder %s333, %s336
      %p342 = scmp.eq.s32.totalorder %s25, 0
      %p343 = por %p341, %p342
      %p344 = scmp.ne.s32.totalorder %s333, %s336
      %p345 = scmp.eq.s32.totalorder %s30, 3
      %p346 = por %p344, %p345
      %p347 = scmp.ne.s32.totalorder %s336, %s337
      %p348 = scmp.eq.s32.totalorder %s30, 0
      %p349 = por %p347, %p348
      %p350 = scmp.ne.s32.totalorder %s336, %s337
      %p351 = scmp.eq.s32.totalorder %s31, 3
      %p352 = por %p350, %p351
      %p354 = scmp.ne.s32.totalorder %s337, %s353
      %p355 = scmp.eq.s32.totalorder %s31, 0
      %p356 = por %p354, %p355
      %s357 = ssub.s32 %s33, %s40
      %p358 = scmp.eq.s32.totalorder %s357, 0
      %s360 = sadd.s32 %s359, 1
      %s361 = scalar_select %p358, %s359, %s360
      %p364 = pneg %p358
      %p365 = scmp.eq.s32.totalorder %s25, 3
      %p366 = por %p364, %p365
      %p367 = scmp.ne.s32.totalorder %s359, %s362
      %p368 = scmp.eq.s32.totalorder %s25, 0
      %p369 = por %p367, %p368
      %p370 = scmp.ne.s32.totalorder %s359, %s362
      %p371 = scmp.eq.s32.totalorder %s30, 3
      %p372 = por %p370, %p371
      %p373 = scmp.ne.s32.totalorder %s362, %s363
      %p374 = scmp.eq.s32.totalorder %s30, 0
      %p375 = por %p373, %p374
      %p376 = scmp.ne.s32.totalorder %s362, %s363
      %p377 = scmp.eq.s32.totalorder %s31, 3
      %p378 = por %p376, %p377
      %p380 = scmp.ne.s32.totalorder %s363, %s379
      %p381 = scmp.eq.s32.totalorder %s31, 0
      %p382 = por %p380, %p381
      %s383 = ssub.s32 %s32, %s44
      %p384 = scmp.eq.s32.totalorder %s383, 0
      %s386 = sadd.s32 %s385, 1
      %s387 = scalar_select %p384, %s385, %s386
      %p390 = pneg %p384
      %p391 = scmp.eq.s32.totalorder %s25, 3
      %p392 = por %p390, %p391
      %p393 = scmp.ne.s32.totalorder %s385, %s388
      %p394 = scmp.eq.s32.totalorder %s25, 0
      %p395 = por %p393, %p394
      %p396 = scmp.ne.s32.totalorder %s385, %s388
      %p397 = scmp.eq.s32.totalorder %s30, 3
      %p398 = por %p396, %p397
      %p399 = scmp.ne.s32.totalorder %s388, %s389
      %p400 = scmp.eq.s32.totalorder %s30, 0
      %p401 = por %p399, %p400
      %p402 = scmp.ne.s32.totalorder %s388, %s389
      %p403 = scmp.eq.s32.totalorder %s31, 3
      %p404 = por %p402, %p403
      %p406 = scmp.ne.s32.totalorder %s389, %s405
      %p407 = scmp.eq.s32.totalorder %s31, 0
      %p408 = por %p406, %p407
      %p409 = scmp.le.s32.totalorder 1, %s25
      %p410 = scmp.lt.s32.totalorder %s25, 5
      %p411 = pnand %p409, %p410
      %p412 = pneg %p411
      // Predicated region
      $region9: #{kpt_forward.2} parent=5 // pred_check
        _
      $region10: #{kpt_forward.2} parent=5 // pred_check_branch
        %414 = sbr.rel (%p411) target = $region12
      $region11: #{kpt_forward.2} parent=5 // pred_region
        %s415 = ssub.s32 %s25, 1
      $region12: #{kpt_forward.2} parent=5 // pred_fallthru
        _
      %p416 = scmp.lt.s32.totalorder %s25, 4
      // Predicated region
      $region13: #{kpt_forward.2} parent=5 // pred_check
        %p417 = pneg %p416
      $region14: #{kpt_forward.2} parent=5 // pred_check_branch
        %419 = sbr.rel (%p417) target = $region16
      $region15: #{kpt_forward.2} parent=5 // pred_region
        // Predicated region
        $region17: #{kpt_forward.2} parent=15 // pred_check
          %p420 = pneg %p57
        $region18: #{kpt_forward.2} parent=15 // pred_check_branch
          %422 = sbr.rel (%p420) target = $region20
        $region19: #{kpt_forward.2} parent=15 // pred_region
          %p423 = scmp.lt.s32.totalorder %s32, 1
          %s424 = scalar_select %p423, %s32, 1
          %s425 = smul.addr %s424, 2
          %s426 = smul.addr %s425, 8
          %s427 = scalar_lea.vmem %s0, %s426
        $region20: #{kpt_forward.2} parent=15 // pred_fallthru
          _
        // Predicated region
        $region21: #{kpt_forward.2} parent=15 // pred_check
          %p428 = pneg %p83
        $region22: #{kpt_forward.2} parent=15 // pred_check_branch
          %430 = sbr.rel (%p428) target = $region24
        $region23: #{kpt_forward.2} parent=15 // pred_region
          %p431 = scmp.lt.s32.totalorder %s33, 1
          %s432 = scalar_select %p431, %s33, 1
          %s433 = scalar_lea.vmem %s1, %s432
        $region24: #{kpt_forward.2} parent=15 // pred_fallthru
          _
        // Predicated region
        $region25: #{kpt_forward.2} parent=15 // pred_check
          %p434 = pneg %p109
        $region26: #{kpt_forward.2} parent=15 // pred_check_branch
          %436 = sbr.rel (%p434) target = $region28
        $region27: #{kpt_forward.2} parent=15 // pred_region
          %p437 = scmp.lt.s32.totalorder %s33, 1
          %s438 = scalar_select %p437, %s33, 1
          %s439 = scalar_lea.vmem %s2, %s438
        $region28: #{kpt_forward.2} parent=15 // pred_fallthru
          _
        // Predicated region
        $region29: #{kpt_forward.2} parent=15 // pred_check
          %p440 = pneg %p135
        $region30: #{kpt_forward.2} parent=15 // pred_check_branch
          %442 = sbr.rel (%p440) target = $region32
        $region31: #{kpt_forward.2} parent=15 // pred_region
          %s443 = sand.u32 %s125, 1
          %s444 = scalar_lea.sflag [#allocation4], %s443
          %s445 = sand.u32 %s125, 1
          %s446 = smul.addr %s445, 192
          %s447 = scalar_lea.vmem [#allocation3], %s446
          %s449 = ssub.s32 3072, 3072
          %450 = vsyncadd %s444, %s449
          %s451 = smul.addr %s33, 48
          %s452 = smul.addr %s451, 64
          %s453 = scalar_lea.hbm %s3, %s452
          %s454 = sshll.u32 %s447, 4
          %s455 = int_to_ptr.vmem [resolvable:$true] %s454
          %460 = dma.hbm_to_vmem [thread:$0]  %s453, 3072, %s455, %s444, 192, 192, 12
        $region32: #{kpt_forward.2} parent=15 // pred_fallthru
          _
        // Predicated region
        $region33: #{kpt_forward.2} parent=15 // pred_check
          %p461 = pneg %p161
        $region34: #{kpt_forward.2} parent=15 // pred_check_branch
          %463 = sbr.rel (%p461) target = $region36
        $region35: #{kpt_forward.2} parent=15 // pred_region
          %p464 = scmp.lt.s32.totalorder %s33, 1
          %s465 = scalar_select %p464, %s33, 1
          %s466 = smul.addr %s465, 3
          %s467 = scalar_lea.vmem %s4, %s466
        $region36: #{kpt_forward.2} parent=15 // pred_fallthru
          _
        // Predicated region
        $region37: #{kpt_forward.2} parent=15 // pred_check
          %p468 = pneg %p187
        $region38: #{kpt_forward.2} parent=15 // pred_check_branch
          %470 = sbr.rel (%p468) target = $region40
        $region39: #{kpt_forward.2} parent=15 // pred_region
          %p471 = scmp.lt.s32.totalorder %s33, 1
          %s472 = scalar_select %p471, %s33, 1
          %s473 = smul.addr %s472, 16
          %s474 = smul.addr %s473, 4
          %s475 = scalar_lea.vmem %s5, %s474
        $region40: #{kpt_forward.2} parent=15 // pred_fallthru
          _
        // Predicated region
        $region41: #{kpt_forward.2} parent=15 // pred_check
          %p476 = pneg %p213
        $region42: #{kpt_forward.2} parent=15 // pred_check_branch
          %478 = sbr.rel (%p476) target = $region44
        $region43: #{kpt_forward.2} parent=15 // pred_region
          %p479 = scmp.lt.s32.totalorder %s33, 1
          %s480 = scalar_select %p479, %s33, 1
          %s481 = scalar_lea.vmem %s6, %s480
        $region44: #{kpt_forward.2} parent=15 // pred_fallthru
          _
        // Predicated region
        $region45: #{kpt_forward.2} parent=15 // pred_check
          %p482 = pneg %p239
        $region46: #{kpt_forward.2} parent=15 // pred_check_branch
          %484 = sbr.rel (%p482) target = $region48
        $region47: #{kpt_forward.2} parent=15 // pred_region
          %p485 = scmp.lt.s32.totalorder %s33, 1
          %s486 = scalar_select %p485, %s33, 1
          %s487 = scalar_lea.vmem %s7, %s486
        $region48: #{kpt_forward.2} parent=15 // pred_fallthru
          _
        // Predicated region
        $region49: #{kpt_forward.2} parent=15 // pred_check
          %p488 = pneg %p265
        $region50: #{kpt_forward.2} parent=15 // pred_check_branch
          %490 = sbr.rel (%p488) target = $region52
        $region51: #{kpt_forward.2} parent=15 // pred_region
          %p491 = scmp.lt.s32.totalorder %s33, 1
          %s492 = scalar_select %p491, %s33, 1
          %s493 = scalar_lea.vmem %s8, %s492
        $region52: #{kpt_forward.2} parent=15 // pred_fallthru
          _
        // Predicated region
        $region53: #{kpt_forward.2} parent=15 // pred_check
          %p494 = pneg %p291
        $region54: #{kpt_forward.2} parent=15 // pred_check_branch
          %496 = sbr.rel (%p494) target = $region56
        $region55: #{kpt_forward.2} parent=15 // pred_region
          %s497 = sand.u32 %s25, 1
          %s498 = scalar_lea.sflag [#allocation6], %s497
          %s499 = sand.u32 %s281, 1
          %s500 = smul.addr %s499, 256
          %s501 = scalar_lea.vmem [#allocation5], %s500
          %s503 = ssub.s32 4096, 4096
          %504 = vsyncadd %s498, %s503
          %s505 = smul.addr %s33, 64
          %s506 = smul.addr %s505, 64
          %s507 = scalar_lea.hbm %s9, %s506
          %s508 = sshll.u32 %s501, 4
          %s509 = int_to_ptr.vmem [resolvable:$true] %s508
          %514 = dma.hbm_to_vmem [thread:$0]  %s507, 4096, %s509, %s498, 256, 256, 16
        $region56: #{kpt_forward.2} parent=15 // pred_fallthru
          _
        // Predicated region
        $region57: #{kpt_forward.2} parent=15 // pred_check
          %p515 = pneg %p317
        $region58: #{kpt_forward.2} parent=15 // pred_check_branch
          %517 = sbr.rel (%p515) target = $region60
        $region59: #{kpt_forward.2} parent=15 // pred_region
          %p518 = scmp.lt.s32.totalorder %s33, 1
          %s519 = scalar_select %p518, %s33, 1
          %s520 = smul.addr %s519, 4
          %s521 = scalar_lea.vmem %s10, %s520
        $region60: #{kpt_forward.2} parent=15 // pred_fallthru
          _
        // Predicated region
        $region61: #{kpt_forward.2} parent=15 // pred_check
          %p522 = pneg %p343
        $region62: #{kpt_forward.2} parent=15 // pred_check_branch
          %524 = sbr.rel (%p522) target = $region64
        $region63: #{kpt_forward.2} parent=15 // pred_region
          %s525 = sand.u32 %s25, 1
          %s526 = scalar_lea.sflag [#allocation6], %s525
          %s527 = sand.u32 %s333, 1
          %s528 = smul.addr %s527, 256
          %s529 = scalar_lea.vmem [#allocation7], %s528
          %s531 = ssub.s32 4096, 4096
          %532 = vsyncadd %s526, %s531
          %s533 = smul.addr %s33, 64
          %s534 = smul.addr %s533, 64
          %s535 = scalar_lea.hbm %s11, %s534
          %s536 = sshll.u32 %s529, 4
          %s537 = int_to_ptr.vmem [resolvable:$true] %s536
          %542 = dma.hbm_to_vmem [thread:$0]  %s535, 4096, %s537, %s526, 64, 64, 4
        $region64: #{kpt_forward.2} parent=15 // pred_fallthru
          _
        // Predicated region
        $region65: #{kpt_forward.2} parent=15 // pred_check
          %p543 = pneg %p369
        $region66: #{kpt_forward.2} parent=15 // pred_check_branch
          %545 = sbr.rel (%p543) target = $region68
        $region67: #{kpt_forward.2} parent=15 // pred_region
          %p546 = scmp.lt.s32.totalorder %s33, 1
          %s547 = scalar_select %p546, %s33, 1
          %s548 = scalar_lea.vmem %s12, %s547
        $region68: #{kpt_forward.2} parent=15 // pred_fallthru
          _
      $region16: #{kpt_forward.2} parent=5 // pred_fallthru
        _
      %p549 = scmp.le.s32.totalorder 1, %s25
      %p550 = scmp.lt.s32.totalorder %s25, 5
      %p551 = pnand %p549, %p550
      %p552 = pneg %p551
      // Predicated region
      $region69: #{kpt_forward.2} parent=5 // pred_check
        _
      $region70: #{kpt_forward.2} parent=5 // pred_check_branch
        %554 = sbr.rel (%p551) target = $region72
      $region71: #{kpt_forward.2} parent=5 // pred_region
        %s555 = ssub.s32 %s25, 1
        %s556 = sand.u32 %s128, 1
        %s557 = scalar_lea.sflag [#allocation4], %s556
        %s558 = sand.u32 %s128, 1
        %s559 = smul.addr %s558, 192
        %s560 = scalar_lea.vmem [#allocation3], %s559
        // Predicated region
        $region73: #{kpt_forward.2} parent=71 // pred_check
          %p561 = pneg %p141
        $region74: #{kpt_forward.2} parent=71 // pred_check_branch
          %563 = sbr.rel (%p561) target = $region76
        $region75: #{kpt_forward.2} parent=71 // pred_region
          %564 = dma.done %s557, 3072
        $region76: #{kpt_forward.2} parent=71 // pred_fallthru
          _
        %s565 = sand.u32 %s30, 1
        %s566 = scalar_lea.sflag [#allocation6], %s565
        %s567 = sand.u32 %s284, 1
        %s568 = smul.addr %s567, 256
        %s569 = scalar_lea.vmem [#allocation5], %s568
        // Predicated region
        $region77: #{kpt_forward.2} parent=71 // pred_check
          %p570 = pneg %p297
        $region78: #{kpt_forward.2} parent=71 // pred_check_branch
          %572 = sbr.rel (%p570) target = $region80
        $region79: #{kpt_forward.2} parent=71 // pred_region
          %573 = dma.done %s566, 4096
        $region80: #{kpt_forward.2} parent=71 // pred_fallthru
          _
        %s574 = sand.u32 %s30, 1
        %s575 = scalar_lea.sflag [#allocation6], %s574
        %s576 = sand.u32 %s336, 1
        %s577 = smul.addr %s576, 256
        %s578 = scalar_lea.vmem [#allocation7], %s577
        // Predicated region
        $region81: #{kpt_forward.2} parent=71 // pred_check
          %p579 = pneg %p349
        $region82: #{kpt_forward.2} parent=71 // pred_check_branch
          %581 = sbr.rel (%p579) target = $region84
        $region83: #{kpt_forward.2} parent=71 // pred_region
          %582 = dma.done %s575, 4096
        $region84: #{kpt_forward.2} parent=71 // pred_fallthru
          _
        %p583 = scmp.lt.s32.totalorder %s34, 1
        %s584 = scalar_select %p583, %s34, 1
        %s585 = smul.addr %s584, 2
        %s586 = smul.addr %s585, 8
        %s587 = scalar_lea.vmem %s0, %s586
        %p588 = pneg %p63
        %p589 = pneg %p60
        %p590 = scmp.lt.s32.totalorder %s35, 1
        %s591 = scalar_select %p590, %s35, 1
        %s592 = scalar_lea.vmem %s1, %s591
        %p593 = pneg %p89
        %p594 = pneg %p86
        %p595 = scmp.lt.s32.totalorder %s35, 1
        %s596 = scalar_select %p595, %s35, 1
        %s597 = scalar_lea.vmem %s2, %s596
        %p598 = pneg %p115
        %p599 = pneg %p112
        %s600 = sand.u32 %s128, 1
        %s601 = scalar_lea.sflag [#allocation4], %s600
        %s602 = sand.u32 %s128, 1
        %s603 = smul.addr %s602, 192
        %s604 = scalar_lea.vmem [#allocation3], %s603
        %p605 = pneg %p141
        %p606 = pneg %p138
        %p607 = scmp.lt.s32.totalorder %s35, 1
        %s608 = scalar_select %p607, %s35, 1
        %s609 = smul.addr %s608, 3
        %s610 = scalar_lea.vmem %s4, %s609
        %p611 = pneg %p167
        %p612 = pneg %p164
        %p613 = scmp.lt.s32.totalorder %s35, 1
        %s614 = scalar_select %p613, %s35, 1
        %s615 = smul.addr %s614, 16
        %s616 = smul.addr %s615, 4
        %s617 = scalar_lea.vmem %s5, %s616
        %p618 = pneg %p193
        %p619 = pneg %p190
        %p620 = scmp.lt.s32.totalorder %s35, 1
        %s621 = scalar_select %p620, %s35, 1
        %s622 = scalar_lea.vmem %s6, %s621
        %p623 = pneg %p219
        %p624 = pneg %p216
        %p625 = scmp.lt.s32.totalorder %s35, 1
        %s626 = scalar_select %p625, %s35, 1
        %s627 = scalar_lea.vmem %s7, %s626
        %p628 = pneg %p245
        %p629 = pneg %p242
        %p630 = scmp.lt.s32.totalorder %s35, 1
        %s631 = scalar_select %p630, %s35, 1
        %s632 = scalar_lea.vmem %s8, %s631
        %p633 = pneg %p271
        %p634 = pneg %p268
        %s635 = sand.u32 %s30, 1
        %s636 = scalar_lea.sflag [#allocation6], %s635
        %s637 = sand.u32 %s284, 1
        %s638 = smul.addr %s637, 256
        %s639 = scalar_lea.vmem [#allocation5], %s638
        %p640 = pneg %p297
        %p641 = pneg %p294
        %p642 = scmp.lt.s32.totalorder %s35, 1
        %s643 = scalar_select %p642, %s35, 1
        %s644 = smul.addr %s643, 4
        %s645 = scalar_lea.vmem %s10, %s644
        %p646 = pneg %p323
        %p647 = pneg %p320
        %s648 = sand.u32 %s30, 1
        %s649 = scalar_lea.sflag [#allocation6], %s648
        %s650 = sand.u32 %s336, 1
        %s651 = smul.addr %s650, 256
        %s652 = scalar_lea.vmem [#allocation7], %s651
        %p653 = pneg %p349
        %p654 = pneg %p346
        %p655 = scmp.lt.s32.totalorder %s35, 1
        %s656 = scalar_select %p655, %s35, 1
        %s657 = scalar_lea.vmem %s12, %s656
        %p658 = pneg %p375
        %p659 = pneg %p372
        %p660 = pneg %p401
        %p661 = pneg %p398
        %p662 = scmp.lt.s32.totalorder %s34, 1
        %s663 = scalar_select %p662, %s34, 1
        %s664 = smul.addr %s663, 2
        %s665 = smul.addr %s664, 8
        %s666 = scalar_lea.vmem %s13, %s665
        %p667 = scmp.lt.s32.totalorder %s34, 1
        %s668 = scalar_select %p667, %s34, 1
        %s669 = smul.addr %s668, 2
        %s670 = smul.addr %s669, 8
        %s671 = scalar_lea.vmem %s0, %s670
        %p672 = scmp.lt.s32.totalorder %s35, 1
        %s673 = scalar_select %p672, %s35, 1
        %s674 = scalar_lea.vmem %s1, %s673
        %p675 = scmp.lt.s32.totalorder %s35, 1
        %s676 = scalar_select %p675, %s35, 1
        %s677 = scalar_lea.vmem %s2, %s676
        %p678 = scmp.lt.s32.totalorder %s35, 1
        %s679 = scalar_select %p678, %s35, 1
        %s680 = smul.addr %s679, 3
        %s681 = scalar_lea.vmem %s4, %s680
        %p682 = scmp.lt.s32.totalorder %s35, 1
        %s683 = scalar_select %p682, %s35, 1
        %s684 = smul.addr %s683, 16
        %s685 = smul.addr %s684, 4
        %s686 = scalar_lea.vmem %s5, %s685
        %p687 = scmp.lt.s32.totalorder %s35, 1
        %s688 = scalar_select %p687, %s35, 1
        %s689 = scalar_lea.vmem %s6, %s688
        %p690 = scmp.lt.s32.totalorder %s35, 1
        %s691 = scalar_select %p690, %s35, 1
        %s692 = scalar_lea.vmem %s7, %s691
        %p693 = scmp.lt.s32.totalorder %s35, 1
        %s694 = scalar_select %p693, %s35, 1
        %s695 = scalar_lea.vmem %s8, %s694
        %p696 = scmp.lt.s32.totalorder %s35, 1
        %s697 = scalar_select %p696, %s35, 1
        %s698 = smul.addr %s697, 4
        %s699 = scalar_lea.vmem %s10, %s698
        %p700 = scmp.lt.s32.totalorder %s35, 1
        %s701 = scalar_select %p700, %s35, 1
        %s702 = scalar_lea.vmem %s12, %s701
        %p703 = scmp.lt.s32.totalorder %s34, 1
        %s704 = scalar_select %p703, %s34, 1
        %s705 = smul.addr %s704, 2
        %s706 = smul.addr %s705, 8
        %s707 = scalar_lea.vmem %s13, %s706
        %p709 = scmp.eq.s32.totalorder %s35, 0
        // Predicated region
        $region85: #{kpt_forward.2} parent=71 // pred_check
          %p710 = pneg %p709
        $region86: #{kpt_forward.2} parent=71 // pred_check_branch
          %712 = sbr.rel (%p710) target = $region88
        $region87: #{kpt_forward.2} parent=71 // pred_region
          %v713 = vld [vmem:[%s671] sm:$0xff]
          %v714 = vld [vmem:[%s671 + $0x8] sm:$0xff]
          %715 = vst [vmem:[#allocation2] sm:$0xff] %v713
          %716 = vst [vmem:[#allocation2 + $0x8] sm:$0xff] %v714
        $region88: #{kpt_forward.2} parent=71 // pred_fallthru
          _
        %v717 = vld [vmem:[#allocation2] sm:$0xff]
        %v718 = vld [vmem:[#allocation2 + $0x8] sm:$0xff]
        %v719 = vld [vmem:[%s674] sm:$0x1]
        %v720 = vld [vmem:[%s677] sm:$0x1]
        %721 = vadd.xlane.f32.xlu0 %v717
        %v722 = vpop.xlane.xlu0 %721
        %723 = vadd.xlane.f32.xlu0 %v718
        %v724 = vpop.xlane.xlu0 %723
        %v725 = vrcp.pop 128.0
        %v726 = vmul.f32 %v722, %v725
        %v727 = vmul.f32 %v724, %v725
        %v728 = vsub.f32 %v717, %v726
        %v729 = vsub.f32 %v718, %v727
        %v730 = vmul.f32 %v728, %v728
        %v731 = vmul.f32 %v729, %v729
        %732 = vadd.xlane.f32.xlu0 %v730
        %v733 = vpop.xlane.xlu0 %732
        %734 = vadd.xlane.f32.xlu0 %v731
        %v735 = vpop.xlane.xlu0 %734
        %v736 = vmul.f32 %v733, %v725
        %v737 = vmul.f32 %v735, %v725
        %v738 = vadd.f32 %v736, 1e-05
        %v739 = vadd.f32 %v737, 1e-05
        %v740 = vrsqrt.pop %v738
        %v741 = vrsqrt.pop %v739
        %v742 = vmul.f32 %v728, %v740
        %v743 = vmul.f32 %v729, %v741
        %v745 = vlaneseq
        %v746 = vshrl.u32 %v745, 7
        %v747 = vsub.s32 0, %v746
        %v748 = vrot.slane %v719, %v747
        %v750 = vmul.f32 %v742, %v748
        %v751 = vmul.f32 %v743, %v748
        %v753 = vlaneseq
        %v754 = vshrl.u32 %v753, 7
        %v755 = vsub.s32 0, %v754
        %v756 = vrot.slane %v720, %v755
        %v758 = vadd.f32 %v750, %v756
        %v759 = vadd.f32 %v751, %v756
        %v760 = vpack.c.bf16 %v759, %v758
        %v761 = vld [vmem:[%s560] sm:$0xff]
        %v762 = vld [vmem:[%s560 + $0x8] sm:$0xf]
        %v763 = vld [vmem:[%s560 + $0xc] sm:$0xff]
        %v764 = vld [vmem:[%s560 + $0x14] sm:$0xf]
        %v765 = vld [vmem:[%s560 + $0x18] sm:$0xff]
        %v766 = vld [vmem:[%s560 + $0x20] sm:$0xf]
        %v767 = vld [vmem:[%s560 + $0x24] sm:$0xff]
        %v768 = vld [vmem:[%s560 + $0x2c] sm:$0xf]
        %v769 = vld [vmem:[%s560 + $0x30] sm:$0xff]
        %v770 = vld [vmem:[%s560 + $0x38] sm:$0xf]
        %v771 = vld [vmem:[%s560 + $0x3c] sm:$0xff]
        %v772 = vld [vmem:[%s560 + $0x44] sm:$0xf]
        %v773 = vld [vmem:[%s560 + $0x48] sm:$0xff]
        %v774 = vld [vmem:[%s560 + $0x50] sm:$0xf]
        %v775 = vld [vmem:[%s560 + $0x54] sm:$0xff]
        %v776 = vld [vmem:[%s560 + $0x5c] sm:$0xf]
        %v777 = vld [vmem:[%s560 + $0x60] sm:$0xff]
        %v778 = vld [vmem:[%s560 + $0x68] sm:$0xf]
        %v779 = vld [vmem:[%s560 + $0x6c] sm:$0xff]
        %v780 = vld [vmem:[%s560 + $0x74] sm:$0xf]
        %v781 = vld [vmem:[%s560 + $0x78] sm:$0xff]
        %v782 = vld [vmem:[%s560 + $0x80] sm:$0xf]
        %v783 = vld [vmem:[%s560 + $0x84] sm:$0xff]
        %v784 = vld [vmem:[%s560 + $0x8c] sm:$0xf]
        %v785 = vld [vmem:[%s560 + $0x90] sm:$0xff]
        %v786 = vld [vmem:[%s560 + $0x98] sm:$0xf]
        %v787 = vld [vmem:[%s560 + $0x9c] sm:$0xff]
        %v788 = vld [vmem:[%s560 + $0xa4] sm:$0xf]
        %v789 = vld [vmem:[%s560 + $0xa8] sm:$0xff]
        %v790 = vld [vmem:[%s560 + $0xb0] sm:$0xf]
        %v791 = vld [vmem:[%s560 + $0xb4] sm:$0xff]
        %v792 = vld [vmem:[%s560 + $0xbc] sm:$0xf]
        %v793 = vld [vmem:[%s681] sm:$0x7]
        %v795 = vlaneseq
        %v796 = vshrl.u32 %v795, 7
        %v797 = vsub.s32 0, %v796
        %v798 = vrot.slane %v793, %v797
        %v799 = vlaneseq
        %v800 = vshrl.u32 %v799, 7
        %v801 = vsub.s32 1, %v800
        %v802 = vrot.slane %v793, %v801
        %v803 = vlaneseq
        %v804 = vshrl.u32 %v803, 7
        %v805 = vsub.s32 2, %v804
        %v806 = vrot.slane %v793, %v805
        %v842 = vunpack.c.l.b16 %v761
        %v843 = vunpack.c.h.b16 %v761
        %v844 = vunpack.c.l.b16 %v762
        %v845 = vunpack.c.l.b16 %v763
        %v846 = vunpack.c.h.b16 %v763
        %v847 = vunpack.c.l.b16 %v764
        %v848 = vunpack.c.l.b16 %v765
        %v849 = vunpack.c.h.b16 %v765
        %v850 = vunpack.c.l.b16 %v766
        %v851 = vunpack.c.l.b16 %v767
        %v852 = vunpack.c.h.b16 %v767
        %v853 = vunpack.c.l.b16 %v768
        %v854 = vunpack.c.l.b16 %v769
        %v855 = vunpack.c.h.b16 %v769
        %v856 = vunpack.c.l.b16 %v770
        %v857 = vunpack.c.l.b16 %v771
        %v858 = vunpack.c.h.b16 %v771
        %v859 = vunpack.c.l.b16 %v772
        %v860 = vunpack.c.l.b16 %v773
        %v861 = vunpack.c.h.b16 %v773
        %v862 = vunpack.c.l.b16 %v774
        %v863 = vunpack.c.l.b16 %v775
        %v864 = vunpack.c.h.b16 %v775
        %v865 = vunpack.c.l.b16 %v776
        %v866 = vunpack.c.l.b16 %v777
        %v867 = vunpack.c.h.b16 %v777
        %v868 = vunpack.c.l.b16 %v778
        %v869 = vunpack.c.l.b16 %v779
        %v870 = vunpack.c.h.b16 %v779
        %v871 = vunpack.c.l.b16 %v780
        %v872 = vunpack.c.l.b16 %v781
        %v873 = vunpack.c.h.b16 %v781
        %v874 = vunpack.c.l.b16 %v782
        %v875 = vunpack.c.l.b16 %v783
        %v876 = vunpack.c.h.b16 %v783
        %v877 = vunpack.c.l.b16 %v784
        %v878 = vunpack.c.l.b16 %v785
        %v879 = vunpack.c.h.b16 %v785
        %v880 = vunpack.c.l.b16 %v786
        %v881 = vunpack.c.l.b16 %v787
        %v882 = vunpack.c.h.b16 %v787
        %v883 = vunpack.c.l.b16 %v788
        %v884 = vunpack.c.l.b16 %v789
        %v885 = vunpack.c.h.b16 %v789
        %v886 = vunpack.c.l.b16 %v790
        %v887 = vunpack.c.l.b16 %v791
        %v888 = vunpack.c.h.b16 %v791
        %v889 = vunpack.c.l.b16 %v792
        %v890 = vpack.c.b16 %v845, %v842
        %v891 = vpack.c.b16 %v846, %v843
        %v892 = vpack.c.b16 %v847, %v844
        %v893 = vpack.c.b16 %v851, %v848
        %v894 = vpack.c.b16 %v852, %v849
        %v895 = vpack.c.b16 %v853, %v850
        %v896 = vpack.c.b16 %v857, %v854
        %v897 = vpack.c.b16 %v858, %v855
        %v898 = vpack.c.b16 %v859, %v856
        %v899 = vpack.c.b16 %v863, %v860
        %v900 = vpack.c.b16 %v864, %v861
        %v901 = vpack.c.b16 %v865, %v862
        %v902 = vpack.c.b16 %v869, %v866
        %v903 = vpack.c.b16 %v870, %v867
        %v904 = vpack.c.b16 %v871, %v868
        %v905 = vpack.c.b16 %v875, %v872
        %v906 = vpack.c.b16 %v876, %v873
        %v907 = vpack.c.b16 %v877, %v874
        %v908 = vpack.c.b16 %v881, %v878
        %v909 = vpack.c.b16 %v882, %v879
        %v910 = vpack.c.b16 %v883, %v880
        %v911 = vpack.c.b16 %v887, %v884
        %v912 = vpack.c.b16 %v888, %v885
        %v913 = vpack.c.b16 %v889, %v886
        %938 = vmatprep.subr.bf16.mxu0 %v891
        %939 = vmatpush1.bf16.msra.mxu0 %v890
        %940 = vmatprep.subr.bf16.mxu0 %v894
        %941 = vmatpush1.bf16.msra.mxu0 %v893
        %942 = vmatprep.subr.bf16.mxu0 %v897
        %943 = vmatpush1.bf16.msra.mxu0 %v896
        %944 = vmatprep.subr.bf16.mxu0 %v900
        %945 = vmatpush1.bf16.msra.mxu0 %v899
        %946 = vmatprep.subr.bf16.mxu0 %v903
        %947 = vmatpush1.bf16.msra.mxu0 %v902
        %948 = vmatprep.subr.bf16.mxu0 %v906
        %949 = vmatpush1.bf16.msra.mxu0 %v905
        %950 = vmatprep.subr.bf16.mxu0 %v909
        %951 = vmatpush1.bf16.msra.mxu0 %v908
        %952 = vmatprep.subr.bf16.mxu0 %v912
        %953 = vmatpush1.bf16.msra.mxu0 %v911
        %954 = vmatprep.subr.bf16.mxu0 0
        %955 = vmatpush1.bf16.msra.mxu0 0
        %956 = vmatprep.subr.bf16.mxu0 0
        %957 = vmatpush1.bf16.msra.mxu0 0
        %958 = vmatprep.subr.bf16.mxu0 0
        %959 = vmatpush1.bf16.msra.mxu0 0
        %960 = vmatprep.subr.bf16.mxu0 0
        %961 = vmatpush1.bf16.msra.mxu0 0
        %962 = vmatprep.subr.bf16.mxu0 0
        %963 = vmatpush1.bf16.msra.mxu0 0
        %964 = vmatprep.subr.bf16.mxu0 0
        %965 = vmatpush1.bf16.msra.mxu0 0
        %966 = vmatprep.subr.bf16.mxu0 0
        %967 = vmatpush1.bf16.msra.mxu0 0
        %968 = vmatprep.subr.bf16.mxu0 0
        %969 = vmatpush1.bf16.msra.mxu0 0
        %970 = vmatprep.mubr.bf16.mxu0 0
        %971 = vmatmul.mubr.bf16.gmra.mrb[0].mxu0 %v760
        %v972 = vpop.f32.mrb[0].mxu0
        %v973 = vadd.f32 %v798, %v972
        %v974 = vpop.f32.mrb[0].mxu0
        %v975 = vadd.f32 %v802, %v974
        %v976 = vpop.f32.mrb[0].mxu0
        %v977 = vadd.f32 %v798, %v976
        %v978 = vpop.f32.mrb[0].mxu0
        %v979 = vadd.f32 %v802, %v978
        %980 = vdwg.mxu0
        %981 = vmatprep.subr.bf16.mxu0 0
        %982 = vmatpush1.bf16.msra.mxu0 %v892
        %983 = vmatprep.subr.bf16.mxu0 0
        %984 = vmatpush1.bf16.msra.mxu0 %v895
        %985 = vmatprep.subr.bf16.mxu0 0
        %986 = vmatpush1.bf16.msra.mxu0 %v898
        %987 = vmatprep.subr.bf16.mxu0 0
        %988 = vmatpush1.bf16.msra.mxu0 %v901
        %989 = vmatprep.subr.bf16.mxu0 0
        %990 = vmatpush1.bf16.msra.mxu0 %v904
        %991 = vmatprep.subr.bf16.mxu0 0
        %992 = vmatpush1.bf16.msra.mxu0 %v907
        %993 = vmatprep.subr.bf16.mxu0 0
        %994 = vmatpush1.bf16.msra.mxu0 %v910
        %995 = vmatprep.subr.bf16.mxu0 0
        %996 = vmatpush1.bf16.msra.mxu0 %v913
        %997 = vmatprep.subr.bf16.mxu0 0
        %998 = vmatpush1.bf16.msra.mxu0 0
        %999 = vmatprep.subr.bf16.mxu0 0
        %1000 = vmatpush1.bf16.msra.mxu0 0
        %1001 = vmatprep.subr.bf16.mxu0 0
        %1002 = vmatpush1.bf16.msra.mxu0 0
        %1003 = vmatprep.subr.bf16.mxu0 0
        %1004 = vmatpush1.bf16.msra.mxu0 0
        %1005 = vmatprep.subr.bf16.mxu0 0
        %1006 = vmatpush1.bf16.msra.mxu0 0
        %1007 = vmatprep.subr.bf16.mxu0 0
        %1008 = vmatpush1.bf16.msra.mxu0 0
        %1009 = vmatprep.subr.bf16.mxu0 0
        %1010 = vmatpush1.bf16.msra.mxu0 0
        %1011 = vmatprep.subr.bf16.mxu0 0
        %1012 = vmatpush1.bf16.msra.mxu0 0
        %1013 = vmatprep.mubr.bf16.mxu0 0
        %1014 = vmatmul.mubr.bf16.gmra.mrb[0].mxu0 %v760
        %v1015 = vpop.f32.mrb[0].mxu0
        %v1016 = vadd.f32 %v806, %v1015
        %v1017 = vpop.f32.mrb[0].mxu0
        %v1018 = vpop.f32.mrb[0].mxu0
        %v1019 = vadd.f32 %v806, %v1018
        %v1020 = vpop.f32.mrb[0].mxu0
        %1021 = vdwg.mxu0
        %v1022 = vmul.f32 %v973, 0.17677669
        %v1023 = vmul.f32 %v977, 0.17677669
        %v1024 = vpack.c.bf16 %v1023, %v1022
        %1026 = vrot.lane.b32.xlu0 %v1024, 96
        %v1027 = vpop.permute.xlu0 %1026
        %1028 = vrot.lane.b32.xlu0 %v1024, 64
        %v1029 = vpop.permute.xlu0 %1028
        %1030 = vrot.lane.b32.xlu0 %v1024, 32
        %v1031 = vpop.permute.xlu0 %1030
        %v1034 = vpack.i.b16 %v1027, %v1024
        %v1036 = vshrl.u32 %v1024, 16
        %v1037 = vshrl.u32 %v1027, 16
        %v1038 = vpack.i.b16 %v1037, %v1036
        %v1042 = vpack.i.b16 %v1031, %v1029
        %v1044 = vshrl.u32 %v1029, 16
        %v1045 = vshrl.u32 %v1031, 16
        %v1046 = vpack.i.b16 %v1045, %v1044
        %v1049 = vpack.i.b16 0, 0
        %v1051 = vshrl.u32 0, 16
        %v1052 = vpack.i.b16 %v1051, %v1051
        %v1054 = vcombine.high %v1034, %v1049
        %v1056 = vunpack.c.l.s4 1983009808
        %v1057 = vunpack.c.0.s8 %v1056
        %v1058 = vlaneseq
        %v1059 = vshrl.u32 %v1058, 7
        %v1060 = vsub.s32 %v1057, %v1059
        %v1061 = vrot.slane %v1034, %v1060
        %v1063 = vunpack.c.l.s4 1983009808
        %v1064 = vunpack.c.0.s8 %v1063
        %v1065 = vlaneseq
        %v1066 = vshrl.u32 %v1065, 7
        %v1067 = vsub.s32 %v1064, %v1066
        %v1068 = vrot.slane %v1054, %v1067
        %v1069 = vcombine.high %v1042, %v1049
        %v1071 = vunpack.c.l.s4 1983009808
        %v1072 = vunpack.c.0.s8 %v1071
        %v1073 = vlaneseq
        %v1074 = vshrl.u32 %v1073, 7
        %v1075 = vsub.s32 %v1072, %v1074
        %v1076 = vrot.slane %v1042, %v1075
        %v1078 = vunpack.c.l.s4 1983009808
        %v1079 = vunpack.c.0.s8 %v1078
        %v1080 = vlaneseq
        %v1081 = vshrl.u32 %v1080, 7
        %v1082 = vsub.s32 %v1079, %v1081
        %v1083 = vrot.slane %v1069, %v1082
        %v1084 = vcombine.low %v1061, %v1076
        %v1085 = vcombine.high %v1061, %v1076
        %v1087 = vunpack.c.l.s4 1934713408
        %v1088 = vunpack.c.0.s8 %v1087
        %v1089 = vlaneseq
        %v1090 = vshrl.u32 %v1089, 7
        %v1091 = vsub.s32 %v1088, %v1090
        %v1092 = vrot.slane %v1084, %v1091
        %v1094 = vunpack.c.l.s4 1934713408
        %v1095 = vunpack.c.0.s8 %v1094
        %v1096 = vlaneseq
        %v1097 = vshrl.u32 %v1096, 7
        %v1098 = vsub.s32 %v1095, %v1097
        %v1099 = vrot.slane %v1085, %v1098
        %v1100 = vcombine.low %v1068, %v1083
        %v1101 = vcombine.high %v1068, %v1083
        %v1103 = vunpack.c.l.s4 1934713408
        %v1104 = vunpack.c.0.s8 %v1103
        %v1105 = vlaneseq
        %v1106 = vshrl.u32 %v1105, 7
        %v1107 = vsub.s32 %v1104, %v1106
        %v1108 = vrot.slane %v1100, %v1107
        %v1110 = vunpack.c.l.s4 1934713408
        %v1111 = vunpack.c.0.s8 %v1110
        %v1112 = vlaneseq
        %v1113 = vshrl.u32 %v1112, 7
        %v1114 = vsub.s32 %v1111, %v1113
        %v1115 = vrot.slane %v1101, %v1114
        %v1116 = vcombine.high %v1092, 0
        %v1117 = vcombine.high %v1099, 0
        %v1118 = vcombine.high %v1108, 0
        %v1119 = vcombine.high %v1115, 0
        %v1120 = vcombine.high %v1038, %v1052
        %v1122 = vunpack.c.l.s4 1983009808
        %v1123 = vunpack.c.0.s8 %v1122
        %v1124 = vlaneseq
        %v1125 = vshrl.u32 %v1124, 7
        %v1126 = vsub.s32 %v1123, %v1125
        %v1127 = vrot.slane %v1038, %v1126
        %v1129 = vunpack.c.l.s4 1983009808
        %v1130 = vunpack.c.0.s8 %v1129
        %v1131 = vlaneseq
        %v1132 = vshrl.u32 %v1131, 7
        %v1133 = vsub.s32 %v1130, %v1132
        %v1134 = vrot.slane %v1120, %v1133
        %v1135 = vcombine.high %v1046, %v1052
        %v1137 = vunpack.c.l.s4 1983009808
        %v1138 = vunpack.c.0.s8 %v1137
        %v1139 = vlaneseq
        %v1140 = vshrl.u32 %v1139, 7
        %v1141 = vsub.s32 %v1138, %v1140
        %v1142 = vrot.slane %v1046, %v1141
        %v1144 = vunpack.c.l.s4 1983009808
        %v1145 = vunpack.c.0.s8 %v1144
        %v1146 = vlaneseq
        %v1147 = vshrl.u32 %v1146, 7
        %v1148 = vsub.s32 %v1145, %v1147
        %v1149 = vrot.slane %v1135, %v1148
        %v1150 = vcombine.low %v1127, %v1142
        %v1151 = vcombine.high %v1127, %v1142
        %v1153 = vunpack.c.l.s4 1934713408
        %v1154 = vunpack.c.0.s8 %v1153
        %v1155 = vlaneseq
        %v1156 = vshrl.u32 %v1155, 7
        %v1157 = vsub.s32 %v1154, %v1156
        %v1158 = vrot.slane %v1150, %v1157
        %v1160 = vunpack.c.l.s4 1934713408
        %v1161 = vunpack.c.0.s8 %v1160
        %v1162 = vlaneseq
        %v1163 = vshrl.u32 %v1162, 7
        %v1164 = vsub.s32 %v1161, %v1163
        %v1165 = vrot.slane %v1151, %v1164
        %v1166 = vcombine.low %v1134, %v1149
        %v1167 = vcombine.high %v1134, %v1149
        %v1169 = vunpack.c.l.s4 1934713408
        %v1170 = vunpack.c.0.s8 %v1169
        %v1171 = vlaneseq
        %v1172 = vshrl.u32 %v1171, 7
        %v1173 = vsub.s32 %v1170, %v1172
        %v1174 = vrot.slane %v1166, %v1173
        %v1176 = vunpack.c.l.s4 1934713408
        %v1177 = vunpack.c.0.s8 %v1176
        %v1178 = vlaneseq
        %v1179 = vshrl.u32 %v1178, 7
        %v1180 = vsub.s32 %v1177, %v1179
        %v1181 = vrot.slane %v1167, %v1180
        %v1182 = vcombine.high %v1158, 0
        %v1183 = vcombine.high %v1165, 0
        %v1184 = vcombine.high %v1174, 0
        %v1185 = vcombine.high %v1181, 0
        %v1186 = vcombine.low %v1092, %v1099
        %v1188 = vunpack.c.l.s4 1983009808
        %v1189 = vunpack.c.0.s8 %v1188
        %v1190 = vlaneseq
        %v1191 = vshrl.u32 %v1190, 7
        %v1192 = vsub.s32 %v1189, %v1191
        %v1193 = vrot.slane %v1186, %v1192
        %v1194 = vcombine.low %v1116, %v1117
        %v1196 = vunpack.c.l.s4 1983009808
        %v1197 = vunpack.c.0.s8 %v1196
        %v1198 = vlaneseq
        %v1199 = vshrl.u32 %v1198, 7
        %v1200 = vsub.s32 %v1197, %v1199
        %v1201 = vrot.slane %v1194, %v1200
        %v1202 = vcombine.low %v1108, %v1115
        %v1204 = vunpack.c.l.s4 1983009808
        %v1205 = vunpack.c.0.s8 %v1204
        %v1206 = vlaneseq
        %v1207 = vshrl.u32 %v1206, 7
        %v1208 = vsub.s32 %v1205, %v1207
        %v1209 = vrot.slane %v1202, %v1208
        %v1210 = vcombine.low %v1118, %v1119
        %v1212 = vunpack.c.l.s4 1983009808
        %v1213 = vunpack.c.0.s8 %v1212
        %v1214 = vlaneseq
        %v1215 = vshrl.u32 %v1214, 7
        %v1216 = vsub.s32 %v1213, %v1215
        %v1217 = vrot.slane %v1210, %v1216
        %v1218 = vcombine.low %v1193, %v1201
        %v1220 = vunpack.c.l.s4 1934713408
        %v1221 = vunpack.c.0.s8 %v1220
        %v1222 = vlaneseq
        %v1223 = vshrl.u32 %v1222, 7
        %v1224 = vsub.s32 %v1221, %v1223
        %v1225 = vrot.slane %v1218, %v1224
        %v1226 = vcombine.low %v1209, %v1217
        %v1228 = vunpack.c.l.s4 1934713408
        %v1229 = vunpack.c.0.s8 %v1228
        %v1230 = vlaneseq
        %v1231 = vshrl.u32 %v1230, 7
        %v1232 = vsub.s32 %v1229, %v1231
        %v1233 = vrot.slane %v1226, %v1232
        %v1234 = vcombine.low %v1225, %v1233
        %v1235 = vcombine.high %v1225, %v1233
        %v1236 = vcombine.low %v1158, %v1165
        %v1238 = vunpack.c.l.s4 1983009808
        %v1239 = vunpack.c.0.s8 %v1238
        %v1240 = vlaneseq
        %v1241 = vshrl.u32 %v1240, 7
        %v1242 = vsub.s32 %v1239, %v1241
        %v1243 = vrot.slane %v1236, %v1242
        %v1244 = vcombine.low %v1182, %v1183
        %v1246 = vunpack.c.l.s4 1983009808
        %v1247 = vunpack.c.0.s8 %v1246
        %v1248 = vlaneseq
        %v1249 = vshrl.u32 %v1248, 7
        %v1250 = vsub.s32 %v1247, %v1249
        %v1251 = vrot.slane %v1244, %v1250
        %v1252 = vcombine.low %v1174, %v1181
        %v1254 = vunpack.c.l.s4 1983009808
        %v1255 = vunpack.c.0.s8 %v1254
        %v1256 = vlaneseq
        %v1257 = vshrl.u32 %v1256, 7
        %v1258 = vsub.s32 %v1255, %v1257
        %v1259 = vrot.slane %v1252, %v1258
        %v1260 = vcombine.low %v1184, %v1185
        %v1262 = vunpack.c.l.s4 1983009808
        %v1263 = vunpack.c.0.s8 %v1262
        %v1264 = vlaneseq
        %v1265 = vshrl.u32 %v1264, 7
        %v1266 = vsub.s32 %v1263, %v1265
        %v1267 = vrot.slane %v1260, %v1266
        %v1268 = vcombine.low %v1243, %v1251
        %v1270 = vunpack.c.l.s4 1934713408
        %v1271 = vunpack.c.0.s8 %v1270
        %v1272 = vlaneseq
        %v1273 = vshrl.u32 %v1272, 7
        %v1274 = vsub.s32 %v1271, %v1273
        %v1275 = vrot.slane %v1268, %v1274
        %v1276 = vcombine.low %v1259, %v1267
        %v1278 = vunpack.c.l.s4 1934713408
        %v1279 = vunpack.c.0.s8 %v1278
        %v1280 = vlaneseq
        %v1281 = vshrl.u32 %v1280, 7
        %v1282 = vsub.s32 %v1279, %v1281
        %v1283 = vrot.slane %v1276, %v1282
        %v1284 = vcombine.low %v1275, %v1283
        %v1285 = vcombine.high %v1275, %v1283
        %v1288 = vpack.i.b16 %v1284, %v1234
        %v1289 = vshrl.u32 %v1234, 16
        %v1290 = vshrl.u32 %v1284, 16
        %v1291 = vpack.i.b16 %v1290, %v1289
        %v1294 = vpack.i.b16 %v1285, %v1235
        %v1295 = vshrl.u32 %v1235, 16
        %v1296 = vshrl.u32 %v1285, 16
        %v1297 = vpack.i.b16 %v1296, %v1295
        %v1298 = vpack.c.bf16 %v979, %v975
        %1300 = vrot.lane.b32.xlu0 %v1298, 96
        %v1301 = vpop.permute.xlu0 %1300
        %1302 = vrot.lane.b32.xlu0 %v1298, 64
        %v1303 = vpop.permute.xlu0 %1302
        %1304 = vrot.lane.b32.xlu0 %v1298, 32
        %v1305 = vpop.permute.xlu0 %1304
        %v1308 = vpack.i.b16 %v1301, %v1298
        %v1310 = vshrl.u32 %v1298, 16
        %v1311 = vshrl.u32 %v1301, 16
        %v1312 = vpack.i.b16 %v1311, %v1310
        %v1316 = vpack.i.b16 %v1305, %v1303
        %v1318 = vshrl.u32 %v1303, 16
        %v1319 = vshrl.u32 %v1305, 16
        %v1320 = vpack.i.b16 %v1319, %v1318
        %v1322 = vcombine.high %v1308, %v1049
        %v1324 = vunpack.c.l.s4 1983009808
        %v1325 = vunpack.c.0.s8 %v1324
        %v1326 = vlaneseq
        %v1327 = vshrl.u32 %v1326, 7
        %v1328 = vsub.s32 %v1325, %v1327
        %v1329 = vrot.slane %v1308, %v1328
        %v1331 = vunpack.c.l.s4 1983009808
        %v1332 = vunpack.c.0.s8 %v1331
        %v1333 = vlaneseq
        %v1334 = vshrl.u32 %v1333, 7
        %v1335 = vsub.s32 %v1332, %v1334
        %v1336 = vrot.slane %v1322, %v1335
        %v1337 = vcombine.high %v1316, %v1049
        %v1339 = vunpack.c.l.s4 1983009808
        %v1340 = vunpack.c.0.s8 %v1339
        %v1341 = vlaneseq
        %v1342 = vshrl.u32 %v1341, 7
        %v1343 = vsub.s32 %v1340, %v1342
        %v1344 = vrot.slane %v1316, %v1343
        %v1346 = vunpack.c.l.s4 1983009808
        %v1347 = vunpack.c.0.s8 %v1346
        %v1348 = vlaneseq
        %v1349 = vshrl.u32 %v1348, 7
        %v1350 = vsub.s32 %v1347, %v1349
        %v1351 = vrot.slane %v1337, %v1350
        %v1352 = vcombine.low %v1329, %v1344
        %v1353 = vcombine.high %v1329, %v1344
        %v1355 = vunpack.c.l.s4 1934713408
        %v1356 = vunpack.c.0.s8 %v1355
        %v1357 = vlaneseq
        %v1358 = vshrl.u32 %v1357, 7
        %v1359 = vsub.s32 %v1356, %v1358
        %v1360 = vrot.slane %v1352, %v1359
        %v1362 = vunpack.c.l.s4 1934713408
        %v1363 = vunpack.c.0.s8 %v1362
        %v1364 = vlaneseq
        %v1365 = vshrl.u32 %v1364, 7
        %v1366 = vsub.s32 %v1363, %v1365
        %v1367 = vrot.slane %v1353, %v1366
        %v1368 = vcombine.low %v1336, %v1351
        %v1369 = vcombine.high %v1336, %v1351
        %v1371 = vunpack.c.l.s4 1934713408
        %v1372 = vunpack.c.0.s8 %v1371
        %v1373 = vlaneseq
        %v1374 = vshrl.u32 %v1373, 7
        %v1375 = vsub.s32 %v1372, %v1374
        %v1376 = vrot.slane %v1368, %v1375
        %v1378 = vunpack.c.l.s4 1934713408
        %v1379 = vunpack.c.0.s8 %v1378
        %v1380 = vlaneseq
        %v1381 = vshrl.u32 %v1380, 7
        %v1382 = vsub.s32 %v1379, %v1381
        %v1383 = vrot.slane %v1369, %v1382
        %v1384 = vcombine.high %v1360, 0
        %v1385 = vcombine.high %v1367, 0
        %v1386 = vcombine.high %v1376, 0
        %v1387 = vcombine.high %v1383, 0
        %v1388 = vcombine.high %v1312, %v1052
        %v1390 = vunpack.c.l.s4 1983009808
        %v1391 = vunpack.c.0.s8 %v1390
        %v1392 = vlaneseq
        %v1393 = vshrl.u32 %v1392, 7
        %v1394 = vsub.s32 %v1391, %v1393
        %v1395 = vrot.slane %v1312, %v1394
        %v1397 = vunpack.c.l.s4 1983009808
        %v1398 = vunpack.c.0.s8 %v1397
        %v1399 = vlaneseq
        %v1400 = vshrl.u32 %v1399, 7
        %v1401 = vsub.s32 %v1398, %v1400
        %v1402 = vrot.slane %v1388, %v1401
        %v1403 = vcombine.high %v1320, %v1052
        %v1405 = vunpack.c.l.s4 1983009808
        %v1406 = vunpack.c.0.s8 %v1405
        %v1407 = vlaneseq
        %v1408 = vshrl.u32 %v1407, 7
        %v1409 = vsub.s32 %v1406, %v1408
        %v1410 = vrot.slane %v1320, %v1409
        %v1412 = vunpack.c.l.s4 1983009808
        %v1413 = vunpack.c.0.s8 %v1412
        %v1414 = vlaneseq
        %v1415 = vshrl.u32 %v1414, 7
        %v1416 = vsub.s32 %v1413, %v1415
        %v1417 = vrot.slane %v1403, %v1416
        %v1418 = vcombine.low %v1395, %v1410
        %v1419 = vcombine.high %v1395, %v1410
        %v1421 = vunpack.c.l.s4 1934713408
        %v1422 = vunpack.c.0.s8 %v1421
        %v1423 = vlaneseq
        %v1424 = vshrl.u32 %v1423, 7
        %v1425 = vsub.s32 %v1422, %v1424
        %v1426 = vrot.slane %v1418, %v1425
        %v1428 = vunpack.c.l.s4 1934713408
        %v1429 = vunpack.c.0.s8 %v1428
        %v1430 = vlaneseq
        %v1431 = vshrl.u32 %v1430, 7
        %v1432 = vsub.s32 %v1429, %v1431
        %v1433 = vrot.slane %v1419, %v1432
        %v1434 = vcombine.low %v1402, %v1417
        %v1435 = vcombine.high %v1402, %v1417
        %v1437 = vunpack.c.l.s4 1934713408
        %v1438 = vunpack.c.0.s8 %v1437
        %v1439 = vlaneseq
        %v1440 = vshrl.u32 %v1439, 7
        %v1441 = vsub.s32 %v1438, %v1440
        %v1442 = vrot.slane %v1434, %v1441
        %v1444 = vunpack.c.l.s4 1934713408
        %v1445 = vunpack.c.0.s8 %v1444
        %v1446 = vlaneseq
        %v1447 = vshrl.u32 %v1446, 7
        %v1448 = vsub.s32 %v1445, %v1447
        %v1449 = vrot.slane %v1435, %v1448
        %v1450 = vcombine.high %v1426, 0
        %v1451 = vcombine.high %v1433, 0
        %v1452 = vcombine.high %v1442, 0
        %v1453 = vcombine.high %v1449, 0
        %v1454 = vcombine.low %v1360, %v1367
        %v1456 = vunpack.c.l.s4 1983009808
        %v1457 = vunpack.c.0.s8 %v1456
        %v1458 = vlaneseq
        %v1459 = vshrl.u32 %v1458, 7
        %v1460 = vsub.s32 %v1457, %v1459
        %v1461 = vrot.slane %v1454, %v1460
        %v1462 = vcombine.low %v1384, %v1385
        %v1464 = vunpack.c.l.s4 1983009808
        %v1465 = vunpack.c.0.s8 %v1464
        %v1466 = vlaneseq
        %v1467 = vshrl.u32 %v1466, 7
        %v1468 = vsub.s32 %v1465, %v1467
        %v1469 = vrot.slane %v1462, %v1468
        %v1470 = vcombine.low %v1376, %v1383
        %v1472 = vunpack.c.l.s4 1983009808
        %v1473 = vunpack.c.0.s8 %v1472
        %v1474 = vlaneseq
        %v1475 = vshrl.u32 %v1474, 7
        %v1476 = vsub.s32 %v1473, %v1475
        %v1477 = vrot.slane %v1470, %v1476
        %v1478 = vcombine.low %v1386, %v1387
        %v1480 = vunpack.c.l.s4 1983009808
        %v1481 = vunpack.c.0.s8 %v1480
        %v1482 = vlaneseq
        %v1483 = vshrl.u32 %v1482, 7
        %v1484 = vsub.s32 %v1481, %v1483
        %v1485 = vrot.slane %v1478, %v1484
        %v1486 = vcombine.low %v1461, %v1469
        %v1488 = vunpack.c.l.s4 1934713408
        %v1489 = vunpack.c.0.s8 %v1488
        %v1490 = vlaneseq
        %v1491 = vshrl.u32 %v1490, 7
        %v1492 = vsub.s32 %v1489, %v1491
        %v1493 = vrot.slane %v1486, %v1492
        %v1494 = vcombine.low %v1477, %v1485
        %v1496 = vunpack.c.l.s4 1934713408
        %v1497 = vunpack.c.0.s8 %v1496
        %v1498 = vlaneseq
        %v1499 = vshrl.u32 %v1498, 7
        %v1500 = vsub.s32 %v1497, %v1499
        %v1501 = vrot.slane %v1494, %v1500
        %v1502 = vcombine.low %v1493, %v1501
        %v1503 = vcombine.high %v1493, %v1501
        %v1504 = vcombine.low %v1426, %v1433
        %v1506 = vunpack.c.l.s4 1983009808
        %v1507 = vunpack.c.0.s8 %v1506
        %v1508 = vlaneseq
        %v1509 = vshrl.u32 %v1508, 7
        %v1510 = vsub.s32 %v1507, %v1509
        %v1511 = vrot.slane %v1504, %v1510
        %v1512 = vcombine.low %v1450, %v1451
        %v1514 = vunpack.c.l.s4 1983009808
        %v1515 = vunpack.c.0.s8 %v1514
        %v1516 = vlaneseq
        %v1517 = vshrl.u32 %v1516, 7
        %v1518 = vsub.s32 %v1515, %v1517
        %v1519 = vrot.slane %v1512, %v1518
        %v1520 = vcombine.low %v1442, %v1449
        %v1522 = vunpack.c.l.s4 1983009808
        %v1523 = vunpack.c.0.s8 %v1522
        %v1524 = vlaneseq
        %v1525 = vshrl.u32 %v1524, 7
        %v1526 = vsub.s32 %v1523, %v1525
        %v1527 = vrot.slane %v1520, %v1526
        %v1528 = vcombine.low %v1452, %v1453
        %v1530 = vunpack.c.l.s4 1983009808
        %v1531 = vunpack.c.0.s8 %v1530
        %v1532 = vlaneseq
        %v1533 = vshrl.u32 %v1532, 7
        %v1534 = vsub.s32 %v1531, %v1533
        %v1535 = vrot.slane %v1528, %v1534
        %v1536 = vcombine.low %v1511, %v1519
        %v1538 = vunpack.c.l.s4 1934713408
        %v1539 = vunpack.c.0.s8 %v1538
        %v1540 = vlaneseq
        %v1541 = vshrl.u32 %v1540, 7
        %v1542 = vsub.s32 %v1539, %v1541
        %v1543 = vrot.slane %v1536, %v1542
        %v1544 = vcombine.low %v1527, %v1535
        %v1546 = vunpack.c.l.s4 1934713408
        %v1547 = vunpack.c.0.s8 %v1546
        %v1548 = vlaneseq
        %v1549 = vshrl.u32 %v1548, 7
        %v1550 = vsub.s32 %v1547, %v1549
        %v1551 = vrot.slane %v1544, %v1550
        %v1552 = vcombine.low %v1543, %v1551
        %v1553 = vcombine.high %v1543, %v1551
        %v1556 = vpack.i.b16 %v1552, %v1502
        %v1557 = vshrl.u32 %v1502, 16
        %v1558 = vshrl.u32 %v1552, 16
        %v1559 = vpack.i.b16 %v1558, %v1557
        %v1562 = vpack.i.b16 %v1553, %v1503
        %v1563 = vshrl.u32 %v1503, 16
        %v1564 = vshrl.u32 %v1553, 16
        %v1565 = vpack.i.b16 %v1564, %v1563
        %v1566 = vpack.c.bf16 %v1019, %v1016
        %1568 = vrot.lane.b32.xlu0 %v1566, 96
        %v1569 = vpop.permute.xlu0 %1568
        %1570 = vrot.lane.b32.xlu0 %v1566, 64
        %v1571 = vpop.permute.xlu0 %1570
        %1572 = vrot.lane.b32.xlu0 %v1566, 32
        %v1573 = vpop.permute.xlu0 %1572
        %v1576 = vpack.i.b16 %v1569, %v1566
        %v1578 = vshrl.u32 %v1566, 16
        %v1579 = vshrl.u32 %v1569, 16
        %v1580 = vpack.i.b16 %v1579, %v1578
        %v1584 = vpack.i.b16 %v1573, %v1571
        %v1586 = vshrl.u32 %v1571, 16
        %v1587 = vshrl.u32 %v1573, 16
        %v1588 = vpack.i.b16 %v1587, %v1586
        %v1590 = vcombine.high %v1576, %v1049
        %v1592 = vunpack.c.l.s4 1983009808
        %v1593 = vunpack.c.0.s8 %v1592
        %v1594 = vlaneseq
        %v1595 = vshrl.u32 %v1594, 7
        %v1596 = vsub.s32 %v1593, %v1595
        %v1597 = vrot.slane %v1576, %v1596
        %v1599 = vunpack.c.l.s4 1983009808
        %v1600 = vunpack.c.0.s8 %v1599
        %v1601 = vlaneseq
        %v1602 = vshrl.u32 %v1601, 7
        %v1603 = vsub.s32 %v1600, %v1602
        %v1604 = vrot.slane %v1590, %v1603
        %v1605 = vcombine.high %v1584, %v1049
        %v1607 = vunpack.c.l.s4 1983009808
        %v1608 = vunpack.c.0.s8 %v1607
        %v1609 = vlaneseq
        %v1610 = vshrl.u32 %v1609, 7
        %v1611 = vsub.s32 %v1608, %v1610
        %v1612 = vrot.slane %v1584, %v1611
        %v1614 = vunpack.c.l.s4 1983009808
        %v1615 = vunpack.c.0.s8 %v1614
        %v1616 = vlaneseq
        %v1617 = vshrl.u32 %v1616, 7
        %v1618 = vsub.s32 %v1615, %v1617
        %v1619 = vrot.slane %v1605, %v1618
        %v1620 = vcombine.low %v1597, %v1612
        %v1621 = vcombine.high %v1597, %v1612
        %v1623 = vunpack.c.l.s4 1934713408
        %v1624 = vunpack.c.0.s8 %v1623
        %v1625 = vlaneseq
        %v1626 = vshrl.u32 %v1625, 7
        %v1627 = vsub.s32 %v1624, %v1626
        %v1628 = vrot.slane %v1620, %v1627
        %v1630 = vunpack.c.l.s4 1934713408
        %v1631 = vunpack.c.0.s8 %v1630
        %v1632 = vlaneseq
        %v1633 = vshrl.u32 %v1632, 7
        %v1634 = vsub.s32 %v1631, %v1633
        %v1635 = vrot.slane %v1621, %v1634
        %v1636 = vcombine.low %v1604, %v1619
        %v1637 = vcombine.high %v1604, %v1619
        %v1639 = vunpack.c.l.s4 1934713408
        %v1640 = vunpack.c.0.s8 %v1639
        %v1641 = vlaneseq
        %v1642 = vshrl.u32 %v1641, 7
        %v1643 = vsub.s32 %v1640, %v1642
        %v1644 = vrot.slane %v1636, %v1643
        %v1646 = vunpack.c.l.s4 1934713408
        %v1647 = vunpack.c.0.s8 %v1646
        %v1648 = vlaneseq
        %v1649 = vshrl.u32 %v1648, 7
        %v1650 = vsub.s32 %v1647, %v1649
        %v1651 = vrot.slane %v1637, %v1650
        %v1652 = vcombine.high %v1628, 0
        %v1653 = vcombine.high %v1635, 0
        %v1654 = vcombine.high %v1644, 0
        %v1655 = vcombine.high %v1651, 0
        %v1656 = vcombine.high %v1580, %v1052
        %v1658 = vunpack.c.l.s4 1983009808
        %v1659 = vunpack.c.0.s8 %v1658
        %v1660 = vlaneseq
        %v1661 = vshrl.u32 %v1660, 7
        %v1662 = vsub.s32 %v1659, %v1661
        %v1663 = vrot.slane %v1580, %v1662
        %v1665 = vunpack.c.l.s4 1983009808
        %v1666 = vunpack.c.0.s8 %v1665
        %v1667 = vlaneseq
        %v1668 = vshrl.u32 %v1667, 7
        %v1669 = vsub.s32 %v1666, %v1668
        %v1670 = vrot.slane %v1656, %v1669
        %v1671 = vcombine.high %v1588, %v1052
        %v1673 = vunpack.c.l.s4 1983009808
        %v1674 = vunpack.c.0.s8 %v1673
        %v1675 = vlaneseq
        %v1676 = vshrl.u32 %v1675, 7
        %v1677 = vsub.s32 %v1674, %v1676
        %v1678 = vrot.slane %v1588, %v1677
        %v1680 = vunpack.c.l.s4 1983009808
        %v1681 = vunpack.c.0.s8 %v1680
        %v1682 = vlaneseq
        %v1683 = vshrl.u32 %v1682, 7
        %v1684 = vsub.s32 %v1681, %v1683
        %v1685 = vrot.slane %v1671, %v1684
        %v1686 = vcombine.low %v1663, %v1678
        %v1687 = vcombine.high %v1663, %v1678
        %v1689 = vunpack.c.l.s4 1934713408
        %v1690 = vunpack.c.0.s8 %v1689
        %v1691 = vlaneseq
        %v1692 = vshrl.u32 %v1691, 7
        %v1693 = vsub.s32 %v1690, %v1692
        %v1694 = vrot.slane %v1686, %v1693
        %v1696 = vunpack.c.l.s4 1934713408
        %v1697 = vunpack.c.0.s8 %v1696
        %v1698 = vlaneseq
        %v1699 = vshrl.u32 %v1698, 7
        %v1700 = vsub.s32 %v1697, %v1699
        %v1701 = vrot.slane %v1687, %v1700
        %v1702 = vcombine.low %v1670, %v1685
        %v1703 = vcombine.high %v1670, %v1685
        %v1705 = vunpack.c.l.s4 1934713408
        %v1706 = vunpack.c.0.s8 %v1705
        %v1707 = vlaneseq
        %v1708 = vshrl.u32 %v1707, 7
        %v1709 = vsub.s32 %v1706, %v1708
        %v1710 = vrot.slane %v1702, %v1709
        %v1712 = vunpack.c.l.s4 1934713408
        %v1713 = vunpack.c.0.s8 %v1712
        %v1714 = vlaneseq
        %v1715 = vshrl.u32 %v1714, 7
        %v1716 = vsub.s32 %v1713, %v1715
        %v1717 = vrot.slane %v1703, %v1716
        %v1718 = vcombine.high %v1694, 0
        %v1719 = vcombine.high %v1701, 0
        %v1720 = vcombine.high %v1710, 0
        %v1721 = vcombine.high %v1717, 0
        %v1722 = vcombine.low %v1628, %v1635
        %v1724 = vunpack.c.l.s4 1983009808
        %v1725 = vunpack.c.0.s8 %v1724
        %v1726 = vlaneseq
        %v1727 = vshrl.u32 %v1726, 7
        %v1728 = vsub.s32 %v1725, %v1727
        %v1729 = vrot.slane %v1722, %v1728
        %v1730 = vcombine.low %v1652, %v1653
        %v1732 = vunpack.c.l.s4 1983009808
        %v1733 = vunpack.c.0.s8 %v1732
        %v1734 = vlaneseq
        %v1735 = vshrl.u32 %v1734, 7
        %v1736 = vsub.s32 %v1733, %v1735
        %v1737 = vrot.slane %v1730, %v1736
        %v1738 = vcombine.low %v1644, %v1651
        %v1740 = vunpack.c.l.s4 1983009808
        %v1741 = vunpack.c.0.s8 %v1740
        %v1742 = vlaneseq
        %v1743 = vshrl.u32 %v1742, 7
        %v1744 = vsub.s32 %v1741, %v1743
        %v1745 = vrot.slane %v1738, %v1744
        %v1746 = vcombine.low %v1654, %v1655
        %v1748 = vunpack.c.l.s4 1983009808
        %v1749 = vunpack.c.0.s8 %v1748
        %v1750 = vlaneseq
        %v1751 = vshrl.u32 %v1750, 7
        %v1752 = vsub.s32 %v1749, %v1751
        %v1753 = vrot.slane %v1746, %v1752
        %v1754 = vcombine.low %v1729, %v1737
        %v1756 = vunpack.c.l.s4 1934713408
        %v1757 = vunpack.c.0.s8 %v1756
        %v1758 = vlaneseq
        %v1759 = vshrl.u32 %v1758, 7
        %v1760 = vsub.s32 %v1757, %v1759
        %v1761 = vrot.slane %v1754, %v1760
        %v1762 = vcombine.low %v1745, %v1753
        %v1764 = vunpack.c.l.s4 1934713408
        %v1765 = vunpack.c.0.s8 %v1764
        %v1766 = vlaneseq
        %v1767 = vshrl.u32 %v1766, 7
        %v1768 = vsub.s32 %v1765, %v1767
        %v1769 = vrot.slane %v1762, %v1768
        %v1770 = vcombine.low %v1761, %v1769
        %v1771 = vcombine.high %v1761, %v1769
        %v1772 = vcombine.low %v1694, %v1701
        %v1774 = vunpack.c.l.s4 1983009808
        %v1775 = vunpack.c.0.s8 %v1774
        %v1776 = vlaneseq
        %v1777 = vshrl.u32 %v1776, 7
        %v1778 = vsub.s32 %v1775, %v1777
        %v1779 = vrot.slane %v1772, %v1778
        %v1780 = vcombine.low %v1718, %v1719
        %v1782 = vunpack.c.l.s4 1983009808
        %v1783 = vunpack.c.0.s8 %v1782
        %v1784 = vlaneseq
        %v1785 = vshrl.u32 %v1784, 7
        %v1786 = vsub.s32 %v1783, %v1785
        %v1787 = vrot.slane %v1780, %v1786
        %v1788 = vcombine.low %v1710, %v1717
        %v1790 = vunpack.c.l.s4 1983009808
        %v1791 = vunpack.c.0.s8 %v1790
        %v1792 = vlaneseq
        %v1793 = vshrl.u32 %v1792, 7
        %v1794 = vsub.s32 %v1791, %v1793
        %v1795 = vrot.slane %v1788, %v1794
        %v1796 = vcombine.low %v1720, %v1721
        %v1798 = vunpack.c.l.s4 1983009808
        %v1799 = vunpack.c.0.s8 %v1798
        %v1800 = vlaneseq
        %v1801 = vshrl.u32 %v1800, 7
        %v1802 = vsub.s32 %v1799, %v1801
        %v1803 = vrot.slane %v1796, %v1802
        %v1804 = vcombine.low %v1779, %v1787
        %v1806 = vunpack.c.l.s4 1934713408
        %v1807 = vunpack.c.0.s8 %v1806
        %v1808 = vlaneseq
        %v1809 = vshrl.u32 %v1808, 7
        %v1810 = vsub.s32 %v1807, %v1809
        %v1811 = vrot.slane %v1804, %v1810
        %v1812 = vcombine.low %v1795, %v1803
        %v1814 = vunpack.c.l.s4 1934713408
        %v1815 = vunpack.c.0.s8 %v1814
        %v1816 = vlaneseq
        %v1817 = vshrl.u32 %v1816, 7
        %v1818 = vsub.s32 %v1815, %v1817
        %v1819 = vrot.slane %v1812, %v1818
        %v1820 = vcombine.low %v1811, %v1819
        %v1821 = vcombine.high %v1811, %v1819
        %v1824 = vpack.i.b16 %v1820, %v1770
        %v1826 = vshrl.u32 %v1770, 16
        %v1827 = vshrl.u32 %v1820, 16
        %v1828 = vpack.i.b16 %v1827, %v1826
        %v1832 = vpack.i.b16 %v1821, %v1771
        %v1834 = vshrl.u32 %v1771, 16
        %v1835 = vshrl.u32 %v1821, 16
        %v1836 = vpack.i.b16 %v1835, %v1834
        %vm1838 = vcmask 261120
        %v1840 = vsel %vm1838, %v1288, 0
        %v1843 = vsel %vm1838, %v1556, 0
        %1845 = vmatprep.subr.bf16.mxu0 0
        %1846 = vmatpush1.bf16.xpose.msra.mxu0 %v1843
        %1847 = vmatprep.subr.bf16.mxu0 0
        %1848 = vmatpush1.bf16.xpose.msra.mxu0 0
        %1849 = vmatprep.subr.bf16.mxu0 0
        %1850 = vmatpush1.bf16.xpose.msra.mxu0 0
        %1851 = vmatprep.subr.bf16.mxu0 0
        %1852 = vmatpush1.bf16.xpose.msra.mxu0 0
        %1853 = vmatprep.subr.bf16.mxu0 0
        %1854 = vmatpush1.bf16.xpose.msra.mxu0 0
        %1855 = vmatprep.subr.bf16.mxu0 0
        %1856 = vmatpush1.bf16.xpose.msra.mxu0 0
        %1857 = vmatprep.subr.bf16.mxu0 0
        %1858 = vmatpush1.bf16.xpose.msra.mxu0 0
        %1859 = vmatprep.subr.bf16.mxu0 0
        %1860 = vmatpush1.bf16.xpose.msra.mxu0 0
        %1861 = vmatprep.subr.bf16.mxu0 0
        %1862 = vmatpush1.bf16.xpose.msra.mxu0 0
        %1863 = vmatprep.subr.bf16.mxu0 0
        %1864 = vmatpush1.bf16.xpose.msra.mxu0 0
        %1865 = vmatprep.subr.bf16.mxu0 0
        %1866 = vmatpush1.bf16.xpose.msra.mxu0 0
        %1867 = vmatprep.subr.bf16.mxu0 0
        %1868 = vmatpush1.bf16.xpose.msra.mxu0 0
        %1869 = vmatprep.subr.bf16.mxu0 0
        %1870 = vmatpush1.bf16.xpose.msra.mxu0 0
        %1871 = vmatprep.subr.bf16.mxu0 0
        %1872 = vmatpush1.bf16.xpose.msra.mxu0 0
        %1873 = vmatprep.subr.bf16.mxu0 0
        %1874 = vmatpush1.bf16.xpose.msra.mxu0 0
        %1875 = vmatprep.subr.bf16.mxu0 0
        %1876 = vmatpush1.bf16.xpose.msra.mxu0 0
        %1877 = vmatprep.mubr.bf16.mxu0 0
        %1878 = vmatmul.mubr.bf16.gmra.mrb[0].mxu0 %v1840
        %v1879 = vpop.f32.mrb[0].mxu0
        %v1880 = vadd.f32 0.0, %v1879
        %v1881 = vpop.f32.mrb[0].mxu0
        %v1882 = vpop.f32.mrb[0].mxu0
        %v1883 = vadd.f32 0.0, %v1882
        %v1884 = vpop.f32.mrb[0].mxu0
        %1885 = vdwg.mxu0
        %v1887 = vsel %vm1838, %v1291, 0
        %v1890 = vsel %vm1838, %v1559, 0
        %1892 = vmatprep.subr.bf16.mxu0 0
        %1893 = vmatpush1.bf16.xpose.msra.mxu0 %v1890
        %1894 = vmatprep.subr.bf16.mxu0 0
        %1895 = vmatpush1.bf16.xpose.msra.mxu0 0
        %1896 = vmatprep.subr.bf16.mxu0 0
        %1897 = vmatpush1.bf16.xpose.msra.mxu0 0
        %1898 = vmatprep.subr.bf16.mxu0 0
        %1899 = vmatpush1.bf16.xpose.msra.mxu0 0
        %1900 = vmatprep.subr.bf16.mxu0 0
        %1901 = vmatpush1.bf16.xpose.msra.mxu0 0
        %1902 = vmatprep.subr.bf16.mxu0 0
        %1903 = vmatpush1.bf16.xpose.msra.mxu0 0
        %1904 = vmatprep.subr.bf16.mxu0 0
        %1905 = vmatpush1.bf16.xpose.msra.mxu0 0
        %1906 = vmatprep.subr.bf16.mxu0 0
        %1907 = vmatpush1.bf16.xpose.msra.mxu0 0
        %1908 = vmatprep.subr.bf16.mxu0 0
        %1909 = vmatpush1.bf16.xpose.msra.mxu0 0
        %1910 = vmatprep.subr.bf16.mxu0 0
        %1911 = vmatpush1.bf16.xpose.msra.mxu0 0
        %1912 = vmatprep.subr.bf16.mxu0 0
        %1913 = vmatpush1.bf16.xpose.msra.mxu0 0
        %1914 = vmatprep.subr.bf16.mxu0 0
        %1915 = vmatpush1.bf16.xpose.msra.mxu0 0
        %1916 = vmatprep.subr.bf16.mxu0 0
        %1917 = vmatpush1.bf16.xpose.msra.mxu0 0
        %1918 = vmatprep.subr.bf16.mxu0 0
        %1919 = vmatpush1.bf16.xpose.msra.mxu0 0
        %1920 = vmatprep.subr.bf16.mxu0 0
        %1921 = vmatpush1.bf16.xpose.msra.mxu0 0
        %1922 = vmatprep.subr.bf16.mxu0 0
        %1923 = vmatpush1.bf16.xpose.msra.mxu0 0
        %1924 = vmatprep.mubr.bf16.mxu0 0
        %1925 = vmatmul.mubr.bf16.gmra.mrb[0].mxu0 %v1887
        %v1926 = vpop.f32.mrb[0].mxu0
        %v1927 = vadd.f32 0.0, %v1926
        %v1928 = vpop.f32.mrb[0].mxu0
        %v1929 = vpop.f32.mrb[0].mxu0
        %v1930 = vadd.f32 0.0, %v1929
        %v1931 = vpop.f32.mrb[0].mxu0
        %1932 = vdwg.mxu0
        %v1934 = vsel %vm1838, %v1294, 0
        %v1937 = vsel %vm1838, %v1562, 0
        %1939 = vmatprep.subr.bf16.mxu0 0
        %1940 = vmatpush1.bf16.xpose.msra.mxu0 %v1937
        %1941 = vmatprep.subr.bf16.mxu0 0
        %1942 = vmatpush1.bf16.xpose.msra.mxu0 0
        %1943 = vmatprep.subr.bf16.mxu0 0
        %1944 = vmatpush1.bf16.xpose.msra.mxu0 0
        %1945 = vmatprep.subr.bf16.mxu0 0
        %1946 = vmatpush1.bf16.xpose.msra.mxu0 0
        %1947 = vmatprep.subr.bf16.mxu0 0
        %1948 = vmatpush1.bf16.xpose.msra.mxu0 0
        %1949 = vmatprep.subr.bf16.mxu0 0
        %1950 = vmatpush1.bf16.xpose.msra.mxu0 0
        %1951 = vmatprep.subr.bf16.mxu0 0
        %1952 = vmatpush1.bf16.xpose.msra.mxu0 0
        %1953 = vmatprep.subr.bf16.mxu0 0
        %1954 = vmatpush1.bf16.xpose.msra.mxu0 0
        %1955 = vmatprep.subr.bf16.mxu0 0
        %1956 = vmatpush1.bf16.xpose.msra.mxu0 0
        %1957 = vmatprep.subr.bf16.mxu0 0
        %1958 = vmatpush1.bf16.xpose.msra.mxu0 0
        %1959 = vmatprep.subr.bf16.mxu0 0
        %1960 = vmatpush1.bf16.xpose.msra.mxu0 0
        %1961 = vmatprep.subr.bf16.mxu0 0
        %1962 = vmatpush1.bf16.xpose.msra.mxu0 0
        %1963 = vmatprep.subr.bf16.mxu0 0
        %1964 = vmatpush1.bf16.xpose.msra.mxu0 0
        %1965 = vmatprep.subr.bf16.mxu0 0
        %1966 = vmatpush1.bf16.xpose.msra.mxu0 0
        %1967 = vmatprep.subr.bf16.mxu0 0
        %1968 = vmatpush1.bf16.xpose.msra.mxu0 0
        %1969 = vmatprep.subr.bf16.mxu0 0
        %1970 = vmatpush1.bf16.xpose.msra.mxu0 0
        %1971 = vmatprep.mubr.bf16.mxu0 0
        %1972 = vmatmul.mubr.bf16.gmra.mrb[0].mxu0 %v1934
        %v1973 = vpop.f32.mrb[0].mxu0
        %v1974 = vadd.f32 0.0, %v1973
        %v1975 = vpop.f32.mrb[0].mxu0
        %v1976 = vpop.f32.mrb[0].mxu0
        %v1977 = vadd.f32 0.0, %v1976
        %v1978 = vpop.f32.mrb[0].mxu0
        %1979 = vdwg.mxu0
        %v1981 = vsel %vm1838, %v1297, 0
        %v1984 = vsel %vm1838, %v1565, 0
        %1986 = vmatprep.subr.bf16.mxu0 0
        %1987 = vmatpush1.bf16.xpose.msra.mxu0 %v1984
        %1988 = vmatprep.subr.bf16.mxu0 0
        %1989 = vmatpush1.bf16.xpose.msra.mxu0 0
        %1990 = vmatprep.subr.bf16.mxu0 0
        %1991 = vmatpush1.bf16.xpose.msra.mxu0 0
        %1992 = vmatprep.subr.bf16.mxu0 0
        %1993 = vmatpush1.bf16.xpose.msra.mxu0 0
        %1994 = vmatprep.subr.bf16.mxu0 0
        %1995 = vmatpush1.bf16.xpose.msra.mxu0 0
        %1996 = vmatprep.subr.bf16.mxu0 0
        %1997 = vmatpush1.bf16.xpose.msra.mxu0 0
        %1998 = vmatprep.subr.bf16.mxu0 0
        %1999 = vmatpush1.bf16.xpose.msra.mxu0 0
        %2000 = vmatprep.subr.bf16.mxu0 0
        %2001 = vmatpush1.bf16.xpose.msra.mxu0 0
        %2002 = vmatprep.subr.bf16.mxu0 0
        %2003 = vmatpush1.bf16.xpose.msra.mxu0 0
        %2004 = vmatprep.subr.bf16.mxu0 0
        %2005 = vmatpush1.bf16.xpose.msra.mxu0 0
        %2006 = vmatprep.subr.bf16.mxu0 0
        %2007 = vmatpush1.bf16.xpose.msra.mxu0 0
        %2008 = vmatprep.subr.bf16.mxu0 0
        %2009 = vmatpush1.bf16.xpose.msra.mxu0 0
        %2010 = vmatprep.subr.bf16.mxu0 0
        %2011 = vmatpush1.bf16.xpose.msra.mxu0 0
        %2012 = vmatprep.subr.bf16.mxu0 0
        %2013 = vmatpush1.bf16.xpose.msra.mxu0 0
        %2014 = vmatprep.subr.bf16.mxu0 0
        %2015 = vmatpush1.bf16.xpose.msra.mxu0 0
        %2016 = vmatprep.subr.bf16.mxu0 0
        %2017 = vmatpush1.bf16.xpose.msra.mxu0 0
        %2018 = vmatprep.mubr.bf16.mxu0 0
        %2019 = vmatmul.mubr.bf16.gmra.mrb[0].mxu0 %v1981
        %v2020 = vpop.f32.mrb[0].mxu0
        %v2021 = vadd.f32 0.0, %v2020
        %v2022 = vpop.f32.mrb[0].mxu0
        %v2023 = vpop.f32.mrb[0].mxu0
        %v2024 = vadd.f32 0.0, %v2023
        %v2025 = vpop.f32.mrb[0].mxu0
        %2026 = vdwg.mxu0
        %v2027 = vlaneseq
        %v2028 = vshrl.u32 %v2027, 7
        %v2029 = vadd.s32 %v2028, 8
        %v2030 = vlaneseq
        %v2031 = vand.u32 %v2030, 127
        %vm2032 = vcmp.le.s32.totalorder %v2031, %v2028
        %vm2033 = vcmp.le.s32.totalorder %v2031, %v2029
        %v2034 = vsel %vm2032, 1, 0
        %v2035 = vsel %vm2033, 1, 0
        %vm2036 = vcmp.eq.s32.totalorder %v2034, 1
        %vm2037 = vcmp.eq.s32.totalorder %v2035, 1
        %v2038 = vsel %vm2036, %v1880, -1e+30
        %v2039 = vsel %vm2037, %v1883, -1e+30
        %v2040 = vsel %vm2036, %v1927, -1e+30
        %v2041 = vsel %vm2037, %v1930, -1e+30
        %v2042 = vsel %vm2036, %v1974, -1e+30
        %v2043 = vsel %vm2037, %v1977, -1e+30
        %v2044 = vsel %vm2036, %v2021, -1e+30
        %v2045 = vsel %vm2037, %v2024, -1e+30
        %vm2046 = vcmask 130048
        %v2047 = vsel %vm2046, %v2038, -inf
        %2048 = vmax.xlane.f32.xlu0 %v2047
        %v2049 = vpop.xlane.xlu0 %2048
        %v2050 = vsel %vm2046, %v2039, -inf
        %2051 = vmax.xlane.f32.xlu0 %v2050
        %v2052 = vpop.xlane.xlu0 %2051
        %v2053 = vsel %vm2046, %v2040, -inf
        %2054 = vmax.xlane.f32.xlu0 %v2053
        %v2055 = vpop.xlane.xlu0 %2054
        %v2056 = vsel %vm2046, %v2041, -inf
        %2057 = vmax.xlane.f32.xlu0 %v2056
        %v2058 = vpop.xlane.xlu0 %2057
        %v2059 = vsel %vm2046, %v2042, -inf
        %2060 = vmax.xlane.f32.xlu0 %v2059
        %v2061 = vpop.xlane.xlu0 %2060
        %v2062 = vsel %vm2046, %v2043, -inf
        %2063 = vmax.xlane.f32.xlu0 %v2062
        %v2064 = vpop.xlane.xlu0 %2063
        %v2065 = vsel %vm2046, %v2044, -inf
        %2066 = vmax.xlane.f32.xlu0 %v2065
        %v2067 = vpop.xlane.xlu0 %2066
        %v2068 = vsel %vm2046, %v2045, -inf
        %2069 = vmax.xlane.f32.xlu0 %v2068
        %v2070 = vpop.xlane.xlu0 %2069
        %v2071 = vsub.f32 %v2038, %v2049
        %v2072 = vsub.f32 %v2039, %v2052
        %v2073 = vsub.f32 %v2040, %v2055
        %v2074 = vsub.f32 %v2041, %v2058
        %v2075 = vsub.f32 %v2042, %v2061
        %v2076 = vsub.f32 %v2043, %v2064
        %v2077 = vsub.f32 %v2044, %v2067
        %v2078 = vsub.f32 %v2045, %v2070
        %v2079 = vmul.f32 %v2071, 1.442695
        %v2080 = vpow.pop %v2079
        %v2081 = vmul.f32 %v2072, 1.442695
        %v2082 = vpow.pop %v2081
        %v2083 = vmul.f32 %v2073, 1.442695
        %v2084 = vpow.pop %v2083
        %v2085 = vmul.f32 %v2074, 1.442695
        %v2086 = vpow.pop %v2085
        %v2087 = vmul.f32 %v2075, 1.442695
        %v2088 = vpow.pop %v2087
        %v2089 = vmul.f32 %v2076, 1.442695
        %v2090 = vpow.pop %v2089
        %v2091 = vmul.f32 %v2077, 1.442695
        %v2092 = vpow.pop %v2091
        %v2093 = vmul.f32 %v2078, 1.442695
        %v2094 = vpow.pop %v2093
        %v2095 = vsel %vm2046, %v2080, 0.0
        %2096 = vadd.xlane.f32.xlu0 %v2095
        %v2097 = vpop.xlane.xlu0 %2096
        %v2098 = vsel %vm2046, %v2082, 0.0
        %2099 = vadd.xlane.f32.xlu0 %v2098
        %v2100 = vpop.xlane.xlu0 %2099
        %v2101 = vsel %vm2046, %v2084, 0.0
        %2102 = vadd.xlane.f32.xlu0 %v2101
        %v2103 = vpop.xlane.xlu0 %2102
        %v2104 = vsel %vm2046, %v2086, 0.0
        %2105 = vadd.xlane.f32.xlu0 %v2104
        %v2106 = vpop.xlane.xlu0 %2105
        %v2107 = vsel %vm2046, %v2088, 0.0
        %2108 = vadd.xlane.f32.xlu0 %v2107
        %v2109 = vpop.xlane.xlu0 %2108
        %v2110 = vsel %vm2046, %v2090, 0.0
        %2111 = vadd.xlane.f32.xlu0 %v2110
        %v2112 = vpop.xlane.xlu0 %2111
        %v2113 = vsel %vm2046, %v2092, 0.0
        %2114 = vadd.xlane.f32.xlu0 %v2113
        %v2115 = vpop.xlane.xlu0 %2114
        %v2116 = vsel %vm2046, %v2094, 0.0
        %2117 = vadd.xlane.f32.xlu0 %v2116
        %v2118 = vpop.xlane.xlu0 %2117
        %v2119 = vpack.c.bf16 %v2082, %v2080
        %v2120 = vpack.c.bf16 %v2086, %v2084
        %v2121 = vpack.c.bf16 %v2090, %v2088
        %v2122 = vpack.c.bf16 %v2094, %v2092
        %v2124 = vsel %vm2046, %v2119, 0
        %2126 = vmatprep.subr.bf16.mxu0 0
        %2127 = vmatpush1.bf16.msra.mxu0 %v1824
        %2128 = vmatprep.subr.bf16.mxu0 0
        %2129 = vmatpush1.bf16.msra.mxu0 0
        %2130 = vmatprep.subr.bf16.mxu0 0
        %2131 = vmatpush1.bf16.msra.mxu0 0
        %2132 = vmatprep.subr.bf16.mxu0 0
        %2133 = vmatpush1.bf16.msra.mxu0 0
        %2134 = vmatprep.subr.bf16.mxu0 0
        %2135 = vmatpush1.bf16.msra.mxu0 0
        %2136 = vmatprep.subr.bf16.mxu0 0
        %2137 = vmatpush1.bf16.msra.mxu0 0
        %2138 = vmatprep.subr.bf16.mxu0 0
        %2139 = vmatpush1.bf16.msra.mxu0 0
        %2140 = vmatprep.subr.bf16.mxu0 0
        %2141 = vmatpush1.bf16.msra.mxu0 0
        %2142 = vmatprep.subr.bf16.mxu0 0
        %2143 = vmatpush1.bf16.msra.mxu0 0
        %2144 = vmatprep.subr.bf16.mxu0 0
        %2145 = vmatpush1.bf16.msra.mxu0 0
        %2146 = vmatprep.subr.bf16.mxu0 0
        %2147 = vmatpush1.bf16.msra.mxu0 0
        %2148 = vmatprep.subr.bf16.mxu0 0
        %2149 = vmatpush1.bf16.msra.mxu0 0
        %2150 = vmatprep.subr.bf16.mxu0 0
        %2151 = vmatpush1.bf16.msra.mxu0 0
        %2152 = vmatprep.subr.bf16.mxu0 0
        %2153 = vmatpush1.bf16.msra.mxu0 0
        %2154 = vmatprep.subr.bf16.mxu0 0
        %2155 = vmatpush1.bf16.msra.mxu0 0
        %2156 = vmatprep.subr.bf16.mxu0 0
        %2157 = vmatpush1.bf16.msra.mxu0 0
        %2158 = vmatprep.mubr.bf16.mxu0 0
        %2159 = vmatmul.mubr.bf16.gmra.mrb[0].mxu0 %v2124
        %v2160 = vpop.f32.mrb[0].mxu0
        %v2161 = vadd.f32 0.0, %v2160
        %v2162 = vpop.f32.mrb[0].mxu0
        %v2163 = vpop.f32.mrb[0].mxu0
        %v2164 = vadd.f32 0.0, %v2163
        %v2165 = vpop.f32.mrb[0].mxu0
        %2166 = vdwg.mxu0
        %v2168 = vsel %vm2046, %v2120, 0
        %2170 = vmatprep.subr.bf16.mxu0 0
        %2171 = vmatpush1.bf16.msra.mxu0 %v1828
        %2172 = vmatprep.subr.bf16.mxu0 0
        %2173 = vmatpush1.bf16.msra.mxu0 0
        %2174 = vmatprep.subr.bf16.mxu0 0
        %2175 = vmatpush1.bf16.msra.mxu0 0
        %2176 = vmatprep.subr.bf16.mxu0 0
        %2177 = vmatpush1.bf16.msra.mxu0 0
        %2178 = vmatprep.subr.bf16.mxu0 0
        %2179 = vmatpush1.bf16.msra.mxu0 0
        %2180 = vmatprep.subr.bf16.mxu0 0
        %2181 = vmatpush1.bf16.msra.mxu0 0
        %2182 = vmatprep.subr.bf16.mxu0 0
        %2183 = vmatpush1.bf16.msra.mxu0 0
        %2184 = vmatprep.subr.bf16.mxu0 0
        %2185 = vmatpush1.bf16.msra.mxu0 0
        %2186 = vmatprep.subr.bf16.mxu0 0
        %2187 = vmatpush1.bf16.msra.mxu0 0
        %2188 = vmatprep.subr.bf16.mxu0 0
        %2189 = vmatpush1.bf16.msra.mxu0 0
        %2190 = vmatprep.subr.bf16.mxu0 0
        %2191 = vmatpush1.bf16.msra.mxu0 0
        %2192 = vmatprep.subr.bf16.mxu0 0
        %2193 = vmatpush1.bf16.msra.mxu0 0
        %2194 = vmatprep.subr.bf16.mxu0 0
        %2195 = vmatpush1.bf16.msra.mxu0 0
        %2196 = vmatprep.subr.bf16.mxu0 0
        %2197 = vmatpush1.bf16.msra.mxu0 0
        %2198 = vmatprep.subr.bf16.mxu0 0
        %2199 = vmatpush1.bf16.msra.mxu0 0
        %2200 = vmatprep.subr.bf16.mxu0 0
        %2201 = vmatpush1.bf16.msra.mxu0 0
        %2202 = vmatprep.mubr.bf16.mxu0 0
        %2203 = vmatmul.mubr.bf16.gmra.mrb[0].mxu0 %v2168
        %v2204 = vpop.f32.mrb[0].mxu0
        %v2205 = vadd.f32 0.0, %v2204
        %v2206 = vpop.f32.mrb[0].mxu0
        %v2207 = vpop.f32.mrb[0].mxu0
        %v2208 = vadd.f32 0.0, %v2207
        %v2209 = vpop.f32.mrb[0].mxu0
        %2210 = vdwg.mxu0
        %v2212 = vsel %vm2046, %v2121, 0
        %2214 = vmatprep.subr.bf16.mxu0 0
        %2215 = vmatpush1.bf16.msra.mxu0 %v1832
        %2216 = vmatprep.subr.bf16.mxu0 0
        %2217 = vmatpush1.bf16.msra.mxu0 0
        %2218 = vmatprep.subr.bf16.mxu0 0
        %2219 = vmatpush1.bf16.msra.mxu0 0
        %2220 = vmatprep.subr.bf16.mxu0 0
        %2221 = vmatpush1.bf16.msra.mxu0 0
        %2222 = vmatprep.subr.bf16.mxu0 0
        %2223 = vmatpush1.bf16.msra.mxu0 0
        %2224 = vmatprep.subr.bf16.mxu0 0
        %2225 = vmatpush1.bf16.msra.mxu0 0
        %2226 = vmatprep.subr.bf16.mxu0 0
        %2227 = vmatpush1.bf16.msra.mxu0 0
        %2228 = vmatprep.subr.bf16.mxu0 0
        %2229 = vmatpush1.bf16.msra.mxu0 0
        %2230 = vmatprep.subr.bf16.mxu0 0
        %2231 = vmatpush1.bf16.msra.mxu0 0
        %2232 = vmatprep.subr.bf16.mxu0 0
        %2233 = vmatpush1.bf16.msra.mxu0 0
        %2234 = vmatprep.subr.bf16.mxu0 0
        %2235 = vmatpush1.bf16.msra.mxu0 0
        %2236 = vmatprep.subr.bf16.mxu0 0
        %2237 = vmatpush1.bf16.msra.mxu0 0
        %2238 = vmatprep.subr.bf16.mxu0 0
        %2239 = vmatpush1.bf16.msra.mxu0 0
        %2240 = vmatprep.subr.bf16.mxu0 0
        %2241 = vmatpush1.bf16.msra.mxu0 0
        %2242 = vmatprep.subr.bf16.mxu0 0
        %2243 = vmatpush1.bf16.msra.mxu0 0
        %2244 = vmatprep.subr.bf16.mxu0 0
        %2245 = vmatpush1.bf16.msra.mxu0 0
        %2246 = vmatprep.mubr.bf16.mxu0 0
        %2247 = vmatmul.mubr.bf16.gmra.mrb[0].mxu0 %v2212
        %v2248 = vpop.f32.mrb[0].mxu0
        %v2249 = vadd.f32 0.0, %v2248
        %v2250 = vpop.f32.mrb[0].mxu0
        %v2251 = vpop.f32.mrb[0].mxu0
        %v2252 = vadd.f32 0.0, %v2251
        %v2253 = vpop.f32.mrb[0].mxu0
        %2254 = vdwg.mxu0
        %v2256 = vsel %vm2046, %v2122, 0
        %2258 = vmatprep.subr.bf16.mxu0 0
        %2259 = vmatpush1.bf16.msra.mxu0 %v1836
        %2260 = vmatprep.subr.bf16.mxu0 0
        %2261 = vmatpush1.bf16.msra.mxu0 0
        %2262 = vmatprep.subr.bf16.mxu0 0
        %2263 = vmatpush1.bf16.msra.mxu0 0
        %2264 = vmatprep.subr.bf16.mxu0 0
        %2265 = vmatpush1.bf16.msra.mxu0 0
        %2266 = vmatprep.subr.bf16.mxu0 0
        %2267 = vmatpush1.bf16.msra.mxu0 0
        %2268 = vmatprep.subr.bf16.mxu0 0
        %2269 = vmatpush1.bf16.msra.mxu0 0
        %2270 = vmatprep.subr.bf16.mxu0 0
        %2271 = vmatpush1.bf16.msra.mxu0 0
        %2272 = vmatprep.subr.bf16.mxu0 0
        %2273 = vmatpush1.bf16.msra.mxu0 0
        %2274 = vmatprep.subr.bf16.mxu0 0
        %2275 = vmatpush1.bf16.msra.mxu0 0
        %2276 = vmatprep.subr.bf16.mxu0 0
        %2277 = vmatpush1.bf16.msra.mxu0 0
        %2278 = vmatprep.subr.bf16.mxu0 0
        %2279 = vmatpush1.bf16.msra.mxu0 0
        %2280 = vmatprep.subr.bf16.mxu0 0
        %2281 = vmatpush1.bf16.msra.mxu0 0
        %2282 = vmatprep.subr.bf16.mxu0 0
        %2283 = vmatpush1.bf16.msra.mxu0 0
        %2284 = vmatprep.subr.bf16.mxu0 0
        %2285 = vmatpush1.bf16.msra.mxu0 0
        %2286 = vmatprep.subr.bf16.mxu0 0
        %2287 = vmatpush1.bf16.msra.mxu0 0
        %2288 = vmatprep.subr.bf16.mxu0 0
        %2289 = vmatpush1.bf16.msra.mxu0 0
        %2290 = vmatprep.mubr.bf16.mxu0 0
        %2291 = vmatmul.mubr.bf16.gmra.mrb[0].mxu0 %v2256
        %v2292 = vpop.f32.mrb[0].mxu0
        %v2293 = vadd.f32 0.0, %v2292
        %v2294 = vpop.f32.mrb[0].mxu0
        %v2295 = vpop.f32.mrb[0].mxu0
        %v2296 = vadd.f32 0.0, %v2295
        %v2297 = vpop.f32.mrb[0].mxu0
        %2298 = vdwg.mxu0
        %v2299 = vrcp.pop %v2097
        %v2300 = vrcp.pop %v2100
        %v2301 = vrcp.pop %v2103
        %v2302 = vrcp.pop %v2106
        %v2303 = vrcp.pop %v2109
        %v2304 = vrcp.pop %v2112
        %v2305 = vrcp.pop %v2115
        %v2306 = vrcp.pop %v2118
        %v2307 = vmul.f32 %v2161, %v2299
        %v2308 = vmul.f32 %v2164, %v2300
        %v2309 = vmul.f32 %v2205, %v2301
        %v2310 = vmul.f32 %v2208, %v2302
        %v2311 = vmul.f32 %v2249, %v2303
        %v2312 = vmul.f32 %v2252, %v2304
        %v2313 = vmul.f32 %v2293, %v2305
        %v2314 = vmul.f32 %v2296, %v2306
        %v2315 = vcombine.low %v2307, %v2311
        %v2316 = vcombine.high %v2307, %v2311
        %v2318 = vunpack.c.l.s4 1983009808
        %v2319 = vunpack.c.0.s8 %v2318
        %v2320 = vlaneseq
        %v2321 = vshrl.u32 %v2320, 7
        %v2322 = vsub.s32 %v2319, %v2321
        %v2323 = vrot.slane %v2315, %v2322
        %v2325 = vunpack.c.l.s4 1983009808
        %v2326 = vunpack.c.0.s8 %v2325
        %v2327 = vlaneseq
        %v2328 = vshrl.u32 %v2327, 7
        %v2329 = vsub.s32 %v2326, %v2328
        %v2330 = vrot.slane %v2316, %v2329
        %v2331 = vcombine.low %v2309, %v2313
        %v2332 = vcombine.high %v2309, %v2313
        %v2334 = vunpack.c.l.s4 1983009808
        %v2335 = vunpack.c.0.s8 %v2334
        %v2336 = vlaneseq
        %v2337 = vshrl.u32 %v2336, 7
        %v2338 = vsub.s32 %v2335, %v2337
        %v2339 = vrot.slane %v2331, %v2338
        %v2341 = vunpack.c.l.s4 1983009808
        %v2342 = vunpack.c.0.s8 %v2341
        %v2343 = vlaneseq
        %v2344 = vshrl.u32 %v2343, 7
        %v2345 = vsub.s32 %v2342, %v2344
        %v2346 = vrot.slane %v2332, %v2345
        %v2347 = vcombine.low %v2323, %v2339
        %v2348 = vcombine.high %v2323, %v2339
        %v2350 = vunpack.c.l.s4 1934713408
        %v2351 = vunpack.c.0.s8 %v2350
        %v2352 = vlaneseq
        %v2353 = vshrl.u32 %v2352, 7
        %v2354 = vsub.s32 %v2351, %v2353
        %v2355 = vrot.slane %v2347, %v2354
        %v2357 = vunpack.c.l.s4 1934713408
        %v2358 = vunpack.c.0.s8 %v2357
        %v2359 = vlaneseq
        %v2360 = vshrl.u32 %v2359, 7
        %v2361 = vsub.s32 %v2358, %v2360
        %v2362 = vrot.slane %v2348, %v2361
        %v2363 = vcombine.low %v2330, %v2346
        %v2364 = vcombine.high %v2330, %v2346
        %v2366 = vunpack.c.l.s4 1934713408
        %v2367 = vunpack.c.0.s8 %v2366
        %v2368 = vlaneseq
        %v2369 = vshrl.u32 %v2368, 7
        %v2370 = vsub.s32 %v2367, %v2369
        %v2371 = vrot.slane %v2363, %v2370
        %v2373 = vunpack.c.l.s4 1934713408
        %v2374 = vunpack.c.0.s8 %v2373
        %v2375 = vlaneseq
        %v2376 = vshrl.u32 %v2375, 7
        %v2377 = vsub.s32 %v2374, %v2376
        %v2378 = vrot.slane %v2364, %v2377
        %v2379 = vcombine.high %v2355, 0.0
        %v2380 = vcombine.high %v2362, 0.0
        %v2381 = vcombine.high %v2371, 0.0
        %v2382 = vcombine.high %v2378, 0.0
        %v2383 = vcombine.low %v2308, %v2312
        %v2384 = vcombine.high %v2308, %v2312
        %v2386 = vunpack.c.l.s4 1983009808
        %v2387 = vunpack.c.0.s8 %v2386
        %v2388 = vlaneseq
        %v2389 = vshrl.u32 %v2388, 7
        %v2390 = vsub.s32 %v2387, %v2389
        %v2391 = vrot.slane %v2383, %v2390
        %v2393 = vunpack.c.l.s4 1983009808
        %v2394 = vunpack.c.0.s8 %v2393
        %v2395 = vlaneseq
        %v2396 = vshrl.u32 %v2395, 7
        %v2397 = vsub.s32 %v2394, %v2396
        %v2398 = vrot.slane %v2384, %v2397
        %v2399 = vcombine.low %v2310, %v2314
        %v2400 = vcombine.high %v2310, %v2314
        %v2402 = vunpack.c.l.s4 1983009808
        %v2403 = vunpack.c.0.s8 %v2402
        %v2404 = vlaneseq
        %v2405 = vshrl.u32 %v2404, 7
        %v2406 = vsub.s32 %v2403, %v2405
        %v2407 = vrot.slane %v2399, %v2406
        %v2409 = vunpack.c.l.s4 1983009808
        %v2410 = vunpack.c.0.s8 %v2409
        %v2411 = vlaneseq
        %v2412 = vshrl.u32 %v2411, 7
        %v2413 = vsub.s32 %v2410, %v2412
        %v2414 = vrot.slane %v2400, %v2413
        %v2415 = vcombine.low %v2391, %v2407
        %v2416 = vcombine.high %v2391, %v2407
        %v2418 = vunpack.c.l.s4 1934713408
        %v2419 = vunpack.c.0.s8 %v2418
        %v2420 = vlaneseq
        %v2421 = vshrl.u32 %v2420, 7
        %v2422 = vsub.s32 %v2419, %v2421
        %v2423 = vrot.slane %v2415, %v2422
        %v2425 = vunpack.c.l.s4 1934713408
        %v2426 = vunpack.c.0.s8 %v2425
        %v2427 = vlaneseq
        %v2428 = vshrl.u32 %v2427, 7
        %v2429 = vsub.s32 %v2426, %v2428
        %v2430 = vrot.slane %v2416, %v2429
        %v2431 = vcombine.low %v2398, %v2414
        %v2432 = vcombine.high %v2398, %v2414
        %v2434 = vunpack.c.l.s4 1934713408
        %v2435 = vunpack.c.0.s8 %v2434
        %v2436 = vlaneseq
        %v2437 = vshrl.u32 %v2436, 7
        %v2438 = vsub.s32 %v2435, %v2437
        %v2439 = vrot.slane %v2431, %v2438
        %v2441 = vunpack.c.l.s4 1934713408
        %v2442 = vunpack.c.0.s8 %v2441
        %v2443 = vlaneseq
        %v2444 = vshrl.u32 %v2443, 7
        %v2445 = vsub.s32 %v2442, %v2444
        %v2446 = vrot.slane %v2432, %v2445
        %v2447 = vcombine.high %v2423, 0.0
        %v2448 = vcombine.high %v2430, 0.0
        %v2449 = vcombine.high %v2439, 0.0
        %v2450 = vcombine.high %v2446, 0.0
        %v2451 = vcombine.low %v2355, %v2362
        %v2453 = vunpack.c.l.s4 1983009808
        %v2454 = vunpack.c.0.s8 %v2453
        %v2455 = vlaneseq
        %v2456 = vshrl.u32 %v2455, 7
        %v2457 = vsub.s32 %v2454, %v2456
        %v2458 = vrot.slane %v2451, %v2457
        %v2459 = vcombine.low %v2379, %v2380
        %v2461 = vunpack.c.l.s4 1983009808
        %v2462 = vunpack.c.0.s8 %v2461
        %v2463 = vlaneseq
        %v2464 = vshrl.u32 %v2463, 7
        %v2465 = vsub.s32 %v2462, %v2464
        %v2466 = vrot.slane %v2459, %v2465
        %v2467 = vcombine.low %v2371, %v2378
        %v2469 = vunpack.c.l.s4 1983009808
        %v2470 = vunpack.c.0.s8 %v2469
        %v2471 = vlaneseq
        %v2472 = vshrl.u32 %v2471, 7
        %v2473 = vsub.s32 %v2470, %v2472
        %v2474 = vrot.slane %v2467, %v2473
        %v2475 = vcombine.low %v2381, %v2382
        %v2477 = vunpack.c.l.s4 1983009808
        %v2478 = vunpack.c.0.s8 %v2477
        %v2479 = vlaneseq
        %v2480 = vshrl.u32 %v2479, 7
        %v2481 = vsub.s32 %v2478, %v2480
        %v2482 = vrot.slane %v2475, %v2481
        %v2483 = vcombine.low %v2458, %v2466
        %v2484 = vcombine.high %v2458, %v2466
        %v2486 = vunpack.c.l.s4 1934713408
        %v2487 = vunpack.c.0.s8 %v2486
        %v2488 = vlaneseq
        %v2489 = vshrl.u32 %v2488, 7
        %v2490 = vsub.s32 %v2487, %v2489
        %v2491 = vrot.slane %v2483, %v2490
        %v2493 = vunpack.c.l.s4 1934713408
        %v2494 = vunpack.c.0.s8 %v2493
        %v2495 = vlaneseq
        %v2496 = vshrl.u32 %v2495, 7
        %v2497 = vsub.s32 %v2494, %v2496
        %v2498 = vrot.slane %v2484, %v2497
        %v2499 = vcombine.low %v2474, %v2482
        %v2500 = vcombine.high %v2474, %v2482
        %v2502 = vunpack.c.l.s4 1934713408
        %v2503 = vunpack.c.0.s8 %v2502
        %v2504 = vlaneseq
        %v2505 = vshrl.u32 %v2504, 7
        %v2506 = vsub.s32 %v2503, %v2505
        %v2507 = vrot.slane %v2499, %v2506
        %v2509 = vunpack.c.l.s4 1934713408
        %v2510 = vunpack.c.0.s8 %v2509
        %v2511 = vlaneseq
        %v2512 = vshrl.u32 %v2511, 7
        %v2513 = vsub.s32 %v2510, %v2512
        %v2514 = vrot.slane %v2500, %v2513
        %v2515 = vcombine.low %v2491, %v2507
        %v2516 = vcombine.high %v2491, %v2507
        %v2517 = vcombine.low %v2498, %v2514
        %v2518 = vcombine.high %v2498, %v2514
        %v2519 = vcombine.low %v2423, %v2430
        %v2521 = vunpack.c.l.s4 1983009808
        %v2522 = vunpack.c.0.s8 %v2521
        %v2523 = vlaneseq
        %v2524 = vshrl.u32 %v2523, 7
        %v2525 = vsub.s32 %v2522, %v2524
        %v2526 = vrot.slane %v2519, %v2525
        %v2527 = vcombine.low %v2447, %v2448
        %v2529 = vunpack.c.l.s4 1983009808
        %v2530 = vunpack.c.0.s8 %v2529
        %v2531 = vlaneseq
        %v2532 = vshrl.u32 %v2531, 7
        %v2533 = vsub.s32 %v2530, %v2532
        %v2534 = vrot.slane %v2527, %v2533
        %v2535 = vcombine.low %v2439, %v2446
        %v2537 = vunpack.c.l.s4 1983009808
        %v2538 = vunpack.c.0.s8 %v2537
        %v2539 = vlaneseq
        %v2540 = vshrl.u32 %v2539, 7
        %v2541 = vsub.s32 %v2538, %v2540
        %v2542 = vrot.slane %v2535, %v2541
        %v2543 = vcombine.low %v2449, %v2450
        %v2545 = vunpack.c.l.s4 1983009808
        %v2546 = vunpack.c.0.s8 %v2545
        %v2547 = vlaneseq
        %v2548 = vshrl.u32 %v2547, 7
        %v2549 = vsub.s32 %v2546, %v2548
        %v2550 = vrot.slane %v2543, %v2549
        %v2551 = vcombine.low %v2526, %v2534
        %v2552 = vcombine.high %v2526, %v2534
        %v2554 = vunpack.c.l.s4 1934713408
        %v2555 = vunpack.c.0.s8 %v2554
        %v2556 = vlaneseq
        %v2557 = vshrl.u32 %v2556, 7
        %v2558 = vsub.s32 %v2555, %v2557
        %v2559 = vrot.slane %v2551, %v2558
        %v2561 = vunpack.c.l.s4 1934713408
        %v2562 = vunpack.c.0.s8 %v2561
        %v2563 = vlaneseq
        %v2564 = vshrl.u32 %v2563, 7
        %v2565 = vsub.s32 %v2562, %v2564
        %v2566 = vrot.slane %v2552, %v2565
        %v2567 = vcombine.low %v2542, %v2550
        %v2568 = vcombine.high %v2542, %v2550
        %v2570 = vunpack.c.l.s4 1934713408
        %v2571 = vunpack.c.0.s8 %v2570
        %v2572 = vlaneseq
        %v2573 = vshrl.u32 %v2572, 7
        %v2574 = vsub.s32 %v2571, %v2573
        %v2575 = vrot.slane %v2567, %v2574
        %v2577 = vunpack.c.l.s4 1934713408
        %v2578 = vunpack.c.0.s8 %v2577
        %v2579 = vlaneseq
        %v2580 = vshrl.u32 %v2579, 7
        %v2581 = vsub.s32 %v2578, %v2580
        %v2582 = vrot.slane %v2568, %v2581
        %v2583 = vcombine.low %v2559, %v2575
        %v2584 = vcombine.high %v2559, %v2575
        %v2585 = vcombine.low %v2566, %v2582
        %v2586 = vcombine.high %v2566, %v2582
        %2589 = vrot.lane.b32.xlu0 %v2516, 32
        %v2590 = vpop.permute.xlu0 %2589
        %2591 = vrot.lane.b32.xlu0 %v2584, 32
        %v2592 = vpop.permute.xlu0 %2591
        %2597 = vrot.lane.b32.xlu0 %v2517, 64
        %v2598 = vpop.permute.xlu0 %2597
        %2599 = vrot.lane.b32.xlu0 %v2585, 64
        %v2600 = vpop.permute.xlu0 %2599
        %2605 = vrot.lane.b32.xlu0 %v2518, 96
        %v2606 = vpop.permute.xlu0 %2605
        %2607 = vrot.lane.b32.xlu0 %v2586, 96
        %v2608 = vpop.permute.xlu0 %2607
        %v2611 = vsel %vm1838, %v2515, %v2590
        %v2612 = vsel %vm1838, %v2583, %v2592
        %vm2613 = vcmask 523264
        %v2614 = vsel %vm2613, %v2611, %v2598
        %v2615 = vsel %vm2613, %v2612, %v2600
        %vm2616 = vcmask 785408
        %v2617 = vsel %vm2616, %v2614, %v2606
        %v2618 = vsel %vm2616, %v2615, %v2608
        %v2619 = vpack.c.bf16 %v2618, %v2617
        %v2620 = vld [vmem:[%s686] sm:$0xf]
        %v2621 = vld [vmem:[%s686 + $0x4] sm:$0xf]
        %v2622 = vld [vmem:[%s686 + $0x8] sm:$0xf]
        %v2623 = vld [vmem:[%s686 + $0xc] sm:$0xf]
        %v2624 = vld [vmem:[%s686 + $0x10] sm:$0xf]
        %v2625 = vld [vmem:[%s686 + $0x14] sm:$0xf]
        %v2626 = vld [vmem:[%s686 + $0x18] sm:$0xf]
        %v2627 = vld [vmem:[%s686 + $0x1c] sm:$0xf]
        %v2628 = vld [vmem:[%s686 + $0x20] sm:$0xf]
        %v2629 = vld [vmem:[%s686 + $0x24] sm:$0xf]
        %v2630 = vld [vmem:[%s686 + $0x28] sm:$0xf]
        %v2631 = vld [vmem:[%s686 + $0x2c] sm:$0xf]
        %v2632 = vld [vmem:[%s686 + $0x30] sm:$0xf]
        %v2633 = vld [vmem:[%s686 + $0x34] sm:$0xf]
        %v2634 = vld [vmem:[%s686 + $0x38] sm:$0xf]
        %v2635 = vld [vmem:[%s686 + $0x3c] sm:$0xf]
        %v2636 = vld [vmem:[%s689] sm:$0x1]
        %v2638 = vlaneseq
        %v2639 = vshrl.u32 %v2638, 7
        %v2640 = vsub.s32 0, %v2639
        %v2641 = vrot.slane %v2636, %v2640
        %v2659 = vunpack.c.l.b16 %v2620
        %v2660 = vunpack.c.l.b16 %v2621
        %v2661 = vunpack.c.l.b16 %v2622
        %v2662 = vunpack.c.l.b16 %v2623
        %v2663 = vunpack.c.l.b16 %v2624
        %v2664 = vunpack.c.l.b16 %v2625
        %v2665 = vunpack.c.l.b16 %v2626
        %v2666 = vunpack.c.l.b16 %v2627
        %v2667 = vunpack.c.l.b16 %v2628
        %v2668 = vunpack.c.l.b16 %v2629
        %v2669 = vunpack.c.l.b16 %v2630
        %v2670 = vunpack.c.l.b16 %v2631
        %v2671 = vunpack.c.l.b16 %v2632
        %v2672 = vunpack.c.l.b16 %v2633
        %v2673 = vunpack.c.l.b16 %v2634
        %v2674 = vunpack.c.l.b16 %v2635
        %v2675 = vpack.c.b16 %v2660, %v2659
        %v2676 = vpack.c.b16 %v2662, %v2661
        %v2677 = vpack.c.b16 %v2664, %v2663
        %v2678 = vpack.c.b16 %v2666, %v2665
        %v2679 = vpack.c.b16 %v2668, %v2667
        %v2680 = vpack.c.b16 %v2670, %v2669
        %v2681 = vpack.c.b16 %v2672, %v2671
        %v2682 = vpack.c.b16 %v2674, %v2673
        %2691 = vmatprep.subr.bf16.mxu0 0
        %2692 = vmatpush1.bf16.msra.mxu0 %v2675
        %2693 = vmatprep.subr.bf16.mxu0 0
        %2694 = vmatpush1.bf16.msra.mxu0 %v2676
        %2695 = vmatprep.subr.bf16.mxu0 0
        %2696 = vmatpush1.bf16.msra.mxu0 %v2677
        %2697 = vmatprep.subr.bf16.mxu0 0
        %2698 = vmatpush1.bf16.msra.mxu0 %v2678
        %2699 = vmatprep.subr.bf16.mxu0 0
        %2700 = vmatpush1.bf16.msra.mxu0 %v2679
        %2701 = vmatprep.subr.bf16.mxu0 0
        %2702 = vmatpush1.bf16.msra.mxu0 %v2680
        %2703 = vmatprep.subr.bf16.mxu0 0
        %2704 = vmatpush1.bf16.msra.mxu0 %v2681
        %2705 = vmatprep.subr.bf16.mxu0 0
        %2706 = vmatpush1.bf16.msra.mxu0 %v2682
        %2707 = vmatprep.subr.bf16.mxu0 0
        %2708 = vmatpush1.bf16.msra.mxu0 0
        %2709 = vmatprep.subr.bf16.mxu0 0
        %2710 = vmatpush1.bf16.msra.mxu0 0
        %2711 = vmatprep.subr.bf16.mxu0 0
        %2712 = vmatpush1.bf16.msra.mxu0 0
        %2713 = vmatprep.subr.bf16.mxu0 0
        %2714 = vmatpush1.bf16.msra.mxu0 0
        %2715 = vmatprep.subr.bf16.mxu0 0
        %2716 = vmatpush1.bf16.msra.mxu0 0
        %2717 = vmatprep.subr.bf16.mxu0 0
        %2718 = vmatpush1.bf16.msra.mxu0 0
        %2719 = vmatprep.subr.bf16.mxu0 0
        %2720 = vmatpush1.bf16.msra.mxu0 0
        %2721 = vmatprep.subr.bf16.mxu0 0
        %2722 = vmatpush1.bf16.msra.mxu0 0
        %2723 = vmatprep.mubr.bf16.mxu0 0
        %2724 = vmatmul.mubr.bf16.gmra.mrb[0].mxu0 %v2619
        %v2725 = vpop.f32.mrb[0].mxu0
        %v2726 = vadd.f32 %v2641, %v2725
        %v2727 = vpop.f32.mrb[0].mxu0
        %v2728 = vpop.f32.mrb[0].mxu0
        %v2729 = vadd.f32 %v2641, %v2728
        %v2730 = vpop.f32.mrb[0].mxu0
        %2731 = vdwg.mxu0
        %v2732 = vadd.f32 %v717, %v2726
        %v2733 = vadd.f32 %v718, %v2729
        %v2734 = vld [vmem:[%s692] sm:$0x1]
        %v2735 = vld [vmem:[%s695] sm:$0x1]
        %2736 = vadd.xlane.f32.xlu0 %v2732
        %v2737 = vpop.xlane.xlu0 %2736
        %2738 = vadd.xlane.f32.xlu0 %v2733
        %v2739 = vpop.xlane.xlu0 %2738
        %v2740 = vmul.f32 %v2737, %v725
        %v2741 = vmul.f32 %v2739, %v725
        %v2742 = vsub.f32 %v2732, %v2740
        %v2743 = vsub.f32 %v2733, %v2741
        %v2744 = vmul.f32 %v2742, %v2742
        %v2745 = vmul.f32 %v2743, %v2743
        %2746 = vadd.xlane.f32.xlu0 %v2744
        %v2747 = vpop.xlane.xlu0 %2746
        %2748 = vadd.xlane.f32.xlu0 %v2745
        %v2749 = vpop.xlane.xlu0 %2748
        %v2750 = vmul.f32 %v2747, %v725
        %v2751 = vmul.f32 %v2749, %v725
        %v2752 = vadd.f32 %v2750, 1e-05
        %v2753 = vadd.f32 %v2751, 1e-05
        %v2754 = vrsqrt.pop %v2752
        %v2755 = vrsqrt.pop %v2753
        %v2756 = vmul.f32 %v2742, %v2754
        %v2757 = vmul.f32 %v2743, %v2755
        %v2759 = vlaneseq
        %v2760 = vshrl.u32 %v2759, 7
        %v2761 = vsub.s32 0, %v2760
        %v2762 = vrot.slane %v2734, %v2761
        %v2764 = vmul.f32 %v2756, %v2762
        %v2765 = vmul.f32 %v2757, %v2762
        %v2767 = vlaneseq
        %v2768 = vshrl.u32 %v2767, 7
        %v2769 = vsub.s32 0, %v2768
        %v2770 = vrot.slane %v2735, %v2769
        %v2772 = vadd.f32 %v2764, %v2770
        %v2773 = vadd.f32 %v2765, %v2770
        %v2774 = vpack.c.bf16 %v2773, %v2772
        %v2775 = vld [vmem:[%s569] sm:$0xff]
        %v2776 = vld [vmem:[%s569 + $0x8] sm:$0xff]
        %v2777 = vld [vmem:[%s569 + $0x10] sm:$0xff]
        %v2778 = vld [vmem:[%s569 + $0x18] sm:$0xff]
        %v2779 = vld [vmem:[%s569 + $0x20] sm:$0xff]
        %v2780 = vld [vmem:[%s569 + $0x28] sm:$0xff]
        %v2781 = vld [vmem:[%s569 + $0x30] sm:$0xff]
        %v2782 = vld [vmem:[%s569 + $0x38] sm:$0xff]
        %v2783 = vld [vmem:[%s569 + $0x40] sm:$0xff]
        %v2784 = vld [vmem:[%s569 + $0x48] sm:$0xff]
        %v2785 = vld [vmem:[%s569 + $0x50] sm:$0xff]
        %v2786 = vld [vmem:[%s569 + $0x58] sm:$0xff]
        %v2787 = vld [vmem:[%s569 + $0x60] sm:$0xff]
        %v2788 = vld [vmem:[%s569 + $0x68] sm:$0xff]
        %v2789 = vld [vmem:[%s569 + $0x70] sm:$0xff]
        %v2790 = vld [vmem:[%s569 + $0x78] sm:$0xff]
        %v2791 = vld [vmem:[%s569 + $0x80] sm:$0xff]
        %v2792 = vld [vmem:[%s569 + $0x88] sm:$0xff]
        %v2793 = vld [vmem:[%s569 + $0x90] sm:$0xff]
        %v2794 = vld [vmem:[%s569 + $0x98] sm:$0xff]
        %v2795 = vld [vmem:[%s569 + $0xa0] sm:$0xff]
        %v2796 = vld [vmem:[%s569 + $0xa8] sm:$0xff]
        %v2797 = vld [vmem:[%s569 + $0xb0] sm:$0xff]
        %v2798 = vld [vmem:[%s569 + $0xb8] sm:$0xff]
        %v2799 = vld [vmem:[%s569 + $0xc0] sm:$0xff]
        %v2800 = vld [vmem:[%s569 + $0xc8] sm:$0xff]
        %v2801 = vld [vmem:[%s569 + $0xd0] sm:$0xff]
        %v2802 = vld [vmem:[%s569 + $0xd8] sm:$0xff]
        %v2803 = vld [vmem:[%s569 + $0xe0] sm:$0xff]
        %v2804 = vld [vmem:[%s569 + $0xe8] sm:$0xff]
        %v2805 = vld [vmem:[%s569 + $0xf0] sm:$0xff]
        %v2806 = vld [vmem:[%s569 + $0xf8] sm:$0xff]
        %v2807 = vld [vmem:[%s699] sm:$0xf]
        %v2809 = vlaneseq
        %v2810 = vshrl.u32 %v2809, 7
        %v2811 = vsub.s32 0, %v2810
        %v2812 = vrot.slane %v2807, %v2811
        %v2813 = vlaneseq
        %v2814 = vshrl.u32 %v2813, 7
        %v2815 = vsub.s32 1, %v2814
        %v2816 = vrot.slane %v2807, %v2815
        %v2817 = vlaneseq
        %v2818 = vshrl.u32 %v2817, 7
        %v2819 = vsub.s32 2, %v2818
        %v2820 = vrot.slane %v2807, %v2819
        %v2821 = vlaneseq
        %v2822 = vshrl.u32 %v2821, 7
        %v2823 = vsub.s32 3, %v2822
        %v2824 = vrot.slane %v2807, %v2823
        %v2861 = vunpack.c.l.b16 %v2775
        %v2862 = vunpack.c.h.b16 %v2775
        %v2863 = vunpack.c.l.b16 %v2776
        %v2864 = vunpack.c.h.b16 %v2776
        %v2865 = vunpack.c.l.b16 %v2777
        %v2866 = vunpack.c.h.b16 %v2777
        %v2867 = vunpack.c.l.b16 %v2778
        %v2868 = vunpack.c.h.b16 %v2778
        %v2869 = vunpack.c.l.b16 %v2779
        %v2870 = vunpack.c.h.b16 %v2779
        %v2871 = vunpack.c.l.b16 %v2780
        %v2872 = vunpack.c.h.b16 %v2780
        %v2873 = vunpack.c.l.b16 %v2781
        %v2874 = vunpack.c.h.b16 %v2781
        %v2875 = vunpack.c.l.b16 %v2782
        %v2876 = vunpack.c.h.b16 %v2782
        %v2877 = vunpack.c.l.b16 %v2783
        %v2878 = vunpack.c.h.b16 %v2783
        %v2879 = vunpack.c.l.b16 %v2784
        %v2880 = vunpack.c.h.b16 %v2784
        %v2881 = vunpack.c.l.b16 %v2785
        %v2882 = vunpack.c.h.b16 %v2785
        %v2883 = vunpack.c.l.b16 %v2786
        %v2884 = vunpack.c.h.b16 %v2786
        %v2885 = vunpack.c.l.b16 %v2787
        %v2886 = vunpack.c.h.b16 %v2787
        %v2887 = vunpack.c.l.b16 %v2788
        %v2888 = vunpack.c.h.b16 %v2788
        %v2889 = vunpack.c.l.b16 %v2789
        %v2890 = vunpack.c.h.b16 %v2789
        %v2891 = vunpack.c.l.b16 %v2790
        %v2892 = vunpack.c.h.b16 %v2790
        %v2893 = vunpack.c.l.b16 %v2791
        %v2894 = vunpack.c.h.b16 %v2791
        %v2895 = vunpack.c.l.b16 %v2792
        %v2896 = vunpack.c.h.b16 %v2792
        %v2897 = vunpack.c.l.b16 %v2793
        %v2898 = vunpack.c.h.b16 %v2793
        %v2899 = vunpack.c.l.b16 %v2794
        %v2900 = vunpack.c.h.b16 %v2794
        %v2901 = vunpack.c.l.b16 %v2795
        %v2902 = vunpack.c.h.b16 %v2795
        %v2903 = vunpack.c.l.b16 %v2796
        %v2904 = vunpack.c.h.b16 %v2796
        %v2905 = vunpack.c.l.b16 %v2797
        %v2906 = vunpack.c.h.b16 %v2797
        %v2907 = vunpack.c.l.b16 %v2798
        %v2908 = vunpack.c.h.b16 %v2798
        %v2909 = vunpack.c.l.b16 %v2799
        %v2910 = vunpack.c.h.b16 %v2799
        %v2911 = vunpack.c.l.b16 %v2800
        %v2912 = vunpack.c.h.b16 %v2800
        %v2913 = vunpack.c.l.b16 %v2801
        %v2914 = vunpack.c.h.b16 %v2801
        %v2915 = vunpack.c.l.b16 %v2802
        %v2916 = vunpack.c.h.b16 %v2802
        %v2917 = vunpack.c.l.b16 %v2803
        %v2918 = vunpack.c.h.b16 %v2803
        %v2919 = vunpack.c.l.b16 %v2804
        %v2920 = vunpack.c.h.b16 %v2804
        %v2921 = vunpack.c.l.b16 %v2805
        %v2922 = vunpack.c.h.b16 %v2805
        %v2923 = vunpack.c.l.b16 %v2806
        %v2924 = vunpack.c.h.b16 %v2806
        %v2925 = vpack.c.b16 %v2865, %v2861
        %v2926 = vpack.c.b16 %v2866, %v2862
        %v2927 = vpack.c.b16 %v2867, %v2863
        %v2928 = vpack.c.b16 %v2868, %v2864
        %v2929 = vpack.c.b16 %v2873, %v2869
        %v2930 = vpack.c.b16 %v2874, %v2870
        %v2931 = vpack.c.b16 %v2875, %v2871
        %v2932 = vpack.c.b16 %v2876, %v2872
        %v2933 = vpack.c.b16 %v2881, %v2877
        %v2934 = vpack.c.b16 %v2882, %v2878
        %v2935 = vpack.c.b16 %v2883, %v2879
        %v2936 = vpack.c.b16 %v2884, %v2880
        %v2937 = vpack.c.b16 %v2889, %v2885
        %v2938 = vpack.c.b16 %v2890, %v2886
        %v2939 = vpack.c.b16 %v2891, %v2887
        %v2940 = vpack.c.b16 %v2892, %v2888
        %v2941 = vpack.c.b16 %v2897, %v2893
        %v2942 = vpack.c.b16 %v2898, %v2894
        %v2943 = vpack.c.b16 %v2899, %v2895
        %v2944 = vpack.c.b16 %v2900, %v2896
        %v2945 = vpack.c.b16 %v2905, %v2901
        %v2946 = vpack.c.b16 %v2906, %v2902
        %v2947 = vpack.c.b16 %v2907, %v2903
        %v2948 = vpack.c.b16 %v2908, %v2904
        %v2949 = vpack.c.b16 %v2913, %v2909
        %v2950 = vpack.c.b16 %v2914, %v2910
        %v2951 = vpack.c.b16 %v2915, %v2911
        %v2952 = vpack.c.b16 %v2916, %v2912
        %v2953 = vpack.c.b16 %v2921, %v2917
        %v2954 = vpack.c.b16 %v2922, %v2918
        %v2955 = vpack.c.b16 %v2923, %v2919
        %v2956 = vpack.c.b16 %v2924, %v2920
        %2989 = vmatprep.subr.bf16.mxu0 %v2926
        %2990 = vmatpush1.bf16.msra.mxu0 %v2925
        %2991 = vmatprep.subr.bf16.mxu0 %v2930
        %2992 = vmatpush1.bf16.msra.mxu0 %v2929
        %2993 = vmatprep.subr.bf16.mxu0 %v2934
        %2994 = vmatpush1.bf16.msra.mxu0 %v2933
        %2995 = vmatprep.subr.bf16.mxu0 %v2938
        %2996 = vmatpush1.bf16.msra.mxu0 %v2937
        %2997 = vmatprep.subr.bf16.mxu0 %v2942
        %2998 = vmatpush1.bf16.msra.mxu0 %v2941
        %2999 = vmatprep.subr.bf16.mxu0 %v2946
        %3000 = vmatpush1.bf16.msra.mxu0 %v2945
        %3001 = vmatprep.subr.bf16.mxu0 %v2950
        %3002 = vmatpush1.bf16.msra.mxu0 %v2949
        %3003 = vmatprep.subr.bf16.mxu0 %v2954
        %3004 = vmatpush1.bf16.msra.mxu0 %v2953
        %3005 = vmatprep.subr.bf16.mxu0 0
        %3006 = vmatpush1.bf16.msra.mxu0 0
        %3007 = vmatprep.subr.bf16.mxu0 0
        %3008 = vmatpush1.bf16.msra.mxu0 0
        %3009 = vmatprep.subr.bf16.mxu0 0
        %3010 = vmatpush1.bf16.msra.mxu0 0
        %3011 = vmatprep.subr.bf16.mxu0 0
        %3012 = vmatpush1.bf16.msra.mxu0 0
        %3013 = vmatprep.subr.bf16.mxu0 0
        %3014 = vmatpush1.bf16.msra.mxu0 0
        %3015 = vmatprep.subr.bf16.mxu0 0
        %3016 = vmatpush1.bf16.msra.mxu0 0
        %3017 = vmatprep.subr.bf16.mxu0 0
        %3018 = vmatpush1.bf16.msra.mxu0 0
        %3019 = vmatprep.subr.bf16.mxu0 0
        %3020 = vmatpush1.bf16.msra.mxu0 0
        %3021 = vmatprep.mubr.bf16.mxu0 0
        %3022 = vmatmul.mubr.bf16.gmra.mrb[0].mxu0 %v2774
        %v3023 = vpop.f32.mrb[0].mxu0
        %v3024 = vadd.f32 %v2812, %v3023
        %v3025 = vpop.f32.mrb[0].mxu0
        %v3026 = vadd.f32 %v2816, %v3025
        %v3027 = vpop.f32.mrb[0].mxu0
        %v3028 = vadd.f32 %v2812, %v3027
        %v3029 = vpop.f32.mrb[0].mxu0
        %v3030 = vadd.f32 %v2816, %v3029
        %3031 = vdwg.mxu0
        %3032 = vmatprep.subr.bf16.mxu0 %v2928
        %3033 = vmatpush1.bf16.msra.mxu0 %v2927
        %3034 = vmatprep.subr.bf16.mxu0 %v2932
        %3035 = vmatpush1.bf16.msra.mxu0 %v2931
        %3036 = vmatprep.subr.bf16.mxu0 %v2936
        %3037 = vmatpush1.bf16.msra.mxu0 %v2935
        %3038 = vmatprep.subr.bf16.mxu0 %v2940
        %3039 = vmatpush1.bf16.msra.mxu0 %v2939
        %3040 = vmatprep.subr.bf16.mxu0 %v2944
        %3041 = vmatpush1.bf16.msra.mxu0 %v2943
        %3042 = vmatprep.subr.bf16.mxu0 %v2948
        %3043 = vmatpush1.bf16.msra.mxu0 %v2947
        %3044 = vmatprep.subr.bf16.mxu0 %v2952
        %3045 = vmatpush1.bf16.msra.mxu0 %v2951
        %3046 = vmatprep.subr.bf16.mxu0 %v2956
        %3047 = vmatpush1.bf16.msra.mxu0 %v2955
        %3048 = vmatprep.subr.bf16.mxu0 0
        %3049 = vmatpush1.bf16.msra.mxu0 0
        %3050 = vmatprep.subr.bf16.mxu0 0
        %3051 = vmatpush1.bf16.msra.mxu0 0
        %3052 = vmatprep.subr.bf16.mxu0 0
        %3053 = vmatpush1.bf16.msra.mxu0 0
        %3054 = vmatprep.subr.bf16.mxu0 0
        %3055 = vmatpush1.bf16.msra.mxu0 0
        %3056 = vmatprep.subr.bf16.mxu0 0
        %3057 = vmatpush1.bf16.msra.mxu0 0
        %3058 = vmatprep.subr.bf16.mxu0 0
        %3059 = vmatpush1.bf16.msra.mxu0 0
        %3060 = vmatprep.subr.bf16.mxu0 0
        %3061 = vmatpush1.bf16.msra.mxu0 0
        %3062 = vmatprep.subr.bf16.mxu0 0
        %3063 = vmatpush1.bf16.msra.mxu0 0
        %3064 = vmatprep.mubr.bf16.mxu0 0
        %3065 = vmatmul.mubr.bf16.gmra.mrb[0].mxu0 %v2774
        %v3066 = vpop.f32.mrb[0].mxu0
        %v3067 = vadd.f32 %v2820, %v3066
        %v3068 = vpop.f32.mrb[0].mxu0
        %v3069 = vadd.f32 %v2824, %v3068
        %v3070 = vpop.f32.mrb[0].mxu0
        %v3071 = vadd.f32 %v2820, %v3070
        %v3072 = vpop.f32.mrb[0].mxu0
        %v3073 = vadd.f32 %v2824, %v3072
        %3074 = vdwg.mxu0
        %v3075 = vmax.f32 %v3024, 0.0
        %v3076 = vmax.f32 %v3026, 0.0
        %v3077 = vmax.f32 %v3067, 0.0
        %v3078 = vmax.f32 %v3069, 0.0
        %v3079 = vmax.f32 %v3028, 0.0
        %v3080 = vmax.f32 %v3030, 0.0
        %v3081 = vmax.f32 %v3071, 0.0
        %v3082 = vmax.f32 %v3073, 0.0
        %v3083 = vmul.f32 %v3075, %v3075
        %v3084 = vmul.f32 %v3076, %v3076
        %v3085 = vmul.f32 %v3077, %v3077
        %v3086 = vmul.f32 %v3078, %v3078
        %v3087 = vmul.f32 %v3079, %v3079
        %v3088 = vmul.f32 %v3080, %v3080
        %v3089 = vmul.f32 %v3081, %v3081
        %v3090 = vmul.f32 %v3082, %v3082
        %v3091 = vpack.c.bf16 %v3087, %v3083
        %v3092 = vpack.c.bf16 %v3088, %v3084
        %v3093 = vpack.c.bf16 %v3089, %v3085
        %v3094 = vpack.c.bf16 %v3090, %v3086
        %v3095 = vld [vmem:[%s578] sm:$0xf]
        %v3096 = vld [vmem:[%s578 + $0x4] sm:$0xf]
        %v3097 = vld [vmem:[%s578 + $0x8] sm:$0xf]
        %v3098 = vld [vmem:[%s578 + $0xc] sm:$0xf]
        %v3099 = vld [vmem:[%s578 + $0x10] sm:$0xf]
        %v3100 = vld [vmem:[%s578 + $0x14] sm:$0xf]
        %v3101 = vld [vmem:[%s578 + $0x18] sm:$0xf]
        %v3102 = vld [vmem:[%s578 + $0x1c] sm:$0xf]
        %v3103 = vld [vmem:[%s578 + $0x20] sm:$0xf]
        %v3104 = vld [vmem:[%s578 + $0x24] sm:$0xf]
        %v3105 = vld [vmem:[%s578 + $0x28] sm:$0xf]
        %v3106 = vld [vmem:[%s578 + $0x2c] sm:$0xf]
        %v3107 = vld [vmem:[%s578 + $0x30] sm:$0xf]
        %v3108 = vld [vmem:[%s578 + $0x34] sm:$0xf]
        %v3109 = vld [vmem:[%s578 + $0x38] sm:$0xf]
        %v3110 = vld [vmem:[%s578 + $0x3c] sm:$0xf]
        %v3111 = vld [vmem:[%s578 + $0x40] sm:$0xf]
        %v3112 = vld [vmem:[%s578 + $0x44] sm:$0xf]
        %v3113 = vld [vmem:[%s578 + $0x48] sm:$0xf]
        %v3114 = vld [vmem:[%s578 + $0x4c] sm:$0xf]
        %v3115 = vld [vmem:[%s578 + $0x50] sm:$0xf]
        %v3116 = vld [vmem:[%s578 + $0x54] sm:$0xf]
        %v3117 = vld [vmem:[%s578 + $0x58] sm:$0xf]
        %v3118 = vld [vmem:[%s578 + $0x5c] sm:$0xf]
        %v3119 = vld [vmem:[%s578 + $0x60] sm:$0xf]
        %v3120 = vld [vmem:[%s578 + $0x64] sm:$0xf]
        %v3121 = vld [vmem:[%s578 + $0x68] sm:$0xf]
        %v3122 = vld [vmem:[%s578 + $0x6c] sm:$0xf]
        %v3123 = vld [vmem:[%s578 + $0x70] sm:$0xf]
        %v3124 = vld [vmem:[%s578 + $0x74] sm:$0xf]
        %v3125 = vld [vmem:[%s578 + $0x78] sm:$0xf]
        %v3126 = vld [vmem:[%s578 + $0x7c] sm:$0xf]
        %v3127 = vld [vmem:[%s578 + $0x80] sm:$0xf]
        %v3128 = vld [vmem:[%s578 + $0x84] sm:$0xf]
        %v3129 = vld [vmem:[%s578 + $0x88] sm:$0xf]
        %v3130 = vld [vmem:[%s578 + $0x8c] sm:$0xf]
        %v3131 = vld [vmem:[%s578 + $0x90] sm:$0xf]
        %v3132 = vld [vmem:[%s578 + $0x94] sm:$0xf]
        %v3133 = vld [vmem:[%s578 + $0x98] sm:$0xf]
        %v3134 = vld [vmem:[%s578 + $0x9c] sm:$0xf]
        %v3135 = vld [vmem:[%s578 + $0xa0] sm:$0xf]
        %v3136 = vld [vmem:[%s578 + $0xa4] sm:$0xf]
        %v3137 = vld [vmem:[%s578 + $0xa8] sm:$0xf]
        %v3138 = vld [vmem:[%s578 + $0xac] sm:$0xf]
        %v3139 = vld [vmem:[%s578 + $0xb0] sm:$0xf]
        %v3140 = vld [vmem:[%s578 + $0xb4] sm:$0xf]
        %v3141 = vld [vmem:[%s578 + $0xb8] sm:$0xf]
        %v3142 = vld [vmem:[%s578 + $0xbc] sm:$0xf]
        %v3143 = vld [vmem:[%s578 + $0xc0] sm:$0xf]
        %v3144 = vld [vmem:[%s578 + $0xc4] sm:$0xf]
        %v3145 = vld [vmem:[%s578 + $0xc8] sm:$0xf]
        %v3146 = vld [vmem:[%s578 + $0xcc] sm:$0xf]
        %v3147 = vld [vmem:[%s578 + $0xd0] sm:$0xf]
        %v3148 = vld [vmem:[%s578 + $0xd4] sm:$0xf]
        %v3149 = vld [vmem:[%s578 + $0xd8] sm:$0xf]
        %v3150 = vld [vmem:[%s578 + $0xdc] sm:$0xf]
        %v3151 = vld [vmem:[%s578 + $0xe0] sm:$0xf]
        %v3152 = vld [vmem:[%s578 + $0xe4] sm:$0xf]
        %v3153 = vld [vmem:[%s578 + $0xe8] sm:$0xf]
        %v3154 = vld [vmem:[%s578 + $0xec] sm:$0xf]
        %v3155 = vld [vmem:[%s578 + $0xf0] sm:$0xf]
        %v3156 = vld [vmem:[%s578 + $0xf4] sm:$0xf]
        %v3157 = vld [vmem:[%s578 + $0xf8] sm:$0xf]
        %v3158 = vld [vmem:[%s578 + $0xfc] sm:$0xf]
        %v3159 = vld [vmem:[%s702] sm:$0x1]
        %v3161 = vlaneseq
        %v3162 = vshrl.u32 %v3161, 7
        %v3163 = vsub.s32 0, %v3162
        %v3164 = vrot.slane %v3159, %v3163
        %v3230 = vunpack.c.l.b16 %v3095
        %v3231 = vunpack.c.l.b16 %v3096
        %v3232 = vunpack.c.l.b16 %v3097
        %v3233 = vunpack.c.l.b16 %v3098
        %v3234 = vunpack.c.l.b16 %v3099
        %v3235 = vunpack.c.l.b16 %v3100
        %v3236 = vunpack.c.l.b16 %v3101
        %v3237 = vunpack.c.l.b16 %v3102
        %v3238 = vunpack.c.l.b16 %v3103
        %v3239 = vunpack.c.l.b16 %v3104
        %v3240 = vunpack.c.l.b16 %v3105
        %v3241 = vunpack.c.l.b16 %v3106
        %v3242 = vunpack.c.l.b16 %v3107
        %v3243 = vunpack.c.l.b16 %v3108
        %v3244 = vunpack.c.l.b16 %v3109
        %v3245 = vunpack.c.l.b16 %v3110
        %v3246 = vunpack.c.l.b16 %v3111
        %v3247 = vunpack.c.l.b16 %v3112
        %v3248 = vunpack.c.l.b16 %v3113
        %v3249 = vunpack.c.l.b16 %v3114
        %v3250 = vunpack.c.l.b16 %v3115
        %v3251 = vunpack.c.l.b16 %v3116
        %v3252 = vunpack.c.l.b16 %v3117
        %v3253 = vunpack.c.l.b16 %v3118
        %v3254 = vunpack.c.l.b16 %v3119
        %v3255 = vunpack.c.l.b16 %v3120
        %v3256 = vunpack.c.l.b16 %v3121
        %v3257 = vunpack.c.l.b16 %v3122
        %v3258 = vunpack.c.l.b16 %v3123
        %v3259 = vunpack.c.l.b16 %v3124
        %v3260 = vunpack.c.l.b16 %v3125
        %v3261 = vunpack.c.l.b16 %v3126
        %v3262 = vunpack.c.l.b16 %v3127
        %v3263 = vunpack.c.l.b16 %v3128
        %v3264 = vunpack.c.l.b16 %v3129
        %v3265 = vunpack.c.l.b16 %v3130
        %v3266 = vunpack.c.l.b16 %v3131
        %v3267 = vunpack.c.l.b16 %v3132
        %v3268 = vunpack.c.l.b16 %v3133
        %v3269 = vunpack.c.l.b16 %v3134
        %v3270 = vunpack.c.l.b16 %v3135
        %v3271 = vunpack.c.l.b16 %v3136
        %v3272 = vunpack.c.l.b16 %v3137
        %v3273 = vunpack.c.l.b16 %v3138
        %v3274 = vunpack.c.l.b16 %v3139
        %v3275 = vunpack.c.l.b16 %v3140
        %v3276 = vunpack.c.l.b16 %v3141
        %v3277 = vunpack.c.l.b16 %v3142
        %v3278 = vunpack.c.l.b16 %v3143
        %v3279 = vunpack.c.l.b16 %v3144
        %v3280 = vunpack.c.l.b16 %v3145
        %v3281 = vunpack.c.l.b16 %v3146
        %v3282 = vunpack.c.l.b16 %v3147
        %v3283 = vunpack.c.l.b16 %v3148
        %v3284 = vunpack.c.l.b16 %v3149
        %v3285 = vunpack.c.l.b16 %v3150
        %v3286 = vunpack.c.l.b16 %v3151
        %v3287 = vunpack.c.l.b16 %v3152
        %v3288 = vunpack.c.l.b16 %v3153
        %v3289 = vunpack.c.l.b16 %v3154
        %v3290 = vunpack.c.l.b16 %v3155
        %v3291 = vunpack.c.l.b16 %v3156
        %v3292 = vunpack.c.l.b16 %v3157
        %v3293 = vunpack.c.l.b16 %v3158
        %v3294 = vpack.c.b16 %v3231, %v3230
        %v3295 = vpack.c.b16 %v3233, %v3232
        %v3296 = vpack.c.b16 %v3235, %v3234
        %v3297 = vpack.c.b16 %v3237, %v3236
        %v3298 = vpack.c.b16 %v3239, %v3238
        %v3299 = vpack.c.b16 %v3241, %v3240
        %v3300 = vpack.c.b16 %v3243, %v3242
        %v3301 = vpack.c.b16 %v3245, %v3244
        %v3302 = vpack.c.b16 %v3247, %v3246
        %v3303 = vpack.c.b16 %v3249, %v3248
        %v3304 = vpack.c.b16 %v3251, %v3250
        %v3305 = vpack.c.b16 %v3253, %v3252
        %v3306 = vpack.c.b16 %v3255, %v3254
        %v3307 = vpack.c.b16 %v3257, %v3256
        %v3308 = vpack.c.b16 %v3259, %v3258
        %v3309 = vpack.c.b16 %v3261, %v3260
        %v3310 = vpack.c.b16 %v3263, %v3262
        %v3311 = vpack.c.b16 %v3265, %v3264
        %v3312 = vpack.c.b16 %v3267, %v3266
        %v3313 = vpack.c.b16 %v3269, %v3268
        %v3314 = vpack.c.b16 %v3271, %v3270
        %v3315 = vpack.c.b16 %v3273, %v3272
        %v3316 = vpack.c.b16 %v3275, %v3274
        %v3317 = vpack.c.b16 %v3277, %v3276
        %v3318 = vpack.c.b16 %v3279, %v3278
        %v3319 = vpack.c.b16 %v3281, %v3280
        %v3320 = vpack.c.b16 %v3283, %v3282
        %v3321 = vpack.c.b16 %v3285, %v3284
        %v3322 = vpack.c.b16 %v3287, %v3286
        %v3323 = vpack.c.b16 %v3289, %v3288
        %v3324 = vpack.c.b16 %v3291, %v3290
        %v3325 = vpack.c.b16 %v3293, %v3292
        %3358 = vmatprep.subr.bf16.mxu0 0
        %3359 = vmatpush1.bf16.msra.mxu0 %v3294
        %3360 = vmatprep.subr.bf16.mxu0 0
        %3361 = vmatpush1.bf16.msra.mxu0 %v3295
        %3362 = vmatprep.subr.bf16.mxu0 0
        %3363 = vmatpush1.bf16.msra.mxu0 %v3296
        %3364 = vmatprep.subr.bf16.mxu0 0
        %3365 = vmatpush1.bf16.msra.mxu0 %v3297
        %3366 = vmatprep.subr.bf16.mxu0 0
        %3367 = vmatpush1.bf16.msra.mxu0 %v3298
        %3368 = vmatprep.subr.bf16.mxu0 0
        %3369 = vmatpush1.bf16.msra.mxu0 %v3299
        %3370 = vmatprep.subr.bf16.mxu0 0
        %3371 = vmatpush1.bf16.msra.mxu0 %v3300
        %3372 = vmatprep.subr.bf16.mxu0 0
        %3373 = vmatpush1.bf16.msra.mxu0 %v3301
        %3374 = vmatprep.subr.bf16.mxu0 0
        %3375 = vmatpush1.bf16.msra.mxu0 %v3302
        %3376 = vmatprep.subr.bf16.mxu0 0
        %3377 = vmatpush1.bf16.msra.mxu0 %v3303
        %3378 = vmatprep.subr.bf16.mxu0 0
        %3379 = vmatpush1.bf16.msra.mxu0 %v3304
        %3380 = vmatprep.subr.bf16.mxu0 0
        %3381 = vmatpush1.bf16.msra.mxu0 %v3305
        %3382 = vmatprep.subr.bf16.mxu0 0
        %3383 = vmatpush1.bf16.msra.mxu0 %v3306
        %3384 = vmatprep.subr.bf16.mxu0 0
        %3385 = vmatpush1.bf16.msra.mxu0 %v3307
        %3386 = vmatprep.subr.bf16.mxu0 0
        %3387 = vmatpush1.bf16.msra.mxu0 %v3308
        %3388 = vmatprep.subr.bf16.mxu0 0
        %3389 = vmatpush1.bf16.msra.mxu0 %v3309
        %3390 = vmatprep.mubr.bf16.mxu0 %v3092
        %3391 = vmatmul.mubr.bf16.gmra.mrb[0].mxu0 %v3091
        %v3392 = vpop.f32.mrb[0].mxu0
        %v3393 = vadd.f32 %v3164, %v3392
        %v3394 = vpop.f32.mrb[0].mxu0
        %v3395 = vpop.f32.mrb[0].mxu0
        %v3396 = vadd.f32 %v3164, %v3395
        %v3397 = vpop.f32.mrb[0].mxu0
        %3398 = vdwg.mxu0
        %3399 = vmatprep.subr.bf16.mxu0 0
        %3400 = vmatpush1.bf16.msra.mxu0 %v3310
        %3401 = vmatprep.subr.bf16.mxu0 0
        %3402 = vmatpush1.bf16.msra.mxu0 %v3311
        %3403 = vmatprep.subr.bf16.mxu0 0
        %3404 = vmatpush1.bf16.msra.mxu0 %v3312
        %3405 = vmatprep.subr.bf16.mxu0 0
        %3406 = vmatpush1.bf16.msra.mxu0 %v3313
        %3407 = vmatprep.subr.bf16.mxu0 0
        %3408 = vmatpush1.bf16.msra.mxu0 %v3314
        %3409 = vmatprep.subr.bf16.mxu0 0
        %3410 = vmatpush1.bf16.msra.mxu0 %v3315
        %3411 = vmatprep.subr.bf16.mxu0 0
        %3412 = vmatpush1.bf16.msra.mxu0 %v3316
        %3413 = vmatprep.subr.bf16.mxu0 0
        %3414 = vmatpush1.bf16.msra.mxu0 %v3317
        %3415 = vmatprep.subr.bf16.mxu0 0
        %3416 = vmatpush1.bf16.msra.mxu0 %v3318
        %3417 = vmatprep.subr.bf16.mxu0 0
        %3418 = vmatpush1.bf16.msra.mxu0 %v3319
        %3419 = vmatprep.subr.bf16.mxu0 0
        %3420 = vmatpush1.bf16.msra.mxu0 %v3320
        %3421 = vmatprep.subr.bf16.mxu0 0
        %3422 = vmatpush1.bf16.msra.mxu0 %v3321
        %3423 = vmatprep.subr.bf16.mxu0 0
        %3424 = vmatpush1.bf16.msra.mxu0 %v3322
        %3425 = vmatprep.subr.bf16.mxu0 0
        %3426 = vmatpush1.bf16.msra.mxu0 %v3323
        %3427 = vmatprep.subr.bf16.mxu0 0
        %3428 = vmatpush1.bf16.msra.mxu0 %v3324
        %3429 = vmatprep.subr.bf16.mxu0 0
        %3430 = vmatpush1.bf16.msra.mxu0 %v3325
        %3431 = vmatprep.mubr.bf16.mxu0 %v3094
        %3432 = vmatmul.mubr.bf16.gmra.mrb[0].mxu0 %v3093
        %v3433 = vpop.f32.mrb[0].mxu0
        %v3434 = vadd.f32 %v3393, %v3433
        %v3435 = vpop.f32.mrb[0].mxu0
        %v3436 = vpop.f32.mrb[0].mxu0
        %v3437 = vadd.f32 %v3396, %v3436
        %v3438 = vpop.f32.mrb[0].mxu0
        %3439 = vdwg.mxu0
        %v3440 = vadd.f32 %v2732, %v3434
        %v3441 = vadd.f32 %v2733, %v3437
        %3442 = vst [vmem:[#allocation2] sm:$0xff] %v3440
        %3443 = vst [vmem:[#allocation2 + $0x8] sm:$0xff] %v3441
        %p3444 = scmp.eq.s32.totalorder %s35, 1
        // Predicated region
        $region89: #{kpt_forward.2} parent=71 // pred_check
          %p3445 = pneg %p3444
        $region90: #{kpt_forward.2} parent=71 // pred_check_branch
          %3447 = sbr.rel (%p3445) target = $region92
        $region91: #{kpt_forward.2} parent=71 // pred_region
          %3448 = vst [vmem:[%s707] sm:$0xff] %v3440
          %3449 = vst [vmem:[%s707 + $0x8] sm:$0xff] %v3441
        $region92: #{kpt_forward.2} parent=71 // pred_fallthru
          _
        %p3450 = scmp.lt.s32.totalorder %s34, 1
        %s3451 = scalar_select %p3450, %s34, 1
        %s3452 = smul.addr %s3451, 2
        %s3453 = smul.addr %s3452, 8
        %s3454 = scalar_lea.vmem %s13, %s3453
        // Predicated region
        $region93: #{kpt_forward.2} parent=71 // pred_check
          %p3455 = pneg %p398
        $region94: #{kpt_forward.2} parent=71 // pred_check_branch
          %3457 = sbr.rel (%p3455) target = $region96
        $region95: #{kpt_forward.2} parent=71 // pred_region
          _
        $region96: #{kpt_forward.2} parent=71 // pred_fallthru
          _
      $region72: #{kpt_forward.2} parent=5 // pred_fallthru
        _
      %p3458 = scmp.le.s32.totalorder 2, %s25
      // Predicated region
      $region97: #{kpt_forward.2} parent=5 // pred_check
        %p3459 = pneg %p3458
      $region98: #{kpt_forward.2} parent=5 // pred_check_branch
        %3461 = sbr.rel (%p3459) target = $region100
      $region99: #{kpt_forward.2} parent=5 // pred_region
        %s3462 = ssub.s32 %s25, 2
        // Predicated region
        $region101: #{kpt_forward.2} parent=99 // pred_check
          %p3463 = pneg %p404
        $region102: #{kpt_forward.2} parent=99 // pred_check_branch
          %3465 = sbr.rel (%p3463) target = $region104
        $region103: #{kpt_forward.2} parent=99 // pred_region
          %p3466 = scmp.lt.s32.totalorder %s36, 1
          %s3467 = scalar_select %p3466, %s36, 1
          %s3468 = smul.addr %s3467, 2
          %s3469 = smul.addr %s3468, 8
          %s3470 = scalar_lea.vmem %s13, %s3469
        $region104: #{kpt_forward.2} parent=99 // pred_fallthru
          _
      $region100: #{kpt_forward.2} parent=5 // pred_fallthru
        _
    $region6: #{kpt_forward.2} parent=1 // loop_footer
      %s29 = sadd.s32 1, %s25
    $region7: #{kpt_forward.2} parent=1 // loop_footer_branch
      %24 = sbr.rel target = $region3
    $region8: #{kpt_forward.2} parent=1 // loop_exit
      _
    %3471 = vsyncpa [#allocation4], 1
    %s3472 = scalar_lea.sflag [#allocation4], 1
    %3473 = vsyncpa %s3472, 1
    %3474 = vsyncpa [#allocation6], 1
    %s3475 = scalar_lea.sflag [#allocation6], 1
    %3476 = vsyncpa %s3475, 1

</llo_original>
